<compile_context>
chip_gen: v5e
topology: v5e:2x2
jax: 0.10.0
libtpu: 0.0.40
codegen_flags: <defaults>
</compile_context>

<pallas_src>
import jax
import jax.numpy as jnp
from jax.experimental import pallas as pl
from jax.experimental.pallas import tpu as pltpu


# ---------------------------------------------------------------------------
# Kernel: one batch chunk (num_sb adjacency super-blocks) per grid step
# ---------------------------------------------------------------------------
def _make_kernel(n_conv, n_mlp, use_mf, use_bn, num_sb, blk, cb, n_pad,
                 pool_scale, mxu_dtype):
    def kernel(x_ref, adj_ref, mf_ref, bn_conv_ref, w_emb_ref, w_conv_ref,
               conv_bias_ref, w_read_ref, w_mlp_ref, *rest):
        # rest = ([w_mlp_mf] if use_mf) + [feat_vec, w_fc, b_fc, out_ref]
        out_ref = rest[-1]
        b_fc_ref = rest[-2]
        w_fc_ref = rest[-3]
        feat_vec_ref = rest[-4]
        w_mlp_mf_ref = rest[0] if use_mf else None

        f32 = jnp.float32
        rows = num_sb * blk                       # atoms in this chunk
        fc = w_emb_ref.shape[1]                   # padded conv-feature width

        def mm(a, b):                             # MXU dot, f32 accumulation
            return jnp.dot(a.astype(mxu_dtype), b, preferred_element_type=f32)

        # ---- embedding: Linear(F_atom -> F_conv), whole chunk in one matmul ----
        h = mm(x_ref[0], w_emb_ref[...]) + conv_bias_ref[0]          # (rows, fc)

        adj = adj_ref[...]                        # (num_sb, blk, blk), mxu_dtype

        # ---- GCN layers: Linear -> block-diag adj@h -> BN(per atom) -> ReLU ----
        # TODO(synk): switch to lax.fori_loop(..., unroll=True) if n_conv/F_conv
        # grow enough for weight live-ranges to cause vreg spills.
        for i in range(n_conv):
            h = mm(h, w_conv_ref[i]) + conv_bias_ref[i + 1]
            # adjacency applied as num_sb MXU-tile matmuls (batched dot):
            h3 = h.reshape(num_sb, blk, fc).astype(mxu_dtype)
            h = jnp.einsum('sij,sjf->sif', adj, h3,
                           preferred_element_type=f32).reshape(rows, fc)
            if use_bn:
                hm = h.reshape(cb, n_pad, fc)
                hm = hm * bn_conv_ref[i][None] + bn_conv_ref[n_conv + i][None]
                h = hm.reshape(rows, fc)
            h = jnp.maximum(h, 0.0)

        # ---- Readout: pool over atoms (XLU), then Linear (commuted) -> ReLU ----
        pooled = h.reshape(cb, n_pad, fc).sum(axis=1)                # (cb, fc)
        if pool_scale != 1.0:                                        # mean readout
            pooled = pooled * pool_scale
        r = mm(pooled, w_read_ref[...]) + feat_vec_ref[0]            # (cb, nf)
        r = jnp.maximum(r, 0.0)

        # ---- MLP (Predictor) blocks: Linear -> BN(per feature) -> ReLU ----
        for i in range(n_mlp):
            z = mm(r, w_mlp_ref[i])
            if use_mf and i == 0:
                # concat([r, mf]) eliminated: split matmul on the mf half.
                z = z + mm(mf_ref[0], w_mlp_mf_ref[...])
            z = z + feat_vec_ref[1 + i]
            z = z * feat_vec_ref[1 + n_mlp + i] + feat_vec_ref[1 + 2 * n_mlp + i]
            r = jnp.maximum(z, 0.0)
            # TODO(synk): dropout is the eval-mode identity here (no RNG mask).

        # ---- final fc; single lane-dense (cb, n_out_pad) store (no sigmoid) ----
        out_ref[0] = (mm(r, w_fc_ref[...]) + b_fc_ref[...]).astype(out_ref.dtype)

    return kernel


# ---------------------------------------------------------------------------
# Wrapper: pad, build adjacency super-blocks, pack params, launch grid
# ---------------------------------------------------------------------------
def _ru(v, m):
    return -(-v // m) * m


def _pad_to(a, shape):
    return jnp.pad(a, [(0, t - s) for s, t in zip(a.shape, shape)])


def gcn_forward(x, adj, mf, params, *, n_conv, n_mlp, use_mf, use_bn, readout,
                mxu_dtype=jnp.bfloat16, target_block=128, sb_per_chunk=None):
    """Fused GCNNet_Classification forward (eval-mode BN/dropout, no sigmoid).

    target_block: adjacency super-block row target (128 fits every MXU;
                  256 can be used on v6e/v7x).
    sb_per_chunk: super-blocks per grid step (None -> aim for ~8 grid steps so
                  the chunk pipeline hides the adjacency DMA; >=2 steps also
                  shards across v7x's two TensorCores via "parallel").
    """
    B, N, f_atom = x.shape
    n_mf = mf.shape[-1]
    f_conv = params['w_emb'].shape[-1]
    n_feat = params['w_read'].shape[-1]
    n_out = params['b_fc'].shape[-1]

    # ---- tiling: G molecules per super-block, num_sb super-blocks per chunk ----
    n_pad = _ru(N, 8)
    G = max(1, target_block // n_pad)
    blk = G * n_pad
    total_sb = -(-B // G)
    if sb_per_chunk is None:
        sb_per_chunk = max(1, -(-total_sb // 8))
    num_sb = min(sb_per_chunk, total_sb)
    num_chunks = -(-total_sb // num_sb)
    cb = num_sb * G                       # molecules per grid step
    b_pad = num_chunks * cb

    # ---- lane padding of feature dims (unmasked VPU ops / lane-dense stores) ---
    fa_p, fc_p = _ru(f_atom, 128), _ru(f_conv, 128)
    nf_p, nmf_p, no_p = _ru(n_feat, 128), _ru(n_mf, 128), _ru(n_out, 128)

    # ---- activations ----------------------------------------------------------
    x_p = jnp.zeros((b_pad, n_pad, fa_p), jnp.float32).at[:B, :N, :f_atom].set(x)
    x_flat = x_p.reshape(num_chunks, cb * n_pad, fa_p).astype(mxu_dtype)

    adj_p = jnp.zeros((b_pad, n_pad, n_pad), jnp.float32).at[:B, :N, :N].set(adj)
    adj_g = adj_p.reshape(num_chunks * num_sb, G, n_pad, n_pad)
    adj_sb = jnp.einsum('smij,mn->sminj', adj_g, jnp.eye(G, dtype=jnp.float32))
    adj_sb = adj_sb.reshape(num_chunks * num_sb, blk, blk).astype(mxu_dtype)

    mf_p = jnp.zeros((b_pad, nmf_p), jnp.float32).at[:B, :n_mf].set(mf)
    mf_c = mf_p.reshape(num_chunks, cb, nmf_p).astype(mxu_dtype)

    # ---- packed / padded parameters -------------------------------------------
    w_emb = _pad_to(params['w_emb'], (fa_p, fc_p)).astype(mxu_dtype)
    w_conv = _pad_to(params['w_conv'], (n_conv, fc_p, fc_p)).astype(mxu_dtype)
    conv_bias = jnp.concatenate(
        [_pad_to(params['b_emb'], (1, fc_p))[None],
         _pad_to(params['b_conv'], (n_conv, 1, fc_p))], axis=0)   # (n_conv+1,1,fc_p)

    # per-atom BN: (2*n_conv, N_pad, fc_p); padded-atom shift must stay 0.
    bn_scale = jnp.pad(params['bn_scale_conv'],
                       ((0, 0), (0, n_pad - N), (0, 0)), constant_values=1.0)
    bn_shift = jnp.pad(params['bn_shift_conv'], ((0, 0), (0, n_pad - N), (0, 0)))
    bn_conv = jnp.broadcast_to(jnp.concatenate([bn_scale, bn_shift], axis=0),
                               (2 * n_conv, n_pad, fc_p)).astype(jnp.float32)

    w_read = _pad_to(params['w_read'], (fc_p, nf_p)).astype(mxu_dtype)

    # first MLP layer: split concat([r, mf]) into r-path and mf-path weights.
    w0 = params['w_mlp'][0]
    w0_r, w0_mf = (w0[:n_feat], w0[n_feat:]) if use_mf else (w0, None)
    w_mlp = jnp.stack([_pad_to(w0_r, (nf_p, nf_p))] +
                      [_pad_to(params['w_mlp'][i], (nf_p, nf_p))
                       for i in range(1, n_mlp)]).astype(mxu_dtype)

    # readout Linear commuted after pooling: sum_a(hW + b) = (sum_a h)W + N*b
    b_read_eff = params['b_read'] * (float(N) if readout == 'sum' else 1.0)
    feat_rows = [_pad_to(b_read_eff, (1, nf_p))]
    feat_rows += [_pad_to(params['b_mlp'][i], (1, nf_p)) for i in range(n_mlp)]
    feat_rows += [_pad_to(params['bn_scale_mlp'][i], (1, nf_p)) for i in range(n_mlp)]
    feat_rows += [_pad_to(params['bn_shift_mlp'][i], (1, nf_p)) for i in range(n_mlp)]
    feat_vec = jnp.stack(feat_rows, axis=0)                       # (1+3*n_mlp,1,nf_p)

    w_fc = _pad_to(params['w_fc'], (nf_p, no_p)).astype(mxu_dtype)
    b_fc = _pad_to(params['b_fc'], (1, no_p))

    flat_inputs = [x_flat, adj_sb, mf_c, bn_conv, w_emb, w_conv, conv_bias,
                   w_read, w_mlp]
    if use_mf:
        flat_inputs.append(_pad_to(w0_mf, (nmf_p, nf_p)).astype(mxu_dtype))
    flat_inputs += [feat_vec, w_fc, b_fc]

    pool_scale = 1.0 if readout == 'sum' else 1.0 / N
    kernel = _make_kernel(n_conv, n_mlp, use_mf, use_bn, num_sb, blk, cb, n_pad,
                          pool_scale, mxu_dtype)

    def make_in_specs(single_buffer):
        def const_spec(a):
            shape = tuple(a.shape)
            idx = lambda g, nd=len(shape): (0,) * nd
            if single_buffer:
                # constant index map -> never re-fetched; 1 buffer frees VMEM.
                return pl.BlockSpec(shape, idx, pipeline_mode=pl.Buffered(1))
            return pl.BlockSpec(shape, idx)
        return [
            pl.BlockSpec((1, cb * n_pad, fa_p), lambda g: (g, 0, 0)),
            pl.BlockSpec((num_sb, blk, blk), lambda g: (g, 0, 0)),
            pl.BlockSpec((1, cb, nmf_p), lambda g: (g, 0, 0)),
        ] + [const_spec(a) for a in flat_inputs[3:]]

    def run(single_buffer):
        return pl.pallas_call(
            kernel,
            out_shape=jax.ShapeDtypeStruct((num_chunks, cb, no_p), jnp.float32),
            grid=(num_chunks,),
            in_specs=make_in_specs(single_buffer),
            out_specs=pl.BlockSpec((1, cb, no_p), lambda g: (g, 0, 0)),
            compiler_params=pltpu.CompilerParams(
                # "parallel": chunks are independent -> shardable across the two
                # TensorCores on v7x; plain software pipeline on v5e/v6e.
                dimension_semantics=("parallel",)),
        )(*flat_inputs)

    try:
        out = run(single_buffer=True)
    except Exception:            # pragma: no cover - fallback if Buffered(1) unsupported
        out = run(single_buffer=False)

    return out.reshape(b_pad, no_p)[:B, :n_out]


# ---------------------------------------------------------------------------
# Deterministic parameter construction (synthetic, no checkpoint)
# ---------------------------------------------------------------------------
def init_params(key, *, max_atoms, n_conv, n_MLP, n_atom_feature, n_conv_feature,
                n_feature, n_out, n_mf, use_mf, eps=1e-5):
    keys = iter(jax.random.split(key, 128))

    def lin(in_d, out_d):
        w = jax.random.normal(next(keys), (in_d, out_d), jnp.float32) / jnp.sqrt(in_d)
        b = 0.01 * jax.random.normal(next(keys), (1, out_d), jnp.float32)
        return w, b

    def bn_fold(shape):
        gamma = 1.0 + 0.05 * jax.random.normal(next(keys), shape, jnp.float32)
        beta = 0.05 * jax.random.normal(next(keys), shape, jnp.float32)
        rm = 0.1 * jax.random.normal(next(keys), shape, jnp.float32)
        rv = 1.0 + 0.1 * jax.random.uniform(next(keys), shape, jnp.float32)
        scale = gamma / jnp.sqrt(rv + eps)
        shift = beta - rm * scale
        return scale, shift

    p = {}
    p['w_emb'], p['b_emb'] = lin(n_atom_feature, n_conv_feature)

    wc, bc = [], []
    for _ in range(n_conv):
        w, b = lin(n_conv_feature, n_conv_feature)
        wc.append(w); bc.append(b)
    p['w_conv'] = jnp.stack(wc)                       # (n_conv, Fc, Fc)
    p['b_conv'] = jnp.stack(bc)                       # (n_conv, 1, Fc)
    sc, sh = bn_fold((n_conv, max_atoms, 1))          # per-atom BN per GCN layer
    p['bn_scale_conv'], p['bn_shift_conv'] = sc, sh

    p['w_read'], p['b_read'] = lin(n_conv_feature, n_feature)

    in_feature = n_feature + n_mf if use_mf else n_feature
    p['w_mlp'], p['b_mlp'], p['bn_scale_mlp'], p['bn_shift_mlp'] = [], [], [], []
    for i in range(n_MLP):
        w, b = lin(in_feature if i == 0 else n_feature, n_feature)
        s, t = bn_fold((1, n_feature))                # per-feature BN
        p['w_mlp'].append(w); p['b_mlp'].append(b)
        p['bn_scale_mlp'].append(s); p['bn_shift_mlp'].append(t)

    p['w_fc'], p['b_fc'] = lin(n_feature, n_out)
    return p


# ---------------------------------------------------------------------------
# Pure-JAX reference (mirrors the PyTorch forward, eval-mode BN/dropout)
# ---------------------------------------------------------------------------
def reference(x, adj, mf, p, *, n_conv, n_mlp, use_mf, use_bn, readout):
    h = x @ p['w_emb'] + p['b_emb']
    for i in range(n_conv):
        h = h @ p['w_conv'][i] + p['b_conv'][i]
        h = jnp.einsum('bij,bjf->bif', adj, h)
        if use_bn:
            h = h * p['bn_scale_conv'][i][None] + p['bn_shift_conv'][i][None]
        h = jnp.maximum(h, 0.0)
    r = h @ p['w_read'] + p['b_read']
    r = r.sum(1) if readout == 'sum' else r.mean(1)
    r = jnp.maximum(r, 0.0)
    if use_mf:
        r = jnp.concatenate([r, mf], axis=1)
    for i in range(n_mlp):
        r = r @ p['w_mlp'][i] + p['b_mlp'][i]
        r = r * p['bn_scale_mlp'][i] + p['bn_shift_mlp'][i]
        r = jnp.maximum(r, 0.0)
    return r @ p['w_fc'] + p['b_fc']


# ---------------------------------------------------------------------------
if __name__ == "__main__":
    # model config (small, consistent with the module's __init__)
    max_atoms = 16
    n_conv = 2
    n_MLP = 2
    n_atom_feature = 8
    n_conv_feature = 32
    n_feature = 32
    n_out = 2
    n_mf = 8
    use_bn = True
    use_mf = True
    readout = 'sum'
    B = 32            # -> 2 grid chunks x 2 super-blocks x 8 molecules (blk = 128)

    key = jax.random.PRNGKey(0)
    k_x, k_adj, k_mf, k_p = jax.random.split(key, 4)

    x = jax.random.normal(k_x, (B, max_atoms, n_atom_feature), jnp.float32)
    # symmetric, non-negative adjacency with self-loops
    a = jax.random.uniform(k_adj, (B, max_atoms, max_atoms), jnp.float32)
    adj = 0.5 * (a + jnp.swapaxes(a, 1, 2)) + jnp.eye(max_atoms)[None]
    mf = jax.random.normal(k_mf, (B, n_mf), jnp.float32)

    params = init_params(k_p, max_atoms=max_atoms, n_conv=n_conv, n_MLP=n_MLP,
                         n_atom_feature=n_atom_feature, n_conv_feature=n_conv_feature,
                         n_feature=n_feature, n_out=n_out, n_mf=n_mf, use_mf=use_mf)

    ref = reference(x, adj, mf, params, n_conv=n_conv, n_mlp=n_MLP,
                    use_mf=use_mf, use_bn=use_bn, readout=readout)

    # f32 MXU path: validates the fused / padded / commuted kernel structure.
    out_f32 = gcn_forward(x, adj, mf, params, n_conv=n_conv, n_mlp=n_MLP,
                          use_mf=use_mf, use_bn=use_bn, readout=readout,
                          mxu_dtype=jnp.float32, sb_per_chunk=2)
    out_f32 = jax.block_until_ready(out_f32)
    assert out_f32.shape == (B, n_out)
    assert jnp.allclose(out_f32, ref, rtol=1e-3, atol=1e-3), (out_f32, ref)

    # bf16 MXU path (default fast path): f32 accumulation, norm-relative check.
    out_bf16 = gcn_forward(x, adj, mf, params, n_conv=n_conv, n_mlp=n_MLP,
                           use_mf=use_mf, use_bn=use_bn, readout=readout,
                           mxu_dtype=jnp.bfloat16, sb_per_chunk=2)
    out_bf16 = jax.block_until_ready(out_bf16)
    rel = jnp.linalg.norm(out_bf16 - ref) / (jnp.linalg.norm(ref) + 1e-6)
    assert float(rel) < 5e-2, float(rel)

    print("KERNEL_OK")
</pallas_src>

<mosaic_0001>
module attributes {stable_mosaic.version = 11 : i64} {
  func.func @kernel(%arg0: i32, %arg1: memref<1x256x128xf32, #tpu.memory_space<vmem>>, %arg2: memref<2x128x128xf32, #tpu.memory_space<vmem>>, %arg3: memref<1x16x128xf32, #tpu.memory_space<vmem>>, %arg4: memref<4x16x128xf32, #tpu.memory_space<vmem>>, %arg5: memref<128x128xf32, #tpu.memory_space<vmem>>, %arg6: memref<2x128x128xf32, #tpu.memory_space<vmem>>, %arg7: memref<3x1x128xf32, #tpu.memory_space<vmem>>, %arg8: memref<128x128xf32, #tpu.memory_space<vmem>>, %arg9: memref<2x128x128xf32, #tpu.memory_space<vmem>>, %arg10: memref<128x128xf32, #tpu.memory_space<vmem>>, %arg11: memref<7x1x128xf32, #tpu.memory_space<vmem>>, %arg12: memref<128x128xf32, #tpu.memory_space<vmem>>, %arg13: memref<1x128xf32, #tpu.memory_space<vmem>>, %arg14: memref<1x16x128xf32, #tpu.memory_space<vmem>>) attributes {dimension_semantics = [#tpu.dimension_semantics<parallel>], iteration_bounds = array<i64: 2>, scalar_prefetch = 0 : i64, scratch_operands = 0 : i64, tpu.core_type = #tpu.core_type<tc>, window_params = [{transform_indices = @transform_0, window_bounds = array<i64: 1, 256, 128>}, {transform_indices = @transform_1, window_bounds = array<i64: 2, 128, 128>}, {transform_indices = @transform_2, window_bounds = array<i64: 1, 16, 128>}, {pipeline_mode = #tpu.pipeline_mode<synchronous>, transform_indices = @transform_3, window_bounds = array<i64: 4, 16, 128>}, {pipeline_mode = #tpu.pipeline_mode<synchronous>, transform_indices = @transform_4, window_bounds = array<i64: 128, 128>}, {pipeline_mode = #tpu.pipeline_mode<synchronous>, transform_indices = @transform_5, window_bounds = array<i64: 2, 128, 128>}, {pipeline_mode = #tpu.pipeline_mode<synchronous>, transform_indices = @transform_6, window_bounds = array<i64: 3, 1, 128>}, {pipeline_mode = #tpu.pipeline_mode<synchronous>, transform_indices = @transform_7, window_bounds = array<i64: 128, 128>}, {pipeline_mode = #tpu.pipeline_mode<synchronous>, transform_indices = @transform_8, window_bounds = array<i64: 2, 128, 128>}, {pipeline_mode = #tpu.pipeline_mode<synchronous>, transform_indices = @transform_9, window_bounds = array<i64: 128, 128>}, {pipeline_mode = #tpu.pipeline_mode<synchronous>, transform_indices = @transform_10, window_bounds = array<i64: 7, 1, 128>}, {pipeline_mode = #tpu.pipeline_mode<synchronous>, transform_indices = @transform_11, window_bounds = array<i64: 128, 128>}, {pipeline_mode = #tpu.pipeline_mode<synchronous>, transform_indices = @transform_12, window_bounds = array<i64: 1, 128>}, {transform_indices = @transform_13, window_bounds = array<i64: 1, 16, 128>}]} {
    %c0 = arith.constant 0 : index
    %c0_0 = arith.constant 0 : index
    %c0_1 = arith.constant 0 : index
    %0 = vector.load %arg1[%c0, %c0_0, %c0_1] : memref<1x256x128xf32, #tpu.memory_space<vmem>>, vector<1x256x128xf32>
    %1 = vector.shape_cast %0 : vector<1x256x128xf32> to vector<256x128xf32>
    %c0_2 = arith.constant 0 : index
    %c0_3 = arith.constant 0 : index
    %2 = vector.load %arg5[%c0_2, %c0_3] : memref<128x128xf32, #tpu.memory_space<vmem>>, vector<128x128xf32>
    %cst = arith.constant dense<0.000000e+00> : vector<256x128xf32>
    %3 = tpu.matmul %1, %2, %cst {dimension_numbers = #tpu.dot_dimension_numbers<[1], [0], [0], [1], [0, 0, 1, 1], [], []>} : vector<256x128xf32>, vector<128x128xf32>, vector<256x128xf32> -> vector<256x128xf32>
    %c0_4 = arith.constant 0 : index
    %c0_5 = arith.constant 0 : index
    %c0_6 = arith.constant 0 : index
    %4 = vector.load %arg7[%c0_4, %c0_5, %c0_6] : memref<3x1x128xf32, #tpu.memory_space<vmem>>, vector<1x1x128xf32>
    %5 = vector.shape_cast %4 : vector<1x1x128xf32> to vector<1x128xf32>
    %6 = vector.broadcast %5 : vector<1x128xf32> to vector<256x128xf32>
    %7 = arith.addf %3, %6 : vector<256x128xf32>
    %c0_7 = arith.constant 0 : index
    %c0_8 = arith.constant 0 : index
    %c0_9 = arith.constant 0 : index
    %8 = vector.load %arg2[%c0_7, %c0_8, %c0_9] : memref<2x128x128xf32, #tpu.memory_space<vmem>>, vector<2x128x128xf32>
    %c0_10 = arith.constant 0 : index
    %c0_11 = arith.constant 0 : index
    %c0_12 = arith.constant 0 : index
    %9 = vector.load %arg6[%c0_10, %c0_11, %c0_12] : memref<2x128x128xf32, #tpu.memory_space<vmem>>, vector<1x128x128xf32>
    %10 = vector.shape_cast %9 : vector<1x128x128xf32> to vector<128x128xf32>
    %cst_13 = arith.constant dense<0.000000e+00> : vector<256x128xf32>
    %11 = tpu.matmul %7, %10, %cst_13 {dimension_numbers = #tpu.dot_dimension_numbers<[1], [0], [0], [1], [0, 0, 1, 1], [], []>} : vector<256x128xf32>, vector<128x128xf32>, vector<256x128xf32> -> vector<256x128xf32>
    %c1 = arith.constant 1 : index
    %c0_14 = arith.constant 0 : index
    %c0_15 = arith.constant 0 : index
    %12 = vector.load %arg7[%c1, %c0_14, %c0_15] : memref<3x1x128xf32, #tpu.memory_space<vmem>>, vector<1x1x128xf32>
    %13 = vector.shape_cast %12 : vector<1x1x128xf32> to vector<1x128xf32>
    %14 = vector.broadcast %13 : vector<1x128xf32> to vector<256x128xf32>
    %15 = arith.addf %11, %14 : vector<256x128xf32>
    %16 = vector.shape_cast %15 : vector<256x128xf32> to vector<2x128x128xf32>
    "tpu.trace_start"() <{level = 10 : i32, message = "sij,sjf->sif"}> : () -> ()
    %cst_16 = arith.constant dense<0.000000e+00> : vector<2x128x128xf32>
    %17 = tpu.matmul %8, %16, %cst_16 {dimension_numbers = #tpu.dot_dimension_numbers<[2], [1], [1], [2], [0, 0, 0, 1, 1, 2], [0], [0]>} : vector<2x128x128xf32>, vector<2x128x128xf32>, vector<2x128x128xf32> -> vector<2x128x128xf32>
    "tpu.trace_stop"() : () -> ()
    %18 = vector.shape_cast %17 : vector<2x128x128xf32> to vector<256x128xf32>
    %19 = vector.shape_cast %18 : vector<256x128xf32> to vector<16x16x128xf32>
    %c0_17 = arith.constant 0 : index
    %c0_18 = arith.constant 0 : index
    %c0_19 = arith.constant 0 : index
    %20 = vector.load %arg4[%c0_17, %c0_18, %c0_19] : memref<4x16x128xf32, #tpu.memory_space<vmem>>, vector<1x16x128xf32>
    %21 = vector.shape_cast %20 : vector<1x16x128xf32> to vector<16x128xf32>
    %22 = vector.shape_cast %21 : vector<16x128xf32> to vector<1x16x128xf32>
    %23 = vector.broadcast %22 : vector<1x16x128xf32> to vector<16x16x128xf32>
    %24 = arith.mulf %19, %23 : vector<16x16x128xf32>
    %c2 = arith.constant 2 : index
    %c0_20 = arith.constant 0 : index
    %c0_21 = arith.constant 0 : index
    %25 = vector.load %arg4[%c2, %c0_20, %c0_21] : memref<4x16x128xf32, #tpu.memory_space<vmem>>, vector<1x16x128xf32>
    %26 = vector.shape_cast %25 : vector<1x16x128xf32> to vector<16x128xf32>
    %27 = vector.shape_cast %26 : vector<16x128xf32> to vector<1x16x128xf32>
    %28 = vector.broadcast %27 : vector<1x16x128xf32> to vector<16x16x128xf32>
    %29 = arith.addf %24, %28 : vector<16x16x128xf32>
    %30 = vector.shape_cast %29 : vector<16x16x128xf32> to vector<256x128xf32>
    %cst_22 = arith.constant 0.000000e+00 : f32
    %31 = vector.broadcast %cst_22 : f32 to vector<256x128xf32>
    %32 = arith.maximumf %30, %31 : vector<256x128xf32>
    %c1_23 = arith.constant 1 : index
    %c0_24 = arith.constant 0 : index
    %c0_25 = arith.constant 0 : index
    %33 = vector.load %arg6[%c1_23, %c0_24, %c0_25] : memref<2x128x128xf32, #tpu.memory_space<vmem>>, vector<1x128x128xf32>
    %34 = vector.shape_cast %33 : vector<1x128x128xf32> to vector<128x128xf32>
    %cst_26 = arith.constant dense<0.000000e+00> : vector<256x128xf32>
    %35 = tpu.matmul %32, %34, %cst_26 {dimension_numbers = #tpu.dot_dimension_numbers<[1], [0], [0], [1], [0, 0, 1, 1], [], []>} : vector<256x128xf32>, vector<128x128xf32>, vector<256x128xf32> -> vector<256x128xf32>
    %c2_27 = arith.constant 2 : index
    %c0_28 = arith.constant 0 : index
    %c0_29 = arith.constant 0 : index
    %36 = vector.load %arg7[%c2_27, %c0_28, %c0_29] : memref<3x1x128xf32, #tpu.memory_space<vmem>>, vector<1x1x128xf32>
    %37 = vector.shape_cast %36 : vector<1x1x128xf32> to vector<1x128xf32>
    %38 = vector.broadcast %37 : vector<1x128xf32> to vector<256x128xf32>
    %39 = arith.addf %35, %38 : vector<256x128xf32>
    %40 = vector.shape_cast %39 : vector<256x128xf32> to vector<2x128x128xf32>
    "tpu.trace_start"() <{level = 10 : i32, message = "sij,sjf->sif"}> : () -> ()
    %cst_30 = arith.constant dense<0.000000e+00> : vector<2x128x128xf32>
    %41 = tpu.matmul %8, %40, %cst_30 {dimension_numbers = #tpu.dot_dimension_numbers<[2], [1], [1], [2], [0, 0, 0, 1, 1, 2], [0], [0]>} : vector<2x128x128xf32>, vector<2x128x128xf32>, vector<2x128x128xf32> -> vector<2x128x128xf32>
    "tpu.trace_stop"() : () -> ()
    %42 = vector.shape_cast %41 : vector<2x128x128xf32> to vector<256x128xf32>
    %43 = vector.shape_cast %42 : vector<256x128xf32> to vector<16x16x128xf32>
    %c1_31 = arith.constant 1 : index
    %c0_32 = arith.constant 0 : index
    %c0_33 = arith.constant 0 : index
    %44 = vector.load %arg4[%c1_31, %c0_32, %c0_33] : memref<4x16x128xf32, #tpu.memory_space<vmem>>, vector<1x16x128xf32>
    %45 = vector.shape_cast %44 : vector<1x16x128xf32> to vector<16x128xf32>
    %46 = vector.shape_cast %45 : vector<16x128xf32> to vector<1x16x128xf32>
    %47 = vector.broadcast %46 : vector<1x16x128xf32> to vector<16x16x128xf32>
    %48 = arith.mulf %43, %47 : vector<16x16x128xf32>
    %c3 = arith.constant 3 : index
    %c0_34 = arith.constant 0 : index
    %c0_35 = arith.constant 0 : index
    %49 = vector.load %arg4[%c3, %c0_34, %c0_35] : memref<4x16x128xf32, #tpu.memory_space<vmem>>, vector<1x16x128xf32>
    %50 = vector.shape_cast %49 : vector<1x16x128xf32> to vector<16x128xf32>
    %51 = vector.shape_cast %50 : vector<16x128xf32> to vector<1x16x128xf32>
    %52 = vector.broadcast %51 : vector<1x16x128xf32> to vector<16x16x128xf32>
    %53 = arith.addf %48, %52 : vector<16x16x128xf32>
    %54 = vector.shape_cast %53 : vector<16x16x128xf32> to vector<256x128xf32>
    %cst_36 = arith.constant 0.000000e+00 : f32
    %55 = vector.broadcast %cst_36 : f32 to vector<256x128xf32>
    %56 = arith.maximumf %54, %55 : vector<256x128xf32>
    %57 = vector.shape_cast %56 : vector<256x128xf32> to vector<16x16x128xf32>
    %cst_37 = arith.constant dense<0.000000e+00> : vector<16x128xf32>
    %58 = vector.multi_reduction <add>, %57, %cst_37 [1] : vector<16x16x128xf32> to vector<16x128xf32>
    %c0_38 = arith.constant 0 : index
    %c0_39 = arith.constant 0 : index
    %59 = vector.load %arg8[%c0_38, %c0_39] : memref<128x128xf32, #tpu.memory_space<vmem>>, vector<128x128xf32>
    %cst_40 = arith.constant dense<0.000000e+00> : vector<16x128xf32>
    %60 = tpu.matmul %58, %59, %cst_40 {dimension_numbers = #tpu.dot_dimension_numbers<[1], [0], [0], [1], [0, 0, 1, 1], [], []>} : vector<16x128xf32>, vector<128x128xf32>, vector<16x128xf32> -> vector<16x128xf32>
    %c0_41 = arith.constant 0 : index
    %c0_42 = arith.constant 0 : index
    %c0_43 = arith.constant 0 : index
    %61 = vector.load %arg11[%c0_41, %c0_42, %c0_43] : memref<7x1x128xf32, #tpu.memory_space<vmem>>, vector<1x1x128xf32>
    %62 = vector.shape_cast %61 : vector<1x1x128xf32> to vector<1x128xf32>
    %63 = vector.broadcast %62 : vector<1x128xf32> to vector<16x128xf32>
    %64 = arith.addf %60, %63 : vector<16x128xf32>
    %cst_44 = arith.constant 0.000000e+00 : f32
    %65 = vector.broadcast %cst_44 : f32 to vector<16x128xf32>
    %66 = arith.maximumf %64, %65 : vector<16x128xf32>
    %c0_45 = arith.constant 0 : index
    %c0_46 = arith.constant 0 : index
    %c0_47 = arith.constant 0 : index
    %67 = vector.load %arg9[%c0_45, %c0_46, %c0_47] : memref<2x128x128xf32, #tpu.memory_space<vmem>>, vector<1x128x128xf32>
    %68 = vector.shape_cast %67 : vector<1x128x128xf32> to vector<128x128xf32>
    %cst_48 = arith.constant dense<0.000000e+00> : vector<16x128xf32>
    %69 = tpu.matmul %66, %68, %cst_48 {dimension_numbers = #tpu.dot_dimension_numbers<[1], [0], [0], [1], [0, 0, 1, 1], [], []>} : vector<16x128xf32>, vector<128x128xf32>, vector<16x128xf32> -> vector<16x128xf32>
    %c0_49 = arith.constant 0 : index
    %c0_50 = arith.constant 0 : index
    %c0_51 = arith.constant 0 : index
    %70 = vector.load %arg3[%c0_49, %c0_50, %c0_51] : memref<1x16x128xf32, #tpu.memory_space<vmem>>, vector<1x16x128xf32>
    %71 = vector.shape_cast %70 : vector<1x16x128xf32> to vector<16x128xf32>
    %c0_52 = arith.constant 0 : index
    %c0_53 = arith.constant 0 : index
    %72 = vector.load %arg10[%c0_52, %c0_53] : memref<128x128xf32, #tpu.memory_space<vmem>>, vector<128x128xf32>
    %cst_54 = arith.constant dense<0.000000e+00> : vector<16x128xf32>
    %73 = tpu.matmul %71, %72, %cst_54 {dimension_numbers = #tpu.dot_dimension_numbers<[1], [0], [0], [1], [0, 0, 1, 1], [], []>} : vector<16x128xf32>, vector<128x128xf32>, vector<16x128xf32> -> vector<16x128xf32>
    %74 = arith.addf %69, %73 : vector<16x128xf32>
    %c1_55 = arith.constant 1 : index
    %c0_56 = arith.constant 0 : index
    %c0_57 = arith.constant 0 : index
    %75 = vector.load %arg11[%c1_55, %c0_56, %c0_57] : memref<7x1x128xf32, #tpu.memory_space<vmem>>, vector<1x1x128xf32>
    %76 = vector.shape_cast %75 : vector<1x1x128xf32> to vector<1x128xf32>
    %77 = vector.broadcast %76 : vector<1x128xf32> to vector<16x128xf32>
    %78 = arith.addf %74, %77 : vector<16x128xf32>
    %c3_58 = arith.constant 3 : index
    %c0_59 = arith.constant 0 : index
    %c0_60 = arith.constant 0 : index
    %79 = vector.load %arg11[%c3_58, %c0_59, %c0_60] : memref<7x1x128xf32, #tpu.memory_space<vmem>>, vector<1x1x128xf32>
    %80 = vector.shape_cast %79 : vector<1x1x128xf32> to vector<1x128xf32>
    %81 = vector.broadcast %80 : vector<1x128xf32> to vector<16x128xf32>
    %82 = arith.mulf %78, %81 : vector<16x128xf32>
    %c5 = arith.constant 5 : index
    %c0_61 = arith.constant 0 : index
    %c0_62 = arith.constant 0 : index
    %83 = vector.load %arg11[%c5, %c0_61, %c0_62] : memref<7x1x128xf32, #tpu.memory_space<vmem>>, vector<1x1x128xf32>
    %84 = vector.shape_cast %83 : vector<1x1x128xf32> to vector<1x128xf32>
    %85 = vector.broadcast %84 : vector<1x128xf32> to vector<16x128xf32>
    %86 = arith.addf %82, %85 : vector<16x128xf32>
    %cst_63 = arith.constant 0.000000e+00 : f32
    %87 = vector.broadcast %cst_63 : f32 to vector<16x128xf32>
    %88 = arith.maximumf %86, %87 : vector<16x128xf32>
    %c1_64 = arith.constant 1 : index
    %c0_65 = arith.constant 0 : index
    %c0_66 = arith.constant 0 : index
    %89 = vector.load %arg9[%c1_64, %c0_65, %c0_66] : memref<2x128x128xf32, #tpu.memory_space<vmem>>, vector<1x128x128xf32>
    %90 = vector.shape_cast %89 : vector<1x128x128xf32> to vector<128x128xf32>
    %cst_67 = arith.constant dense<0.000000e+00> : vector<16x128xf32>
    %91 = tpu.matmul %88, %90, %cst_67 {dimension_numbers = #tpu.dot_dimension_numbers<[1], [0], [0], [1], [0, 0, 1, 1], [], []>} : vector<16x128xf32>, vector<128x128xf32>, vector<16x128xf32> -> vector<16x128xf32>
    %c2_68 = arith.constant 2 : index
    %c0_69 = arith.constant 0 : index
    %c0_70 = arith.constant 0 : index
    %92 = vector.load %arg11[%c2_68, %c0_69, %c0_70] : memref<7x1x128xf32, #tpu.memory_space<vmem>>, vector<1x1x128xf32>
    %93 = vector.shape_cast %92 : vector<1x1x128xf32> to vector<1x128xf32>
    %94 = vector.broadcast %93 : vector<1x128xf32> to vector<16x128xf32>
    %95 = arith.addf %91, %94 : vector<16x128xf32>
    %c4 = arith.constant 4 : index
    %c0_71 = arith.constant 0 : index
    %c0_72 = arith.constant 0 : index
    %96 = vector.load %arg11[%c4, %c0_71, %c0_72] : memref<7x1x128xf32, #tpu.memory_space<vmem>>, vector<1x1x128xf32>
    %97 = vector.shape_cast %96 : vector<1x1x128xf32> to vector<1x128xf32>
    %98 = vector.broadcast %97 : vector<1x128xf32> to vector<16x128xf32>
    %99 = arith.mulf %95, %98 : vector<16x128xf32>
    %c6 = arith.constant 6 : index
    %c0_73 = arith.constant 0 : index
    %c0_74 = arith.constant 0 : index
    %100 = vector.load %arg11[%c6, %c0_73, %c0_74] : memref<7x1x128xf32, #tpu.memory_space<vmem>>, vector<1x1x128xf32>
    %101 = vector.shape_cast %100 : vector<1x1x128xf32> to vector<1x128xf32>
    %102 = vector.broadcast %101 : vector<1x128xf32> to vector<16x128xf32>
    %103 = arith.addf %99, %102 : vector<16x128xf32>
    %cst_75 = arith.constant 0.000000e+00 : f32
    %104 = vector.broadcast %cst_75 : f32 to vector<16x128xf32>
    %105 = arith.maximumf %103, %104 : vector<16x128xf32>
    %c0_76 = arith.constant 0 : index
    %c0_77 = arith.constant 0 : index
    %106 = vector.load %arg12[%c0_76, %c0_77] : memref<128x128xf32, #tpu.memory_space<vmem>>, vector<128x128xf32>
    %cst_78 = arith.constant dense<0.000000e+00> : vector<16x128xf32>
    %107 = tpu.matmul %105, %106, %cst_78 {dimension_numbers = #tpu.dot_dimension_numbers<[1], [0], [0], [1], [0, 0, 1, 1], [], []>} : vector<16x128xf32>, vector<128x128xf32>, vector<16x128xf32> -> vector<16x128xf32>
    %c0_79 = arith.constant 0 : index
    %c0_80 = arith.constant 0 : index
    %108 = vector.load %arg13[%c0_79, %c0_80] : memref<1x128xf32, #tpu.memory_space<vmem>>, vector<1x128xf32>
    %109 = vector.broadcast %108 : vector<1x128xf32> to vector<16x128xf32>
    %110 = arith.addf %107, %109 : vector<16x128xf32>
    %c0_81 = arith.constant 0 : index
    %c0_82 = arith.constant 0 : index
    %c0_83 = arith.constant 0 : index
    %111 = vector.load %arg14[%c0_81, %c0_82, %c0_83] : memref<1x16x128xf32, #tpu.memory_space<vmem>>, vector<1x16x128xf32>
    %112 = vector.shape_cast %111 : vector<1x16x128xf32> to vector<16x128xf32>
    %113 = vector.shape_cast %110 : vector<16x128xf32> to vector<1x16x128xf32>
    tpu.vector_store %arg14[%c0_81, %c0_82, %c0_83], %113 {strides = array<i32>} : memref<1x16x128xf32, #tpu.memory_space<vmem>>, vector<1x16x128xf32>,
    return
  }
  func.func @transform_0(%arg0: i32) -> (i32, i32, i32) {
    %c0_i32 = arith.constant 0 : i32
    %c0_i32_0 = arith.constant 0 : i32
    %c0_i32_1 = arith.constant 0 : i32
    return %arg0, %c0_i32, %c0_i32_0 : i32, i32, i32
  }
  func.func @transform_1(%arg0: i32) -> (i32, i32, i32) {
    %c0_i32 = arith.constant 0 : i32
    %c0_i32_0 = arith.constant 0 : i32
    %c0_i32_1 = arith.constant 0 : i32
    return %arg0, %c0_i32, %c0_i32_0 : i32, i32, i32
  }
  func.func @transform_2(%arg0: i32) -> (i32, i32, i32) {
    %c0_i32 = arith.constant 0 : i32
    %c0_i32_0 = arith.constant 0 : i32
    %c0_i32_1 = arith.constant 0 : i32
    return %arg0, %c0_i32, %c0_i32_0 : i32, i32, i32
  }
  func.func @transform_3(%arg0: i32) -> (i32, i32, i32) {
    %c0_i32 = arith.constant 0 : i32
    %c0_i32_0 = arith.constant 0 : i32
    %c0_i32_1 = arith.constant 0 : i32
    %c0_i32_2 = arith.constant 0 : i32
    return %c0_i32, %c0_i32_0, %c0_i32_1 : i32, i32, i32
  }
  func.func @transform_4(%arg0: i32) -> (i32, i32) {
    %c0_i32 = arith.constant 0 : i32
    %c0_i32_0 = arith.constant 0 : i32
    %c0_i32_1 = arith.constant 0 : i32
    return %c0_i32, %c0_i32_0 : i32, i32
  }
  func.func @transform_5(%arg0: i32) -> (i32, i32, i32) {
    %c0_i32 = arith.constant 0 : i32
    %c0_i32_0 = arith.constant 0 : i32
    %c0_i32_1 = arith.constant 0 : i32
    %c0_i32_2 = arith.constant 0 : i32
    return %c0_i32, %c0_i32_0, %c0_i32_1 : i32, i32, i32
  }
  func.func @transform_6(%arg0: i32) -> (i32, i32, i32) {
    %c0_i32 = arith.constant 0 : i32
    %c0_i32_0 = arith.constant 0 : i32
    %c0_i32_1 = arith.constant 0 : i32
    %c0_i32_2 = arith.constant 0 : i32
    return %c0_i32, %c0_i32_0, %c0_i32_1 : i32, i32, i32
  }
  func.func @transform_7(%arg0: i32) -> (i32, i32) {
    %c0_i32 = arith.constant 0 : i32
    %c0_i32_0 = arith.constant 0 : i32
    %c0_i32_1 = arith.constant 0 : i32
    return %c0_i32, %c0_i32_0 : i32, i32
  }
  func.func @transform_8(%arg0: i32) -> (i32, i32, i32) {
    %c0_i32 = arith.constant 0 : i32
    %c0_i32_0 = arith.constant 0 : i32
    %c0_i32_1 = arith.constant 0 : i32
    %c0_i32_2 = arith.constant 0 : i32
    return %c0_i32, %c0_i32_0, %c0_i32_1 : i32, i32, i32
  }
  func.func @transform_9(%arg0: i32) -> (i32, i32) {
    %c0_i32 = arith.constant 0 : i32
    %c0_i32_0 = arith.constant 0 : i32
    %c0_i32_1 = arith.constant 0 : i32
    return %c0_i32, %c0_i32_0 : i32, i32
  }
  func.func @transform_10(%arg0: i32) -> (i32, i32, i32) {
    %c0_i32 = arith.constant 0 : i32
    %c0_i32_0 = arith.constant 0 : i32
    %c0_i32_1 = arith.constant 0 : i32
    %c0_i32_2 = arith.constant 0 : i32
    return %c0_i32, %c0_i32_0, %c0_i32_1 : i32, i32, i32
  }
  func.func @transform_11(%arg0: i32) -> (i32, i32) {
    %c0_i32 = arith.constant 0 : i32
    %c0_i32_0 = arith.constant 0 : i32
    %c0_i32_1 = arith.constant 0 : i32
    return %c0_i32, %c0_i32_0 : i32, i32
  }
  func.func @transform_12(%arg0: i32) -> (i32, i32) {
    %c0_i32 = arith.constant 0 : i32
    %c0_i32_0 = arith.constant 0 : i32
    %c0_i32_1 = arith.constant 0 : i32
    return %c0_i32, %c0_i32_0 : i32, i32
  }
  func.func @transform_13(%arg0: i32) -> (i32, i32, i32) {
    %c0_i32 = arith.constant 0 : i32
    %c0_i32_0 = arith.constant 0 : i32
    %c0_i32_1 = arith.constant 0 : i32
    return %arg0, %c0_i32, %c0_i32_0 : i32, i32, i32
  }
}

module attributes {stable_mosaic.version = 11 : i64} {
  func.func @kernel(%arg0: i32, %arg1: memref<1x256x128xf32, #tpu.memory_space<vmem>>, %arg2: memref<2x128x128xf32, #tpu.memory_space<vmem>>, %arg3: memref<1x16x128xf32, #tpu.memory_space<vmem>>, %arg4: memref<4x16x128xf32, #tpu.memory_space<vmem>>, %arg5: memref<128x128xf32, #tpu.memory_space<vmem>>, %arg6: memref<2x128x128xf32, #tpu.memory_space<vmem>>, %arg7: memref<3x1x128xf32, #tpu.memory_space<vmem>>, %arg8: memref<128x128xf32, #tpu.memory_space<vmem>>, %arg9: memref<2x128x128xf32, #tpu.memory_space<vmem>>, %arg10: memref<128x128xf32, #tpu.memory_space<vmem>>, %arg11: memref<7x1x128xf32, #tpu.memory_space<vmem>>, %arg12: memref<128x128xf32, #tpu.memory_space<vmem>>, %arg13: memref<1x128xf32, #tpu.memory_space<vmem>>, %arg14: memref<1x16x128xf32, #tpu.memory_space<vmem>>) attributes {dimension_semantics = [#tpu.dimension_semantics<parallel>], iteration_bounds = array<i64: 2>, scalar_prefetch = 0 : i64, scratch_operands = 0 : i64, tpu.core_type = #tpu.core_type<tc>, window_params = [{transform_indices = @transform_0, window_bounds = array<i64: 1, 256, 128>}, {transform_indices = @transform_1, window_bounds = array<i64: 2, 128, 128>}, {transform_indices = @transform_2, window_bounds = array<i64: 1, 16, 128>}, {pipeline_mode = #tpu.pipeline_mode<synchronous>, transform_indices = @transform_3, window_bounds = array<i64: 4, 16, 128>}, {pipeline_mode = #tpu.pipeline_mode<synchronous>, transform_indices = @transform_4, window_bounds = array<i64: 128, 128>}, {pipeline_mode = #tpu.pipeline_mode<synchronous>, transform_indices = @transform_5, window_bounds = array<i64: 2, 128, 128>}, {pipeline_mode = #tpu.pipeline_mode<synchronous>, transform_indices = @transform_6, window_bounds = array<i64: 3, 1, 128>}, {pipeline_mode = #tpu.pipeline_mode<synchronous>, transform_indices = @transform_7, window_bounds = array<i64: 128, 128>}, {pipeline_mode = #tpu.pipeline_mode<synchronous>, transform_indices = @transform_8, window_bounds = array<i64: 2, 128, 128>}, {pipeline_mode = #tpu.pipeline_mode<synchronous>, transform_indices = @transform_9, window_bounds = array<i64: 128, 128>}, {pipeline_mode = #tpu.pipeline_mode<synchronous>, transform_indices = @transform_10, window_bounds = array<i64: 7, 1, 128>}, {pipeline_mode = #tpu.pipeline_mode<synchronous>, transform_indices = @transform_11, window_bounds = array<i64: 128, 128>}, {pipeline_mode = #tpu.pipeline_mode<synchronous>, transform_indices = @transform_12, window_bounds = array<i64: 1, 128>}, {transform_indices = @transform_13, window_bounds = array<i64: 1, 16, 128>}]} {
    %c0 = arith.constant 0 : index
    %c0_0 = arith.constant 0 : index
    %c0_1 = arith.constant 0 : index
    %0 = vector.load %arg1[%c0, %c0_0, %c0_1] : memref<1x256x128xf32, #tpu.memory_space<vmem>>, vector<1x256x128xf32>
    %1 = vector.shape_cast %0 : vector<1x256x128xf32> to vector<256x128xf32>
    %c0_2 = arith.constant 0 : index
    %c0_3 = arith.constant 0 : index
    %2 = vector.load %arg5[%c0_2, %c0_3] : memref<128x128xf32, #tpu.memory_space<vmem>>, vector<128x128xf32>
    %cst = arith.constant dense<0.000000e+00> : vector<256x128xf32>
    %3 = tpu.matmul %1, %2, %cst {dimension_numbers = #tpu.dot_dimension_numbers<[1], [0], [0], [1], [0, 0, 1, 1], [], []>} : vector<256x128xf32>, vector<128x128xf32>, vector<256x128xf32> -> vector<256x128xf32>
    %c0_4 = arith.constant 0 : index
    %c0_5 = arith.constant 0 : index
    %c0_6 = arith.constant 0 : index
    %4 = vector.load %arg7[%c0_4, %c0_5, %c0_6] : memref<3x1x128xf32, #tpu.memory_space<vmem>>, vector<1x1x128xf32>
    %5 = vector.shape_cast %4 : vector<1x1x128xf32> to vector<1x128xf32>
    %6 = vector.broadcast %5 : vector<1x128xf32> to vector<256x128xf32>
    %7 = arith.addf %3, %6 : vector<256x128xf32>
    %c0_7 = arith.constant 0 : index
    %c0_8 = arith.constant 0 : index
    %c0_9 = arith.constant 0 : index
    %8 = vector.load %arg2[%c0_7, %c0_8, %c0_9] : memref<2x128x128xf32, #tpu.memory_space<vmem>>, vector<2x128x128xf32>
    %c0_10 = arith.constant 0 : index
    %c0_11 = arith.constant 0 : index
    %c0_12 = arith.constant 0 : index
    %9 = vector.load %arg6[%c0_10, %c0_11, %c0_12] : memref<2x128x128xf32, #tpu.memory_space<vmem>>, vector<1x128x128xf32>
    %10 = vector.shape_cast %9 : vector<1x128x128xf32> to vector<128x128xf32>
    %cst_13 = arith.constant dense<0.000000e+00> : vector<256x128xf32>
    %11 = tpu.matmul %7, %10, %cst_13 {dimension_numbers = #tpu.dot_dimension_numbers<[1], [0], [0], [1], [0, 0, 1, 1], [], []>} : vector<256x128xf32>, vector<128x128xf32>, vector<256x128xf32> -> vector<256x128xf32>
    %c1 = arith.constant 1 : index
    %c0_14 = arith.constant 0 : index
    %c0_15 = arith.constant 0 : index
    %12 = vector.load %arg7[%c1, %c0_14, %c0_15] : memref<3x1x128xf32, #tpu.memory_space<vmem>>, vector<1x1x128xf32>
    %13 = vector.shape_cast %12 : vector<1x1x128xf32> to vector<1x128xf32>
    %14 = vector.broadcast %13 : vector<1x128xf32> to vector<256x128xf32>
    %15 = arith.addf %11, %14 : vector<256x128xf32>
    %16 = vector.shape_cast %15 : vector<256x128xf32> to vector<2x128x128xf32>
    "tpu.trace_start"() <{level = 10 : i32, message = "sij,sjf->sif"}> : () -> ()
    %cst_16 = arith.constant dense<0.000000e+00> : vector<2x128x128xf32>
    %17 = tpu.matmul %8, %16, %cst_16 {dimension_numbers = #tpu.dot_dimension_numbers<[2], [1], [1], [2], [0, 0, 0, 1, 1, 2], [0], [0]>} : vector<2x128x128xf32>, vector<2x128x128xf32>, vector<2x128x128xf32> -> vector<2x128x128xf32>
    "tpu.trace_stop"() : () -> ()
    %18 = vector.shape_cast %17 : vector<2x128x128xf32> to vector<256x128xf32>
    %19 = vector.shape_cast %18 : vector<256x128xf32> to vector<16x16x128xf32>
    %c0_17 = arith.constant 0 : index
    %c0_18 = arith.constant 0 : index
    %c0_19 = arith.constant 0 : index
    %20 = vector.load %arg4[%c0_17, %c0_18, %c0_19] : memref<4x16x128xf32, #tpu.memory_space<vmem>>, vector<1x16x128xf32>
    %21 = vector.shape_cast %20 : vector<1x16x128xf32> to vector<16x128xf32>
    %22 = vector.shape_cast %21 : vector<16x128xf32> to vector<1x16x128xf32>
    %23 = vector.broadcast %22 : vector<1x16x128xf32> to vector<16x16x128xf32>
    %24 = arith.mulf %19, %23 : vector<16x16x128xf32>
    %c2 = arith.constant 2 : index
    %c0_20 = arith.constant 0 : index
    %c0_21 = arith.constant 0 : index
    %25 = vector.load %arg4[%c2, %c0_20, %c0_21] : memref<4x16x128xf32, #tpu.memory_space<vmem>>, vector<1x16x128xf32>
    %26 = vector.shape_cast %25 : vector<1x16x128xf32> to vector<16x128xf32>
    %27 = vector.shape_cast %26 : vector<16x128xf32> to vector<1x16x128xf32>
    %28 = vector.broadcast %27 : vector<1x16x128xf32> to vector<16x16x128xf32>
    %29 = arith.addf %24, %28 : vector<16x16x128xf32>
    %30 = vector.shape_cast %29 : vector<16x16x128xf32> to vector<256x128xf32>
    %cst_22 = arith.constant 0.000000e+00 : f32
    %31 = vector.broadcast %cst_22 : f32 to vector<256x128xf32>
    %32 = arith.maximumf %30, %31 : vector<256x128xf32>
    %c1_23 = arith.constant 1 : index
    %c0_24 = arith.constant 0 : index
    %c0_25 = arith.constant 0 : index
    %33 = vector.load %arg6[%c1_23, %c0_24, %c0_25] : memref<2x128x128xf32, #tpu.memory_space<vmem>>, vector<1x128x128xf32>
    %34 = vector.shape_cast %33 : vector<1x128x128xf32> to vector<128x128xf32>
    %cst_26 = arith.constant dense<0.000000e+00> : vector<256x128xf32>
    %35 = tpu.matmul %32, %34, %cst_26 {dimension_numbers = #tpu.dot_dimension_numbers<[1], [0], [0], [1], [0, 0, 1, 1], [], []>} : vector<256x128xf32>, vector<128x128xf32>, vector<256x128xf32> -> vector<256x128xf32>
    %c2_27 = arith.constant 2 : index
    %c0_28 = arith.constant 0 : index
    %c0_29 = arith.constant 0 : index
    %36 = vector.load %arg7[%c2_27, %c0_28, %c0_29] : memref<3x1x128xf32, #tpu.memory_space<vmem>>, vector<1x1x128xf32>
    %37 = vector.shape_cast %36 : vector<1x1x128xf32> to vector<1x128xf32>
    %38 = vector.broadcast %37 : vector<1x128xf32> to vector<256x128xf32>
    %39 = arith.addf %35, %38 : vector<256x128xf32>
    %40 = vector.shape_cast %39 : vector<256x128xf32> to vector<2x128x128xf32>
    "tpu.trace_start"() <{level = 10 : i32, message = "sij,sjf->sif"}> : () -> ()
    %cst_30 = arith.constant dense<0.000000e+00> : vector<2x128x128xf32>
    %41 = tpu.matmul %8, %40, %cst_30 {dimension_numbers = #tpu.dot_dimension_numbers<[2], [1], [1], [2], [0, 0, 0, 1, 1, 2], [0], [0]>} : vector<2x128x128xf32>, vector<2x128x128xf32>, vector<2x128x128xf32> -> vector<2x128x128xf32>
    "tpu.trace_stop"() : () -> ()
    %42 = vector.shape_cast %41 : vector<2x128x128xf32> to vector<256x128xf32>
    %43 = vector.shape_cast %42 : vector<256x128xf32> to vector<16x16x128xf32>
    %c1_31 = arith.constant 1 : index
    %c0_32 = arith.constant 0 : index
    %c0_33 = arith.constant 0 : index
    %44 = vector.load %arg4[%c1_31, %c0_32, %c0_33] : memref<4x16x128xf32, #tpu.memory_space<vmem>>, vector<1x16x128xf32>
    %45 = vector.shape_cast %44 : vector<1x16x128xf32> to vector<16x128xf32>
    %46 = vector.shape_cast %45 : vector<16x128xf32> to vector<1x16x128xf32>
    %47 = vector.broadcast %46 : vector<1x16x128xf32> to vector<16x16x128xf32>
    %48 = arith.mulf %43, %47 : vector<16x16x128xf32>
    %c3 = arith.constant 3 : index
    %c0_34 = arith.constant 0 : index
    %c0_35 = arith.constant 0 : index
    %49 = vector.load %arg4[%c3, %c0_34, %c0_35] : memref<4x16x128xf32, #tpu.memory_space<vmem>>, vector<1x16x128xf32>
    %50 = vector.shape_cast %49 : vector<1x16x128xf32> to vector<16x128xf32>
    %51 = vector.shape_cast %50 : vector<16x128xf32> to vector<1x16x128xf32>
    %52 = vector.broadcast %51 : vector<1x16x128xf32> to vector<16x16x128xf32>
    %53 = arith.addf %48, %52 : vector<16x16x128xf32>
    %54 = vector.shape_cast %53 : vector<16x16x128xf32> to vector<256x128xf32>
    %cst_36 = arith.constant 0.000000e+00 : f32
    %55 = vector.broadcast %cst_36 : f32 to vector<256x128xf32>
    %56 = arith.maximumf %54, %55 : vector<256x128xf32>
    %57 = vector.shape_cast %56 : vector<256x128xf32> to vector<16x16x128xf32>
    %cst_37 = arith.constant dense<0.000000e+00> : vector<16x128xf32>
    %58 = vector.multi_reduction <add>, %57, %cst_37 [1] : vector<16x16x128xf32> to vector<16x128xf32>
    %c0_38 = arith.constant 0 : index
    %c0_39 = arith.constant 0 : index
    %59 = vector.load %arg8[%c0_38, %c0_39] : memref<128x128xf32, #tpu.memory_space<vmem>>, vector<128x128xf32>
    %cst_40 = arith.constant dense<0.000000e+00> : vector<16x128xf32>
    %60 = tpu.matmul %58, %59, %cst_40 {dimension_numbers = #tpu.dot_dimension_numbers<[1], [0], [0], [1], [0, 0, 1, 1], [], []>} : vector<16x128xf32>, vector<128x128xf32>, vector<16x128xf32> -> vector<16x128xf32>
    %c0_41 = arith.constant 0 : index
    %c0_42 = arith.constant 0 : index
    %c0_43 = arith.constant 0 : index
    %61 = vector.load %arg11[%c0_41, %c0_42, %c0_43] : memref<7x1x128xf32, #tpu.memory_space<vmem>>, vector<1x1x128xf32>
    %62 = vector.shape_cast %61 : vector<1x1x128xf32> to vector<1x128xf32>
    %63 = vector.broadcast %62 : vector<1x128xf32> to vector<16x128xf32>
    %64 = arith.addf %60, %63 : vector<16x128xf32>
    %cst_44 = arith.constant 0.000000e+00 : f32
    %65 = vector.broadcast %cst_44 : f32 to vector<16x128xf32>
    %66 = arith.maximumf %64, %65 : vector<16x128xf32>
    %c0_45 = arith.constant 0 : index
    %c0_46 = arith.constant 0 : index
    %c0_47 = arith.constant 0 : index
    %67 = vector.load %arg9[%c0_45, %c0_46, %c0_47] : memref<2x128x128xf32, #tpu.memory_space<vmem>>, vector<1x128x128xf32>
    %68 = vector.shape_cast %67 : vector<1x128x128xf32> to vector<128x128xf32>
    %cst_48 = arith.constant dense<0.000000e+00> : vector<16x128xf32>
    %69 = tpu.matmul %66, %68, %cst_48 {dimension_numbers = #tpu.dot_dimension_numbers<[1], [0], [0], [1], [0, 0, 1, 1], [], []>} : vector<16x128xf32>, vector<128x128xf32>, vector<16x128xf32> -> vector<16x128xf32>
    %c0_49 = arith.constant 0 : index
    %c0_50 = arith.constant 0 : index
    %c0_51 = arith.constant 0 : index
    %70 = vector.load %arg3[%c0_49, %c0_50, %c0_51] : memref<1x16x128xf32, #tpu.memory_space<vmem>>, vector<1x16x128xf32>
    %71 = vector.shape_cast %70 : vector<1x16x128xf32> to vector<16x128xf32>
    %c0_52 = arith.constant 0 : index
    %c0_53 = arith.constant 0 : index
    %72 = vector.load %arg10[%c0_52, %c0_53] : memref<128x128xf32, #tpu.memory_space<vmem>>, vector<128x128xf32>
    %cst_54 = arith.constant dense<0.000000e+00> : vector<16x128xf32>
    %73 = tpu.matmul %71, %72, %cst_54 {dimension_numbers = #tpu.dot_dimension_numbers<[1], [0], [0], [1], [0, 0, 1, 1], [], []>} : vector<16x128xf32>, vector<128x128xf32>, vector<16x128xf32> -> vector<16x128xf32>
    %74 = arith.addf %69, %73 : vector<16x128xf32>
    %c1_55 = arith.constant 1 : index
    %c0_56 = arith.constant 0 : index
    %c0_57 = arith.constant 0 : index
    %75 = vector.load %arg11[%c1_55, %c0_56, %c0_57] : memref<7x1x128xf32, #tpu.memory_space<vmem>>, vector<1x1x128xf32>
    %76 = vector.shape_cast %75 : vector<1x1x128xf32> to vector<1x128xf32>
    %77 = vector.broadcast %76 : vector<1x128xf32> to vector<16x128xf32>
    %78 = arith.addf %74, %77 : vector<16x128xf32>
    %c3_58 = arith.constant 3 : index
    %c0_59 = arith.constant 0 : index
    %c0_60 = arith.constant 0 : index
    %79 = vector.load %arg11[%c3_58, %c0_59, %c0_60] : memref<7x1x128xf32, #tpu.memory_space<vmem>>, vector<1x1x128xf32>
    %80 = vector.shape_cast %79 : vector<1x1x128xf32> to vector<1x128xf32>
    %81 = vector.broadcast %80 : vector<1x128xf32> to vector<16x128xf32>
    %82 = arith.mulf %78, %81 : vector<16x128xf32>
    %c5 = arith.constant 5 : index
    %c0_61 = arith.constant 0 : index
    %c0_62 = arith.constant 0 : index
    %83 = vector.load %arg11[%c5, %c0_61, %c0_62] : memref<7x1x128xf32, #tpu.memory_space<vmem>>, vector<1x1x128xf32>
    %84 = vector.shape_cast %83 : vector<1x1x128xf32> to vector<1x128xf32>
    %85 = vector.broadcast %84 : vector<1x128xf32> to vector<16x128xf32>
    %86 = arith.addf %82, %85 : vector<16x128xf32>
    %cst_63 = arith.constant 0.000000e+00 : f32
    %87 = vector.broadcast %cst_63 : f32 to vector<16x128xf32>
    %88 = arith.maximumf %86, %87 : vector<16x128xf32>
    %c1_64 = arith.constant 1 : index
    %c0_65 = arith.constant 0 : index
    %c0_66 = arith.constant 0 : index
    %89 = vector.load %arg9[%c1_64, %c0_65, %c0_66] : memref<2x128x128xf32, #tpu.memory_space<vmem>>, vector<1x128x128xf32>
    %90 = vector.shape_cast %89 : vector<1x128x128xf32> to vector<128x128xf32>
    %cst_67 = arith.constant dense<0.000000e+00> : vector<16x128xf32>
    %91 = tpu.matmul %88, %90, %cst_67 {dimension_numbers = #tpu.dot_dimension_numbers<[1], [0], [0], [1], [0, 0, 1, 1], [], []>} : vector<16x128xf32>, vector<128x128xf32>, vector<16x128xf32> -> vector<16x128xf32>
    %c2_68 = arith.constant 2 : index
    %c0_69 = arith.constant 0 : index
    %c0_70 = arith.constant 0 : index
    %92 = vector.load %arg11[%c2_68, %c0_69, %c0_70] : memref<7x1x128xf32, #tpu.memory_space<vmem>>, vector<1x1x128xf32>
    %93 = vector.shape_cast %92 : vector<1x1x128xf32> to vector<1x128xf32>
    %94 = vector.broadcast %93 : vector<1x128xf32> to vector<16x128xf32>
    %95 = arith.addf %91, %94 : vector<16x128xf32>
    %c4 = arith.constant 4 : index
    %c0_71 = arith.constant 0 : index
    %c0_72 = arith.constant 0 : index
    %96 = vector.load %arg11[%c4, %c0_71, %c0_72] : memref<7x1x128xf32, #tpu.memory_space<vmem>>, vector<1x1x128xf32>
    %97 = vector.shape_cast %96 : vector<1x1x128xf32> to vector<1x128xf32>
    %98 = vector.broadcast %97 : vector<1x128xf32> to vector<16x128xf32>
    %99 = arith.mulf %95, %98 : vector<16x128xf32>
    %c6 = arith.constant 6 : index
    %c0_73 = arith.constant 0 : index
    %c0_74 = arith.constant 0 : index
    %100 = vector.load %arg11[%c6, %c0_73, %c0_74] : memref<7x1x128xf32, #tpu.memory_space<vmem>>, vector<1x1x128xf32>
    %101 = vector.shape_cast %100 : vector<1x1x128xf32> to vector<1x128xf32>
    %102 = vector.broadcast %101 : vector<1x128xf32> to vector<16x128xf32>
    %103 = arith.addf %99, %102 : vector<16x128xf32>
    %cst_75 = arith.constant 0.000000e+00 : f32
    %104 = vector.broadcast %cst_75 : f32 to vector<16x128xf32>
    %105 = arith.maximumf %103, %104 : vector<16x128xf32>
    %c0_76 = arith.constant 0 : index
    %c0_77 = arith.constant 0 : index
    %106 = vector.load %arg12[%c0_76, %c0_77] : memref<128x128xf32, #tpu.memory_space<vmem>>, vector<128x128xf32>
    %cst_78 = arith.constant dense<0.000000e+00> : vector<16x128xf32>
    %107 = tpu.matmul %105, %106, %cst_78 {dimension_numbers = #tpu.dot_dimension_numbers<[1], [0], [0], [1], [0, 0, 1, 1], [], []>} : vector<16x128xf32>, vector<128x128xf32>, vector<16x128xf32> -> vector<16x128xf32>
    %c0_79 = arith.constant 0 : index
    %c0_80 = arith.constant 0 : index
    %108 = vector.load %arg13[%c0_79, %c0_80] : memref<1x128xf32, #tpu.memory_space<vmem>>, vector<1x128xf32>
    %109 = vector.broadcast %108 : vector<1x128xf32> to vector<16x128xf32>
    %110 = arith.addf %107, %109 : vector<16x128xf32>
    %c0_81 = arith.constant 0 : index
    %c0_82 = arith.constant 0 : index
    %c0_83 = arith.constant 0 : index
    %111 = vector.load %arg14[%c0_81, %c0_82, %c0_83] : memref<1x16x128xf32, #tpu.memory_space<vmem>>, vector<1x16x128xf32>
    %112 = vector.shape_cast %111 : vector<1x16x128xf32> to vector<16x128xf32>
    %113 = vector.shape_cast %110 : vector<16x128xf32> to vector<1x16x128xf32>
    tpu.vector_store %arg14[%c0_81, %c0_82, %c0_83], %113 {strides = array<i32>} : memref<1x16x128xf32, #tpu.memory_space<vmem>>, vector<1x16x128xf32>,
    return
  }
  func.func @transform_0(%arg0: i32) -> (i32, i32, i32) {
    %c0_i32 = arith.constant 0 : i32
    %c0_i32_0 = arith.constant 0 : i32
    %c0_i32_1 = arith.constant 0 : i32
    return %arg0, %c0_i32, %c0_i32_0 : i32, i32, i32
  }
  func.func @transform_1(%arg0: i32) -> (i32, i32, i32) {
    %c0_i32 = arith.constant 0 : i32
    %c0_i32_0 = arith.constant 0 : i32
    %c0_i32_1 = arith.constant 0 : i32
    return %arg0, %c0_i32, %c0_i32_0 : i32, i32, i32
  }
  func.func @transform_2(%arg0: i32) -> (i32, i32, i32) {
    %c0_i32 = arith.constant 0 : i32
    %c0_i32_0 = arith.constant 0 : i32
    %c0_i32_1 = arith.constant 0 : i32
    return %arg0, %c0_i32, %c0_i32_0 : i32, i32, i32
  }
  func.func @transform_3(%arg0: i32) -> (i32, i32, i32) {
    %c0_i32 = arith.constant 0 : i32
    %c0_i32_0 = arith.constant 0 : i32
    %c0_i32_1 = arith.constant 0 : i32
    %c0_i32_2 = arith.constant 0 : i32
    return %c0_i32, %c0_i32_0, %c0_i32_1 : i32, i32, i32
  }
  func.func @transform_4(%arg0: i32) -> (i32, i32) {
    %c0_i32 = arith.constant 0 : i32
    %c0_i32_0 = arith.constant 0 : i32
    %c0_i32_1 = arith.constant 0 : i32
    return %c0_i32, %c0_i32_0 : i32, i32
  }
  func.func @transform_5(%arg0: i32) -> (i32, i32, i32) {
    %c0_i32 = arith.constant 0 : i32
    %c0_i32_0 = arith.constant 0 : i32
    %c0_i32_1 = arith.constant 0 : i32
    %c0_i32_2 = arith.constant 0 : i32
    return %c0_i32, %c0_i32_0, %c0_i32_1 : i32, i32, i32
  }
  func.func @transform_6(%arg0: i32) -> (i32, i32, i32) {
    %c0_i32 = arith.constant 0 : i32
    %c0_i32_0 = arith.constant 0 : i32
    %c0_i32_1 = arith.constant 0 : i32
    %c0_i32_2 = arith.constant 0 : i32
    return %c0_i32, %c0_i32_0, %c0_i32_1 : i32, i32, i32
  }
  func.func @transform_7(%arg0: i32) -> (i32, i32) {
    %c0_i32 = arith.constant 0 : i32
    %c0_i32_0 = arith.constant 0 : i32
    %c0_i32_1 = arith.constant 0 : i32
    return %c0_i32, %c0_i32_0 : i32, i32
  }
  func.func @transform_8(%arg0: i32) -> (i32, i32, i32) {
    %c0_i32 = arith.constant 0 : i32
    %c0_i32_0 = arith.constant 0 : i32
    %c0_i32_1 = arith.constant 0 : i32
    %c0_i32_2 = arith.constant 0 : i32
    return %c0_i32, %c0_i32_0, %c0_i32_1 : i32, i32, i32
  }
  func.func @transform_9(%arg0: i32) -> (i32, i32) {
    %c0_i32 = arith.constant 0 : i32
    %c0_i32_0 = arith.constant 0 : i32
    %c0_i32_1 = arith.constant 0 : i32
    return %c0_i32, %c0_i32_0 : i32, i32
  }
  func.func @transform_10(%arg0: i32) -> (i32, i32, i32) {
    %c0_i32 = arith.constant 0 : i32
    %c0_i32_0 = arith.constant 0 : i32
    %c0_i32_1 = arith.constant 0 : i32
    %c0_i32_2 = arith.constant 0 : i32
    return %c0_i32, %c0_i32_0, %c0_i32_1 : i32, i32, i32
  }
  func.func @transform_11(%arg0: i32) -> (i32, i32) {
    %c0_i32 = arith.constant 0 : i32
    %c0_i32_0 = arith.constant 0 : i32
    %c0_i32_1 = arith.constant 0 : i32
    return %c0_i32, %c0_i32_0 : i32, i32
  }
  func.func @transform_12(%arg0: i32) -> (i32, i32) {
    %c0_i32 = arith.constant 0 : i32
    %c0_i32_0 = arith.constant 0 : i32
    %c0_i32_1 = arith.constant 0 : i32
    return %c0_i32, %c0_i32_0 : i32, i32
  }
  func.func @transform_13(%arg0: i32) -> (i32, i32, i32) {
    %c0_i32 = arith.constant 0 : i32
    %c0_i32_0 = arith.constant 0 : i32
    %c0_i32_1 = arith.constant 0 : i32
    return %arg0, %c0_i32, %c0_i32_0 : i32, i32, i32
  }
}

</mosaic_0001>

<llo_original>
// kernel: tpu_custom_call.1
$region0: #{tpu_custom_call.1}
  #allocation0 [shape = 'u32[]', space=smem, size = 0x4, offset = 0x4, fixed_abs, tag = 'smem constant byte address 0x4 - core index']
  #allocation1 [shape = 'u32[72,128]{1,0:T(1,128)}', space=vmem, size = 0x9000, scoped, tag = 'internal scratch']
  %s0 = inlined_call_operand.hbm [shape: f32[2,256,128], index: 0, kind: input, shape index: {}]
  %s1 = inlined_call_operand.hbm [shape: f32[4,128,128], index: 1, kind: input, shape index: {}]
  %s2 = inlined_call_operand.hbm [shape: f32[2,16,128], index: 2, kind: input, shape index: {}]
  %s3 = inlined_call_operand.hbm [shape: f32[4,16,128], index: 3, kind: input, shape index: {}]
  %s4 = inlined_call_operand.hbm [shape: f32[128,128], index: 4, kind: input, shape index: {}]
  %s5 = inlined_call_operand.hbm [shape: f32[2,128,128], index: 5, kind: input, shape index: {}]
  %s6 = inlined_call_operand.hbm [shape: f32[3,1,128], index: 6, kind: input, shape index: {}]
  %s7 = inlined_call_operand.hbm [shape: f32[128,128], index: 7, kind: input, shape index: {}]
  %s8 = inlined_call_operand.hbm [shape: f32[2,128,128], index: 8, kind: input, shape index: {}]
  %s9 = inlined_call_operand.hbm [shape: f32[128,128], index: 9, kind: input, shape index: {}]
  %s10 = inlined_call_operand.vmem [shape: f32[7,1,128], index: 10, kind: input, shape index: {}]
  %s11 = inlined_call_operand.hbm [shape: f32[128,128], index: 11, kind: input, shape index: {}]
  %s12 = inlined_call_operand.vmem [shape: f32[1,128], index: 12, kind: input, shape index: {}]
  %s13 = inlined_call_operand.hbm [shape: f32[2,16,128], index: 13, kind: output, shape index: {}]
  %s14 = sld [smem:[#allocation0]]
  $region129: #{tpu_custom_call.1} parent=0
    _
  %s16 = ssub.s32 1, %s14
  %s17 = scalar_select 0, %s16, %s14
  $region1: #{tpu_custom_call.1} parent=0
    #allocation2 [shape = 'u8[262144]{0}', space=vmem, size = 0x40000, scoped, tag = 'input window, operand 0']
    #allocation3 [shape = 's32[2]{0}', space=sflag, size = 0x8, scoped, tag = 'scoped memory for tpu_custom_call.1']
    #allocation4 [shape = 's32[2]{0}', space=sflag, size = 0x8, scoped, tag = 'scoped memory for tpu_custom_call.1']
    #allocation5 [shape = 'u8[262144]{0}', space=vmem, size = 0x40000, scoped, tag = 'input window, operand 1']
    #allocation6 [shape = 's32[2]{0}', space=sflag, size = 0x8, scoped, tag = 'scoped memory for tpu_custom_call.1']
    #allocation7 [shape = 'u8[16384]{0}', space=vmem, size = 0x4000, scoped, tag = 'input window, operand 2']
    #allocation8 [shape = 'u8[32768]{0}', space=vmem, size = 0x8000, scoped, tag = 'input window, operand 3, single buffered']
    #allocation9 [shape = 's32[1]{0}', space=sflag, size = 0x4, scoped, tag = 'scoped memory for tpu_custom_call.1']
    #allocation10 [shape = 'u8[65536]{0}', space=vmem, size = 0x10000, scoped, tag = 'input window, operand 4, single buffered']
    #allocation11 [shape = 'u8[131072]{0}', space=vmem, size = 0x20000, scoped, tag = 'input window, operand 5, single buffered']
    #allocation12 [shape = 's32[1]{0}', space=sflag, size = 0x4, scoped, tag = 'scoped memory for tpu_custom_call.1']
    #allocation13 [shape = 'u8[1536]{0}', space=vmem, size = 0x800, scoped, tag = 'input window, operand 6, single buffered']
    #allocation14 [shape = 'u8[65536]{0}', space=vmem, size = 0x10000, scoped, tag = 'input window, operand 7, single buffered']
    #allocation15 [shape = 's32[1]{0}', space=sflag, size = 0x4, scoped, tag = 'scoped memory for tpu_custom_call.1']
    #allocation16 [shape = 'u8[131072]{0}', space=vmem, size = 0x20000, scoped, tag = 'input window, operand 8, single buffered']
    #allocation17 [shape = 'u8[65536]{0}', space=vmem, size = 0x10000, scoped, tag = 'input window, operand 9, single buffered']
    #allocation18 [shape = 's32[1]{0}', space=sflag, size = 0x4, scoped, tag = 'scoped memory for tpu_custom_call.1']
    #allocation19 [shape = 'u8[65536]{0}', space=vmem, size = 0x10000, scoped, tag = 'input window, operand 11, single buffered']
    #allocation20 [shape = 'u8[16384]{0}', space=vmem, size = 0x4000, scoped, tag = 'output window, operand 0']
    %18 = vsyncpa [#allocation3], 0
    %s19 = scalar_lea.sflag [#allocation3], 1
    %20 = vsyncpa %s19, 0
    %21 = vsyncpa [#allocation6], 0
    %s22 = scalar_lea.sflag [#allocation6], 1
    %23 = vsyncpa %s22, 0
    %24 = vsyncpa [#allocation9], 0
    %25 = vsyncpa [#allocation12], 0
    %26 = vsyncpa [#allocation15], 0
    %27 = vsyncpa [#allocation18], 0
    %28 = vsyncpa [#allocation4], 0
    %s29 = scalar_lea.sflag [#allocation4], 1
    %30 = vsyncpa %s29, 0
    loop: start=0, step=1, limit=4
    $region2: #{tpu_custom_call.1} parent=1 // loop_pre_header
      _
    $region3: #{tpu_custom_call.1} parent=1 // loop_header
      %s32 = sphi 0, %s36
      %p33 = scmp.ge.s32.totalorder %s32, 4
      %s42 = sphi 0, %s44
      %s45 = sphi 0, %s42
      %s46 = sphi 0, %s45
      %s62 = sphi 0, %s46
      %s68 = sphi 0, %s70
      %s71 = sphi 0, %s68
      %s72 = sphi 0, %s71
      %s88 = sphi 0, %s72
      %s94 = sphi 0, %s96
      %s97 = sphi 0, %s94
      %s98 = sphi 0, %s97
      %s114 = sphi 0, %s98
      %s118 = sphi 0, %s118
      %s120 = sphi 0, %s118
      %s121 = sphi 0, %s120
      %s135 = sphi 0, %s121
      %s139 = sphi 0, %s139
      %s141 = sphi 0, %s139
      %s142 = sphi 0, %s141
      %s156 = sphi 0, %s142
      %s160 = sphi 0, %s160
      %s162 = sphi 0, %s160
      %s163 = sphi 0, %s162
      %s177 = sphi 0, %s163
      %s181 = sphi 0, %s181
      %s183 = sphi 0, %s181
      %s184 = sphi 0, %s183
      %s198 = sphi 0, %s184
      %s202 = sphi 0, %s202
      %s204 = sphi 0, %s202
      %s205 = sphi 0, %s204
      %s219 = sphi 0, %s205
      %s223 = sphi 0, %s223
      %s225 = sphi 0, %s223
      %s226 = sphi 0, %s225
      %s240 = sphi 0, %s226
      %s244 = sphi 0, %s244
      %s246 = sphi 0, %s244
      %s247 = sphi 0, %s246
      %s261 = sphi 0, %s247
      %s265 = sphi 0, %s265
      %s267 = sphi 0, %s265
      %s268 = sphi 0, %s267
      %s282 = sphi 0, %s268
      %s286 = sphi 0, %s286
      %s288 = sphi 0, %s286
      %s289 = sphi 0, %s288
      %s303 = sphi 0, %s289
      %s307 = sphi 0, %s307
      %s309 = sphi 0, %s307
      %s310 = sphi 0, %s309
      %s324 = sphi 0, %s310
      %s330 = sphi 0, %s332
      %s333 = sphi 0, %s330
      %s334 = sphi 0, %s333
      %s350 = sphi 0, %s334
    $region4: #{tpu_custom_call.1} parent=1 // loop_header_branch
      %35 = sbr.rel (%p33) target = $region8
    $region5: #{tpu_custom_call.1} parent=1 // loop_body
      %s37 = ssub.s32 %s32, 1
      %s38 = ssub.s32 %s32, 2
      %s39 = sadd.s32 %s32, 1
      %s40 = ssub.s32 %s32, %s39
      %p41 = scmp.eq.s32.totalorder %s40, 0
      %s43 = sadd.s32 %s42, 1
      %s44 = scalar_select %p41, %s42, %s43
      %p47 = pneg %p41
      %p48 = scmp.eq.s32.totalorder %s32, 1
      %p49 = por %p47, %p48
      %p50 = scmp.ne.s32.totalorder %s42, %s45
      %p51 = scmp.eq.s32.totalorder %s32, 0
      %p52 = por %p50, %p51
      %p53 = scmp.ne.s32.totalorder %s42, %s45
      %p54 = scmp.eq.s32.totalorder %s37, 1
      %p55 = por %p53, %p54
      %p56 = scmp.ne.s32.totalorder %s45, %s46
      %p57 = scmp.eq.s32.totalorder %s37, 0
      %p58 = por %p56, %p57
      %p59 = scmp.ne.s32.totalorder %s45, %s46
      %p60 = scmp.eq.s32.totalorder %s38, 1
      %p61 = por %p59, %p60
      %p63 = scmp.ne.s32.totalorder %s46, %s62
      %p64 = scmp.eq.s32.totalorder %s38, 0
      %p65 = por %p63, %p64
      %s66 = ssub.s32 %s32, %s39
      %p67 = scmp.eq.s32.totalorder %s66, 0
      %s69 = sadd.s32 %s68, 1
      %s70 = scalar_select %p67, %s68, %s69
      %p73 = pneg %p67
      %p74 = scmp.eq.s32.totalorder %s32, 1
      %p75 = por %p73, %p74
      %p76 = scmp.ne.s32.totalorder %s68, %s71
      %p77 = scmp.eq.s32.totalorder %s32, 0
      %p78 = por %p76, %p77
      %p79 = scmp.ne.s32.totalorder %s68, %s71
      %p80 = scmp.eq.s32.totalorder %s37, 1
      %p81 = por %p79, %p80
      %p82 = scmp.ne.s32.totalorder %s71, %s72
      %p83 = scmp.eq.s32.totalorder %s37, 0
      %p84 = por %p82, %p83
      %p85 = scmp.ne.s32.totalorder %s71, %s72
      %p86 = scmp.eq.s32.totalorder %s38, 1
      %p87 = por %p85, %p86
      %p89 = scmp.ne.s32.totalorder %s72, %s88
      %p90 = scmp.eq.s32.totalorder %s38, 0
      %p91 = por %p89, %p90
      %s92 = ssub.s32 %s32, %s39
      %p93 = scmp.eq.s32.totalorder %s92, 0
      %s95 = sadd.s32 %s94, 1
      %s96 = scalar_select %p93, %s94, %s95
      %p99 = pneg %p93
      %p100 = scmp.eq.s32.totalorder %s32, 1
      %p101 = por %p99, %p100
      %p102 = scmp.ne.s32.totalorder %s94, %s97
      %p103 = scmp.eq.s32.totalorder %s32, 0
      %p104 = por %p102, %p103
      %p105 = scmp.ne.s32.totalorder %s94, %s97
      %p106 = scmp.eq.s32.totalorder %s37, 1
      %p107 = por %p105, %p106
      %p108 = scmp.ne.s32.totalorder %s97, %s98
      %p109 = scmp.eq.s32.totalorder %s37, 0
      %p110 = por %p108, %p109
      %p111 = scmp.ne.s32.totalorder %s97, %s98
      %p112 = scmp.eq.s32.totalorder %s38, 1
      %p113 = por %p111, %p112
      %p115 = scmp.ne.s32.totalorder %s98, %s114
      %p116 = scmp.eq.s32.totalorder %s38, 0
      %p117 = por %p115, %p116
      %s119 = sadd.s32 %s118, 1
      %p122 = scmp.eq.s32.totalorder %s32, 1
      %p123 = scmp.ne.s32.totalorder %s118, %s120
      %p124 = scmp.eq.s32.totalorder %s32, 0
      %p125 = por %p123, %p124
      %p126 = scmp.ne.s32.totalorder %s118, %s120
      %p127 = scmp.eq.s32.totalorder %s37, 1
      %p128 = por %p126, %p127
      %p129 = scmp.ne.s32.totalorder %s120, %s121
      %p130 = scmp.eq.s32.totalorder %s37, 0
      %p131 = por %p129, %p130
      %p132 = scmp.ne.s32.totalorder %s120, %s121
      %p133 = scmp.eq.s32.totalorder %s38, 1
      %p134 = por %p132, %p133
      %p136 = scmp.ne.s32.totalorder %s121, %s135
      %p137 = scmp.eq.s32.totalorder %s38, 0
      %p138 = por %p136, %p137
      %s140 = sadd.s32 %s139, 1
      %p143 = scmp.eq.s32.totalorder %s32, 1
      %p144 = scmp.ne.s32.totalorder %s139, %s141
      %p145 = scmp.eq.s32.totalorder %s32, 0
      %p146 = por %p144, %p145
      %p147 = scmp.ne.s32.totalorder %s139, %s141
      %p148 = scmp.eq.s32.totalorder %s37, 1
      %p149 = por %p147, %p148
      %p150 = scmp.ne.s32.totalorder %s141, %s142
      %p151 = scmp.eq.s32.totalorder %s37, 0
      %p152 = por %p150, %p151
      %p153 = scmp.ne.s32.totalorder %s141, %s142
      %p154 = scmp.eq.s32.totalorder %s38, 1
      %p155 = por %p153, %p154
      %p157 = scmp.ne.s32.totalorder %s142, %s156
      %p158 = scmp.eq.s32.totalorder %s38, 0
      %p159 = por %p157, %p158
      %s161 = sadd.s32 %s160, 1
      %p164 = scmp.eq.s32.totalorder %s32, 1
      %p165 = scmp.ne.s32.totalorder %s160, %s162
      %p166 = scmp.eq.s32.totalorder %s32, 0
      %p167 = por %p165, %p166
      %p168 = scmp.ne.s32.totalorder %s160, %s162
      %p169 = scmp.eq.s32.totalorder %s37, 1
      %p170 = por %p168, %p169
      %p171 = scmp.ne.s32.totalorder %s162, %s163
      %p172 = scmp.eq.s32.totalorder %s37, 0
      %p173 = por %p171, %p172
      %p174 = scmp.ne.s32.totalorder %s162, %s163
      %p175 = scmp.eq.s32.totalorder %s38, 1
      %p176 = por %p174, %p175
      %p178 = scmp.ne.s32.totalorder %s163, %s177
      %p179 = scmp.eq.s32.totalorder %s38, 0
      %p180 = por %p178, %p179
      %s182 = sadd.s32 %s181, 1
      %p185 = scmp.eq.s32.totalorder %s32, 1
      %p186 = scmp.ne.s32.totalorder %s181, %s183
      %p187 = scmp.eq.s32.totalorder %s32, 0
      %p188 = por %p186, %p187
      %p189 = scmp.ne.s32.totalorder %s181, %s183
      %p190 = scmp.eq.s32.totalorder %s37, 1
      %p191 = por %p189, %p190
      %p192 = scmp.ne.s32.totalorder %s183, %s184
      %p193 = scmp.eq.s32.totalorder %s37, 0
      %p194 = por %p192, %p193
      %p195 = scmp.ne.s32.totalorder %s183, %s184
      %p196 = scmp.eq.s32.totalorder %s38, 1
      %p197 = por %p195, %p196
      %p199 = scmp.ne.s32.totalorder %s184, %s198
      %p200 = scmp.eq.s32.totalorder %s38, 0
      %p201 = por %p199, %p200
      %s203 = sadd.s32 %s202, 1
      %p206 = scmp.eq.s32.totalorder %s32, 1
      %p207 = scmp.ne.s32.totalorder %s202, %s204
      %p208 = scmp.eq.s32.totalorder %s32, 0
      %p209 = por %p207, %p208
      %p210 = scmp.ne.s32.totalorder %s202, %s204
      %p211 = scmp.eq.s32.totalorder %s37, 1
      %p212 = por %p210, %p211
      %p213 = scmp.ne.s32.totalorder %s204, %s205
      %p214 = scmp.eq.s32.totalorder %s37, 0
      %p215 = por %p213, %p214
      %p216 = scmp.ne.s32.totalorder %s204, %s205
      %p217 = scmp.eq.s32.totalorder %s38, 1
      %p218 = por %p216, %p217
      %p220 = scmp.ne.s32.totalorder %s205, %s219
      %p221 = scmp.eq.s32.totalorder %s38, 0
      %p222 = por %p220, %p221
      %s224 = sadd.s32 %s223, 1
      %p227 = scmp.eq.s32.totalorder %s32, 1
      %p228 = scmp.ne.s32.totalorder %s223, %s225
      %p229 = scmp.eq.s32.totalorder %s32, 0
      %p230 = por %p228, %p229
      %p231 = scmp.ne.s32.totalorder %s223, %s225
      %p232 = scmp.eq.s32.totalorder %s37, 1
      %p233 = por %p231, %p232
      %p234 = scmp.ne.s32.totalorder %s225, %s226
      %p235 = scmp.eq.s32.totalorder %s37, 0
      %p236 = por %p234, %p235
      %p237 = scmp.ne.s32.totalorder %s225, %s226
      %p238 = scmp.eq.s32.totalorder %s38, 1
      %p239 = por %p237, %p238
      %p241 = scmp.ne.s32.totalorder %s226, %s240
      %p242 = scmp.eq.s32.totalorder %s38, 0
      %p243 = por %p241, %p242
      %s245 = sadd.s32 %s244, 1
      %p248 = scmp.eq.s32.totalorder %s32, 1
      %p249 = scmp.ne.s32.totalorder %s244, %s246
      %p250 = scmp.eq.s32.totalorder %s32, 0
      %p251 = por %p249, %p250
      %p252 = scmp.ne.s32.totalorder %s244, %s246
      %p253 = scmp.eq.s32.totalorder %s37, 1
      %p254 = por %p252, %p253
      %p255 = scmp.ne.s32.totalorder %s246, %s247
      %p256 = scmp.eq.s32.totalorder %s37, 0
      %p257 = por %p255, %p256
      %p258 = scmp.ne.s32.totalorder %s246, %s247
      %p259 = scmp.eq.s32.totalorder %s38, 1
      %p260 = por %p258, %p259
      %p262 = scmp.ne.s32.totalorder %s247, %s261
      %p263 = scmp.eq.s32.totalorder %s38, 0
      %p264 = por %p262, %p263
      %s266 = sadd.s32 %s265, 1
      %p269 = scmp.eq.s32.totalorder %s32, 1
      %p270 = scmp.ne.s32.totalorder %s265, %s267
      %p271 = scmp.eq.s32.totalorder %s32, 0
      %p272 = por %p270, %p271
      %p273 = scmp.ne.s32.totalorder %s265, %s267
      %p274 = scmp.eq.s32.totalorder %s37, 1
      %p275 = por %p273, %p274
      %p276 = scmp.ne.s32.totalorder %s267, %s268
      %p277 = scmp.eq.s32.totalorder %s37, 0
      %p278 = por %p276, %p277
      %p279 = scmp.ne.s32.totalorder %s267, %s268
      %p280 = scmp.eq.s32.totalorder %s38, 1
      %p281 = por %p279, %p280
      %p283 = scmp.ne.s32.totalorder %s268, %s282
      %p284 = scmp.eq.s32.totalorder %s38, 0
      %p285 = por %p283, %p284
      %s287 = sadd.s32 %s286, 1
      %p290 = scmp.eq.s32.totalorder %s32, 1
      %p291 = scmp.ne.s32.totalorder %s286, %s288
      %p292 = scmp.eq.s32.totalorder %s32, 0
      %p293 = por %p291, %p292
      %p294 = scmp.ne.s32.totalorder %s286, %s288
      %p295 = scmp.eq.s32.totalorder %s37, 1
      %p296 = por %p294, %p295
      %p297 = scmp.ne.s32.totalorder %s288, %s289
      %p298 = scmp.eq.s32.totalorder %s37, 0
      %p299 = por %p297, %p298
      %p300 = scmp.ne.s32.totalorder %s288, %s289
      %p301 = scmp.eq.s32.totalorder %s38, 1
      %p302 = por %p300, %p301
      %p304 = scmp.ne.s32.totalorder %s289, %s303
      %p305 = scmp.eq.s32.totalorder %s38, 0
      %p306 = por %p304, %p305
      %s308 = sadd.s32 %s307, 1
      %p311 = scmp.eq.s32.totalorder %s32, 1
      %p312 = scmp.ne.s32.totalorder %s307, %s309
      %p313 = scmp.eq.s32.totalorder %s32, 0
      %p314 = por %p312, %p313
      %p315 = scmp.ne.s32.totalorder %s307, %s309
      %p316 = scmp.eq.s32.totalorder %s37, 1
      %p317 = por %p315, %p316
      %p318 = scmp.ne.s32.totalorder %s309, %s310
      %p319 = scmp.eq.s32.totalorder %s37, 0
      %p320 = por %p318, %p319
      %p321 = scmp.ne.s32.totalorder %s309, %s310
      %p322 = scmp.eq.s32.totalorder %s38, 1
      %p323 = por %p321, %p322
      %p325 = scmp.ne.s32.totalorder %s310, %s324
      %p326 = scmp.eq.s32.totalorder %s38, 0
      %p327 = por %p325, %p326
      %s328 = ssub.s32 %s32, %s39
      %p329 = scmp.eq.s32.totalorder %s328, 0
      %s331 = sadd.s32 %s330, 1
      %s332 = scalar_select %p329, %s330, %s331
      %p335 = pneg %p329
      %p336 = scmp.eq.s32.totalorder %s32, 1
      %p337 = por %p335, %p336
      %p338 = scmp.ne.s32.totalorder %s330, %s333
      %p339 = scmp.eq.s32.totalorder %s32, 0
      %p340 = por %p338, %p339
      %p341 = scmp.ne.s32.totalorder %s330, %s333
      %p342 = scmp.eq.s32.totalorder %s37, 1
      %p343 = por %p341, %p342
      %p344 = scmp.ne.s32.totalorder %s333, %s334
      %p345 = scmp.eq.s32.totalorder %s37, 0
      %p346 = por %p344, %p345
      %p347 = scmp.ne.s32.totalorder %s333, %s334
      %p348 = scmp.eq.s32.totalorder %s38, 1
      %p349 = por %p347, %p348
      %p351 = scmp.ne.s32.totalorder %s334, %s350
      %p352 = scmp.eq.s32.totalorder %s38, 0
      %p353 = por %p351, %p352
      %p354 = scmp.le.s32.totalorder 1, %s32
      %p355 = scmp.lt.s32.totalorder %s32, 3
      %p356 = pnand %p354, %p355
      %p357 = pneg %p356
      // Predicated region
      $region9: #{tpu_custom_call.1} parent=5 // pred_check
        _
      $region10: #{tpu_custom_call.1} parent=5 // pred_check_branch
        %359 = sbr.rel (%p356) target = $region12
      $region11: #{tpu_custom_call.1} parent=5 // pred_region
        %s360 = ssub.s32 %s32, 1
        // Predicated region
        $region13: #{tpu_custom_call.1} parent=11 // pred_check
          %p361 = pneg %p131
        $region14: #{tpu_custom_call.1} parent=11 // pred_check_branch
          %363 = sbr.rel (%p361) target = $region16
        $region15: #{tpu_custom_call.1} parent=11 // pred_region
          %365 = vsyncadd [#allocation9], 0
          %s366 = sshll.u32 %s3, 4
          %s367 = int_to_ptr.hbm [resolvable:$true] %s366
          %s368 = sshll.u32 [#allocation8], 4
          %s369 = int_to_ptr.vmem [resolvable:$true] %s368
          %374 = dma.hbm_to_vmem [thread:$0]  %s367, 1024, %s369, [#allocation9], 128, 128, 8
        $region16: #{tpu_custom_call.1} parent=11 // pred_fallthru
          _
        // Predicated region
        $region17: #{tpu_custom_call.1} parent=11 // pred_check
          %p375 = pneg %p152
        $region18: #{tpu_custom_call.1} parent=11 // pred_check_branch
          %377 = sbr.rel (%p375) target = $region20
        $region19: #{tpu_custom_call.1} parent=11 // pred_region
          %379 = vsyncadd [#allocation9], 0
          %s380 = sshll.u32 %s4, 4
          %s381 = int_to_ptr.hbm [resolvable:$true] %s380
          %s382 = sshll.u32 [#allocation10], 4
          %s383 = int_to_ptr.vmem [resolvable:$true] %s382
          %388 = dma.hbm_to_vmem [thread:$0]  %s381, 2048, %s383, [#allocation9], 128, 128, 8
        $region20: #{tpu_custom_call.1} parent=11 // pred_fallthru
          _
        // Predicated region
        $region21: #{tpu_custom_call.1} parent=11 // pred_check
          %p389 = pneg %p173
        $region22: #{tpu_custom_call.1} parent=11 // pred_check_branch
          %391 = sbr.rel (%p389) target = $region24
        $region23: #{tpu_custom_call.1} parent=11 // pred_region
          %393 = vsyncadd [#allocation12], 0
          %s394 = sshll.u32 %s5, 4
          %s395 = int_to_ptr.hbm [resolvable:$true] %s394
          %s396 = sshll.u32 [#allocation11], 4
          %s397 = int_to_ptr.vmem [resolvable:$true] %s396
          %402 = dma.hbm_to_vmem [thread:$0]  %s395, 4096, %s397, [#allocation12], 128, 128, 8
        $region24: #{tpu_custom_call.1} parent=11 // pred_fallthru
          _
        // Predicated region
        $region25: #{tpu_custom_call.1} parent=11 // pred_check
          %p403 = pneg %p194
        $region26: #{tpu_custom_call.1} parent=11 // pred_check_branch
          %405 = sbr.rel (%p403) target = $region28
        $region27: #{tpu_custom_call.1} parent=11 // pred_region
          %407 = vsyncadd [#allocation12], 0
          %s408 = sshll.u32 %s6, 4
          %s409 = int_to_ptr.hbm [resolvable:$true] %s408
          %s410 = sshll.u32 [#allocation13], 4
          %s411 = int_to_ptr.vmem [resolvable:$true] %s410
          %416 = dma.hbm_to_vmem [thread:$0]  %s409, 48, %s411, [#allocation12], 16, 16, 1
        $region28: #{tpu_custom_call.1} parent=11 // pred_fallthru
          _
        // Predicated region
        $region29: #{tpu_custom_call.1} parent=11 // pred_check
          %p417 = pneg %p215
        $region30: #{tpu_custom_call.1} parent=11 // pred_check_branch
          %419 = sbr.rel (%p417) target = $region32
        $region31: #{tpu_custom_call.1} parent=11 // pred_region
          %421 = vsyncadd [#allocation15], 0
          %s422 = sshll.u32 %s7, 4
          %s423 = int_to_ptr.hbm [resolvable:$true] %s422
          %s424 = sshll.u32 [#allocation14], 4
          %s425 = int_to_ptr.vmem [resolvable:$true] %s424
          %430 = dma.hbm_to_vmem [thread:$0]  %s423, 2048, %s425, [#allocation15], 128, 128, 8
        $region32: #{tpu_custom_call.1} parent=11 // pred_fallthru
          _
        // Predicated region
        $region33: #{tpu_custom_call.1} parent=11 // pred_check
          %p431 = pneg %p236
        $region34: #{tpu_custom_call.1} parent=11 // pred_check_branch
          %433 = sbr.rel (%p431) target = $region36
        $region35: #{tpu_custom_call.1} parent=11 // pred_region
          %435 = vsyncadd [#allocation15], 0
          %s436 = sshll.u32 %s8, 4
          %s437 = int_to_ptr.hbm [resolvable:$true] %s436
          %s438 = sshll.u32 [#allocation16], 4
          %s439 = int_to_ptr.vmem [resolvable:$true] %s438
          %444 = dma.hbm_to_vmem [thread:$0]  %s437, 4096, %s439, [#allocation15], 128, 128, 8
        $region36: #{tpu_custom_call.1} parent=11 // pred_fallthru
          _
        // Predicated region
        $region37: #{tpu_custom_call.1} parent=11 // pred_check
          %p445 = pneg %p257
        $region38: #{tpu_custom_call.1} parent=11 // pred_check_branch
          %447 = sbr.rel (%p445) target = $region40
        $region39: #{tpu_custom_call.1} parent=11 // pred_region
          %449 = vsyncadd [#allocation18], 0
          %s450 = sshll.u32 %s9, 4
          %s451 = int_to_ptr.hbm [resolvable:$true] %s450
          %s452 = sshll.u32 [#allocation17], 4
          %s453 = int_to_ptr.vmem [resolvable:$true] %s452
          %458 = dma.hbm_to_vmem [thread:$0]  %s451, 2048, %s453, [#allocation18], 128, 128, 8
        $region40: #{tpu_custom_call.1} parent=11 // pred_fallthru
          _
        // Predicated region
        $region41: #{tpu_custom_call.1} parent=11 // pred_check
          %p459 = pneg %p278
        $region42: #{tpu_custom_call.1} parent=11 // pred_check_branch
          %461 = sbr.rel (%p459) target = $region44
        $region43: #{tpu_custom_call.1} parent=11 // pred_region
          _
        $region44: #{tpu_custom_call.1} parent=11 // pred_fallthru
          _
        // Predicated region
        $region45: #{tpu_custom_call.1} parent=11 // pred_check
          %p462 = pneg %p299
        $region46: #{tpu_custom_call.1} parent=11 // pred_check_branch
          %464 = sbr.rel (%p462) target = $region48
        $region47: #{tpu_custom_call.1} parent=11 // pred_region
          %466 = vsyncadd [#allocation18], 0
          %s467 = sshll.u32 %s11, 4
          %s468 = int_to_ptr.hbm [resolvable:$true] %s467
          %s469 = sshll.u32 [#allocation19], 4
          %s470 = int_to_ptr.vmem [resolvable:$true] %s469
          %475 = dma.hbm_to_vmem [thread:$0]  %s468, 2048, %s470, [#allocation18], 128, 128, 8
        $region48: #{tpu_custom_call.1} parent=11 // pred_fallthru
          _
        // Predicated region
        $region49: #{tpu_custom_call.1} parent=11 // pred_check
          %p476 = pneg %p320
        $region50: #{tpu_custom_call.1} parent=11 // pred_check_branch
          %478 = sbr.rel (%p476) target = $region52
        $region51: #{tpu_custom_call.1} parent=11 // pred_region
          _
        $region52: #{tpu_custom_call.1} parent=11 // pred_fallthru
          _
      $region12: #{tpu_custom_call.1} parent=5 // pred_fallthru
        _
      %p479 = scmp.lt.s32.totalorder %s32, 2
      // Predicated region
      $region53: #{tpu_custom_call.1} parent=5 // pred_check
        %p480 = pneg %p479
      $region54: #{tpu_custom_call.1} parent=5 // pred_check_branch
        %482 = sbr.rel (%p480) target = $region56
      $region55: #{tpu_custom_call.1} parent=5 // pred_region
        // Predicated region
        $region57: #{tpu_custom_call.1} parent=55 // pred_check
          %p483 = pneg %p52
        $region58: #{tpu_custom_call.1} parent=55 // pred_check_branch
          %485 = sbr.rel (%p483) target = $region60
        $region59: #{tpu_custom_call.1} parent=55 // pred_region
          %s486 = sand.u32 %s42, 1
          %s487 = scalar_lea.sflag [#allocation3], %s486
          %s488 = sand.u32 %s42, 1
          %s489 = smul.addr %s488, 256
          %s490 = scalar_lea.vmem [#allocation2], %s489
          %492 = vsyncadd %s487, 0
          %s493 = smul.addr %s32, 32
          %s494 = smul.addr %s493, 8
          %s495 = scalar_lea.hbm %s0, %s494
          %s496 = sshll.u32 %s495, 4
          %s497 = int_to_ptr.hbm [resolvable:$true] %s496
          %s498 = sshll.u32 %s490, 4
          %s499 = int_to_ptr.vmem [resolvable:$true] %s498
          %504 = dma.hbm_to_vmem [thread:$0]  %s497, 4096, %s499, %s487, 128, 128, 8
        $region60: #{tpu_custom_call.1} parent=55 // pred_fallthru
          _
        // Predicated region
        $region61: #{tpu_custom_call.1} parent=55 // pred_check
          %p505 = pneg %p78
        $region62: #{tpu_custom_call.1} parent=55 // pred_check_branch
          %507 = sbr.rel (%p505) target = $region64
        $region63: #{tpu_custom_call.1} parent=55 // pred_region
          %s508 = sand.u32 %s32, 1
          %s509 = scalar_lea.sflag [#allocation6], %s508
          %s510 = sand.u32 %s68, 1
          %s511 = smul.addr %s510, 256
          %s512 = scalar_lea.vmem [#allocation5], %s511
          %s513 = smul.u32 2, %s32
          %515 = vsyncadd %s509, 0
          %s516 = smul.addr %s513, 16
          %s517 = smul.addr %s516, 8
          %s518 = scalar_lea.hbm %s1, %s517
          %s519 = sshll.u32 %s518, 4
          %s520 = int_to_ptr.hbm [resolvable:$true] %s519
          %s521 = sshll.u32 %s512, 4
          %s522 = int_to_ptr.vmem [resolvable:$true] %s521
          %527 = dma.hbm_to_vmem [thread:$0]  %s520, 4096, %s522, %s509, 128, 128, 8
        $region64: #{tpu_custom_call.1} parent=55 // pred_fallthru
          _
        // Predicated region
        $region65: #{tpu_custom_call.1} parent=55 // pred_check
          %p528 = pneg %p104
        $region66: #{tpu_custom_call.1} parent=55 // pred_check_branch
          %530 = sbr.rel (%p528) target = $region68
        $region67: #{tpu_custom_call.1} parent=55 // pred_region
          %s531 = sand.u32 %s32, 1
          %s532 = scalar_lea.sflag [#allocation6], %s531
          %s533 = sand.u32 %s94, 1
          %s534 = smul.addr %s533, 16
          %s535 = scalar_lea.vmem [#allocation7], %s534
          %537 = vsyncadd %s532, 0
          %s538 = smul.addr %s32, 2
          %s539 = smul.addr %s538, 8
          %s540 = scalar_lea.hbm %s2, %s539
          %s541 = sshll.u32 %s540, 4
          %s542 = int_to_ptr.hbm [resolvable:$true] %s541
          %s543 = sshll.u32 %s535, 4
          %s544 = int_to_ptr.vmem [resolvable:$true] %s543
          %549 = dma.hbm_to_vmem [thread:$0]  %s542, 256, %s544, %s532, 128, 128, 8
        $region68: #{tpu_custom_call.1} parent=55 // pred_fallthru
          _
      $region56: #{tpu_custom_call.1} parent=5 // pred_fallthru
        _
      %p550 = scmp.le.s32.totalorder 1, %s32
      %p551 = scmp.lt.s32.totalorder %s32, 3
      %p552 = pnand %p550, %p551
      %p553 = pneg %p552
      // Predicated region
      $region69: #{tpu_custom_call.1} parent=5 // pred_check
        _
      $region70: #{tpu_custom_call.1} parent=5 // pred_check_branch
        %555 = sbr.rel (%p552) target = $region72
      $region71: #{tpu_custom_call.1} parent=5 // pred_region
        %s556 = ssub.s32 %s32, 1
        %s557 = sand.u32 %s45, 1
        %s558 = scalar_lea.sflag [#allocation3], %s557
        %s559 = sand.u32 %s45, 1
        %s560 = smul.addr %s559, 256
        %s561 = scalar_lea.vmem [#allocation2], %s560
        // Predicated region
        $region73: #{tpu_custom_call.1} parent=71 // pred_check
          %p562 = pneg %p58
        $region74: #{tpu_custom_call.1} parent=71 // pred_check_branch
          %564 = sbr.rel (%p562) target = $region76
        $region75: #{tpu_custom_call.1} parent=71 // pred_region
          %566 = dma.done %s558, 4096
        $region76: #{tpu_custom_call.1} parent=71 // pred_fallthru
          _
        %s567 = sand.u32 %s37, 1
        %s568 = scalar_lea.sflag [#allocation6], %s567
        %s569 = sand.u32 %s71, 1
        %s570 = smul.addr %s569, 256
        %s571 = scalar_lea.vmem [#allocation5], %s570
        // Predicated region
        $region77: #{tpu_custom_call.1} parent=71 // pred_check
          %p572 = pneg %p84
        $region78: #{tpu_custom_call.1} parent=71 // pred_check_branch
          %574 = sbr.rel (%p572) target = $region80
        $region79: #{tpu_custom_call.1} parent=71 // pred_region
          %576 = dma.done %s568, 4096
        $region80: #{tpu_custom_call.1} parent=71 // pred_fallthru
          _
        %s577 = sand.u32 %s37, 1
        %s578 = scalar_lea.sflag [#allocation6], %s577
        %s579 = sand.u32 %s97, 1
        %s580 = smul.addr %s579, 16
        %s581 = scalar_lea.vmem [#allocation7], %s580
        // Predicated region
        $region81: #{tpu_custom_call.1} parent=71 // pred_check
          %p582 = pneg %p110
        $region82: #{tpu_custom_call.1} parent=71 // pred_check_branch
          %584 = sbr.rel (%p582) target = $region84
        $region83: #{tpu_custom_call.1} parent=71 // pred_region
          %586 = dma.done %s578, 256
        $region84: #{tpu_custom_call.1} parent=71 // pred_fallthru
          _
        // Predicated region
        $region85: #{tpu_custom_call.1} parent=71 // pred_check
          %p587 = pneg %p131
        $region86: #{tpu_custom_call.1} parent=71 // pred_check_branch
          %589 = sbr.rel (%p587) target = $region88
        $region87: #{tpu_custom_call.1} parent=71 // pred_region
          %591 = dma.done [#allocation9], 1024
        $region88: #{tpu_custom_call.1} parent=71 // pred_fallthru
          _
        // Predicated region
        $region89: #{tpu_custom_call.1} parent=71 // pred_check
          %p592 = pneg %p152
        $region90: #{tpu_custom_call.1} parent=71 // pred_check_branch
          %594 = sbr.rel (%p592) target = $region92
        $region91: #{tpu_custom_call.1} parent=71 // pred_region
          %596 = dma.done [#allocation9], 2048
        $region92: #{tpu_custom_call.1} parent=71 // pred_fallthru
          _
        // Predicated region
        $region93: #{tpu_custom_call.1} parent=71 // pred_check
          %p597 = pneg %p173
        $region94: #{tpu_custom_call.1} parent=71 // pred_check_branch
          %599 = sbr.rel (%p597) target = $region96
        $region95: #{tpu_custom_call.1} parent=71 // pred_region
          %601 = dma.done [#allocation12], 4096
        $region96: #{tpu_custom_call.1} parent=71 // pred_fallthru
          _
        // Predicated region
        $region97: #{tpu_custom_call.1} parent=71 // pred_check
          %p602 = pneg %p194
        $region98: #{tpu_custom_call.1} parent=71 // pred_check_branch
          %604 = sbr.rel (%p602) target = $region100
        $region99: #{tpu_custom_call.1} parent=71 // pred_region
          %606 = dma.done [#allocation12], 48
        $region100: #{tpu_custom_call.1} parent=71 // pred_fallthru
          _
        // Predicated region
        $region101: #{tpu_custom_call.1} parent=71 // pred_check
          %p607 = pneg %p215
        $region102: #{tpu_custom_call.1} parent=71 // pred_check_branch
          %609 = sbr.rel (%p607) target = $region104
        $region103: #{tpu_custom_call.1} parent=71 // pred_region
          %611 = dma.done [#allocation15], 2048
        $region104: #{tpu_custom_call.1} parent=71 // pred_fallthru
          _
        // Predicated region
        $region105: #{tpu_custom_call.1} parent=71 // pred_check
          %p612 = pneg %p236
        $region106: #{tpu_custom_call.1} parent=71 // pred_check_branch
          %614 = sbr.rel (%p612) target = $region108
        $region107: #{tpu_custom_call.1} parent=71 // pred_region
          %616 = dma.done [#allocation15], 4096
        $region108: #{tpu_custom_call.1} parent=71 // pred_fallthru
          _
        // Predicated region
        $region109: #{tpu_custom_call.1} parent=71 // pred_check
          %p617 = pneg %p257
        $region110: #{tpu_custom_call.1} parent=71 // pred_check_branch
          %619 = sbr.rel (%p617) target = $region112
        $region111: #{tpu_custom_call.1} parent=71 // pred_region
          %621 = dma.done [#allocation18], 2048
        $region112: #{tpu_custom_call.1} parent=71 // pred_fallthru
          _
        // Predicated region
        $region113: #{tpu_custom_call.1} parent=71 // pred_check
          %p622 = pneg %p299
        $region114: #{tpu_custom_call.1} parent=71 // pred_check_branch
          %624 = sbr.rel (%p622) target = $region116
        $region115: #{tpu_custom_call.1} parent=71 // pred_region
          %626 = dma.done [#allocation18], 2048
        $region116: #{tpu_custom_call.1} parent=71 // pred_fallthru
          _
        %s627 = sand.u32 %s45, 1
        %s628 = scalar_lea.sflag [#allocation3], %s627
        %s629 = sand.u32 %s45, 1
        %s630 = smul.addr %s629, 256
        %s631 = scalar_lea.vmem [#allocation2], %s630
        %p632 = pneg %p58
        %p633 = pneg %p55
        %s634 = sand.u32 %s37, 1
        %s635 = scalar_lea.sflag [#allocation6], %s634
        %s636 = sand.u32 %s71, 1
        %s637 = smul.addr %s636, 256
        %s638 = scalar_lea.vmem [#allocation5], %s637
        %p639 = pneg %p84
        %p640 = pneg %p81
        %s641 = sand.u32 %s37, 1
        %s642 = scalar_lea.sflag [#allocation6], %s641
        %s643 = sand.u32 %s97, 1
        %s644 = smul.addr %s643, 16
        %s645 = scalar_lea.vmem [#allocation7], %s644
        %p646 = pneg %p110
        %p647 = pneg %p107
        %p648 = pneg %p131
        %p649 = pneg %p128
        %p650 = pneg %p152
        %p651 = pneg %p149
        %p652 = pneg %p173
        %p653 = pneg %p170
        %p654 = pneg %p194
        %p655 = pneg %p191
        %p656 = pneg %p215
        %p657 = pneg %p212
        %p658 = pneg %p236
        %p659 = pneg %p233
        %p660 = pneg %p257
        %p661 = pneg %p254
        %p662 = pneg %p278
        %p663 = pneg %p275
        %p664 = pneg %p299
        %p665 = pneg %p296
        %p666 = pneg %p320
        %p667 = pneg %p317
        %p668 = pneg %p346
        %p669 = pneg %p343
        %s670 = sand.u32 %s333, 1
        %s671 = scalar_lea.sflag [#allocation4], %s670
        %s672 = sand.u32 %s333, 1
        %s673 = smul.addr %s672, 16
        %s674 = scalar_lea.vmem [#allocation20], %s673
        %s675 = smul.u32 2, %s37
        %v676 = vld [vmem:[%s561] sm:$0xff]
        %v677 = vld [vmem:[%s561 + $0x8] sm:$0xff]
        %v678 = vld [vmem:[%s561 + $0x10] sm:$0xff]
        %v679 = vld [vmem:[%s561 + $0x18] sm:$0xff]
        %v680 = vld [vmem:[%s561 + $0x20] sm:$0xff]
        %v681 = vld [vmem:[%s561 + $0x28] sm:$0xff]
        %v682 = vld [vmem:[%s561 + $0x30] sm:$0xff]
        %v683 = vld [vmem:[%s561 + $0x38] sm:$0xff]
        %v684 = vld [vmem:[%s561 + $0x40] sm:$0xff]
        %v685 = vld [vmem:[%s561 + $0x48] sm:$0xff]
        %v686 = vld [vmem:[%s561 + $0x50] sm:$0xff]
        %v687 = vld [vmem:[%s561 + $0x58] sm:$0xff]
        %v688 = vld [vmem:[%s561 + $0x60] sm:$0xff]
        %v689 = vld [vmem:[%s561 + $0x68] sm:$0xff]
        %v690 = vld [vmem:[%s561 + $0x70] sm:$0xff]
        %v691 = vld [vmem:[%s561 + $0x78] sm:$0xff]
        %v692 = vld [vmem:[%s561 + $0x80] sm:$0xff]
        %v693 = vld [vmem:[%s561 + $0x88] sm:$0xff]
        %v694 = vld [vmem:[%s561 + $0x90] sm:$0xff]
        %v695 = vld [vmem:[%s561 + $0x98] sm:$0xff]
        %v696 = vld [vmem:[%s561 + $0xa0] sm:$0xff]
        %v697 = vld [vmem:[%s561 + $0xa8] sm:$0xff]
        %v698 = vld [vmem:[%s561 + $0xb0] sm:$0xff]
        %v699 = vld [vmem:[%s561 + $0xb8] sm:$0xff]
        %v700 = vld [vmem:[%s561 + $0xc0] sm:$0xff]
        %v701 = vld [vmem:[%s561 + $0xc8] sm:$0xff]
        %v702 = vld [vmem:[%s561 + $0xd0] sm:$0xff]
        %v703 = vld [vmem:[%s561 + $0xd8] sm:$0xff]
        %v704 = vld [vmem:[%s561 + $0xe0] sm:$0xff]
        %v705 = vld [vmem:[%s561 + $0xe8] sm:$0xff]
        %v706 = vld [vmem:[%s561 + $0xf0] sm:$0xff]
        %v707 = vld [vmem:[%s561 + $0xf8] sm:$0xff]
        %v708 = vld [vmem:[#allocation10] sm:$0xff]
        %v709 = vld [vmem:[#allocation10 + $0x8] sm:$0xff]
        %v710 = vld [vmem:[#allocation10 + $0x10] sm:$0xff]
        %v711 = vld [vmem:[#allocation10 + $0x18] sm:$0xff]
        %v712 = vld [vmem:[#allocation10 + $0x20] sm:$0xff]
        %v713 = vld [vmem:[#allocation10 + $0x28] sm:$0xff]
        %v714 = vld [vmem:[#allocation10 + $0x30] sm:$0xff]
        %v715 = vld [vmem:[#allocation10 + $0x38] sm:$0xff]
        %v716 = vld [vmem:[#allocation10 + $0x40] sm:$0xff]
        %v717 = vld [vmem:[#allocation10 + $0x48] sm:$0xff]
        %v718 = vld [vmem:[#allocation10 + $0x50] sm:$0xff]
        %v719 = vld [vmem:[#allocation10 + $0x58] sm:$0xff]
        %v720 = vld [vmem:[#allocation10 + $0x60] sm:$0xff]
        %v721 = vld [vmem:[#allocation10 + $0x68] sm:$0xff]
        %v722 = vld [vmem:[#allocation10 + $0x70] sm:$0xff]
        %v723 = vld [vmem:[#allocation10 + $0x78] sm:$0xff]
        %v724 = vld [vmem:[#allocation13] sm:$0x1]
        %v726 = vperm.slane %v724, 0
        %728 = vmatpush.msra.mxu0 %v723
        %729 = vmatpush.msra.mxu0 %v722
        %730 = vmatpush.msra.mxu0 %v721
        %731 = vmatpush.msra.mxu0 %v720
        %732 = vmatpush.msra.mxu0 %v719
        %733 = vmatpush.msra.mxu0 %v718
        %734 = vmatpush.msra.mxu0 %v717
        %735 = vmatpush.msra.mxu0 %v716
        %736 = vmatpush.msra.mxu0 %v715
        %737 = vmatpush.msra.mxu0 %v714
        %738 = vmatpush.msra.mxu0 %v713
        %739 = vmatpush.msra.mxu0 %v712
        %740 = vmatpush.msra.mxu0 %v711
        %741 = vmatpush.msra.mxu0 %v710
        %742 = vmatpush.msra.mxu0 %v709
        %743 = vmatpush.msra.mxu0 %v708
        %744 = vmatmul.f32.gmra.mxu0 %v676
        %v745 = vpop.f32.mrf.mxu0
        %v746 = vadd.f32 %v726, %v745
        %747 = vmatmul.f32.gmra.mxu0 %v677
        %v748 = vpop.f32.mrf.mxu0
        %v749 = vadd.f32 %v726, %v748
        %750 = vmatmul.f32.gmra.mxu0 %v678
        %v751 = vpop.f32.mrf.mxu0
        %v752 = vadd.f32 %v726, %v751
        %753 = vmatmul.f32.gmra.mxu0 %v679
        %v754 = vpop.f32.mrf.mxu0
        %v755 = vadd.f32 %v726, %v754
        %756 = vmatmul.f32.gmra.mxu0 %v680
        %v757 = vpop.f32.mrf.mxu0
        %v758 = vadd.f32 %v726, %v757
        %759 = vmatmul.f32.gmra.mxu0 %v681
        %v760 = vpop.f32.mrf.mxu0
        %v761 = vadd.f32 %v726, %v760
        %762 = vmatmul.f32.gmra.mxu0 %v682
        %v763 = vpop.f32.mrf.mxu0
        %v764 = vadd.f32 %v726, %v763
        %765 = vmatmul.f32.gmra.mxu0 %v683
        %v766 = vpop.f32.mrf.mxu0
        %v767 = vadd.f32 %v726, %v766
        %768 = vmatmul.f32.gmra.mxu0 %v684
        %v769 = vpop.f32.mrf.mxu0
        %v770 = vadd.f32 %v726, %v769
        %771 = vmatmul.f32.gmra.mxu0 %v685
        %v772 = vpop.f32.mrf.mxu0
        %v773 = vadd.f32 %v726, %v772
        %774 = vmatmul.f32.gmra.mxu0 %v686
        %v775 = vpop.f32.mrf.mxu0
        %v776 = vadd.f32 %v726, %v775
        %777 = vmatmul.f32.gmra.mxu0 %v687
        %v778 = vpop.f32.mrf.mxu0
        %v779 = vadd.f32 %v726, %v778
        %780 = vmatmul.f32.gmra.mxu0 %v688
        %v781 = vpop.f32.mrf.mxu0
        %v782 = vadd.f32 %v726, %v781
        %783 = vmatmul.f32.gmra.mxu0 %v689
        %v784 = vpop.f32.mrf.mxu0
        %v785 = vadd.f32 %v726, %v784
        %786 = vmatmul.f32.gmra.mxu0 %v690
        %v787 = vpop.f32.mrf.mxu0
        %v788 = vadd.f32 %v726, %v787
        %789 = vmatmul.f32.gmra.mxu0 %v691
        %v790 = vpop.f32.mrf.mxu0
        %v791 = vadd.f32 %v726, %v790
        %792 = vmatmul.f32.gmra.mxu0 %v692
        %v793 = vpop.f32.mrf.mxu0
        %v794 = vadd.f32 %v726, %v793
        %795 = vmatmul.f32.gmra.mxu0 %v693
        %v796 = vpop.f32.mrf.mxu0
        %v797 = vadd.f32 %v726, %v796
        %798 = vmatmul.f32.gmra.mxu0 %v694
        %v799 = vpop.f32.mrf.mxu0
        %v800 = vadd.f32 %v726, %v799
        %801 = vmatmul.f32.gmra.mxu0 %v695
        %v802 = vpop.f32.mrf.mxu0
        %v803 = vadd.f32 %v726, %v802
        %804 = vmatmul.f32.gmra.mxu0 %v696
        %v805 = vpop.f32.mrf.mxu0
        %v806 = vadd.f32 %v726, %v805
        %807 = vmatmul.f32.gmra.mxu0 %v697
        %v808 = vpop.f32.mrf.mxu0
        %v809 = vadd.f32 %v726, %v808
        %810 = vmatmul.f32.gmra.mxu0 %v698
        %v811 = vpop.f32.mrf.mxu0
        %v812 = vadd.f32 %v726, %v811
        %813 = vmatmul.f32.gmra.mxu0 %v699
        %v814 = vpop.f32.mrf.mxu0
        %v815 = vadd.f32 %v726, %v814
        %816 = vmatmul.f32.gmra.mxu0 %v700
        %v817 = vpop.f32.mrf.mxu0
        %v818 = vadd.f32 %v726, %v817
        %819 = vmatmul.f32.gmra.mxu0 %v701
        %v820 = vpop.f32.mrf.mxu0
        %v821 = vadd.f32 %v726, %v820
        %822 = vmatmul.f32.gmra.mxu0 %v702
        %v823 = vpop.f32.mrf.mxu0
        %v824 = vadd.f32 %v726, %v823
        %825 = vmatmul.f32.gmra.mxu0 %v703
        %v826 = vpop.f32.mrf.mxu0
        %v827 = vadd.f32 %v726, %v826
        %828 = vmatmul.f32.gmra.mxu0 %v704
        %v829 = vpop.f32.mrf.mxu0
        %v830 = vadd.f32 %v726, %v829
        %831 = vmatmul.f32.gmra.mxu0 %v705
        %v832 = vpop.f32.mrf.mxu0
        %v833 = vadd.f32 %v726, %v832
        %834 = vmatmul.f32.gmra.mxu0 %v706
        %v835 = vpop.f32.mrf.mxu0
        %v836 = vadd.f32 %v726, %v835
        %837 = vmatmul.f32.gmra.mxu0 %v707
        %v838 = vpop.f32.mrf.mxu0
        %v839 = vadd.f32 %v726, %v838
        %840 = vdwg.mxu0
        %v841 = vld [vmem:[%s571] sm:$0xff]
        %v842 = vld [vmem:[%s571 + $0x8] sm:$0xff]
        %v843 = vld [vmem:[%s571 + $0x10] sm:$0xff]
        %v844 = vld [vmem:[%s571 + $0x18] sm:$0xff]
        %v845 = vld [vmem:[%s571 + $0x20] sm:$0xff]
        %v846 = vld [vmem:[%s571 + $0x28] sm:$0xff]
        %v847 = vld [vmem:[%s571 + $0x30] sm:$0xff]
        %v848 = vld [vmem:[%s571 + $0x38] sm:$0xff]
        %v849 = vld [vmem:[%s571 + $0x40] sm:$0xff]
        %v850 = vld [vmem:[%s571 + $0x48] sm:$0xff]
        %v851 = vld [vmem:[%s571 + $0x50] sm:$0xff]
        %v852 = vld [vmem:[%s571 + $0x58] sm:$0xff]
        %v853 = vld [vmem:[%s571 + $0x60] sm:$0xff]
        %v854 = vld [vmem:[%s571 + $0x68] sm:$0xff]
        %v855 = vld [vmem:[%s571 + $0x70] sm:$0xff]
        %v856 = vld [vmem:[%s571 + $0x78] sm:$0xff]
        %v857 = vld [vmem:[%s571 + $0x80] sm:$0xff]
        %v858 = vld [vmem:[%s571 + $0x88] sm:$0xff]
        %v859 = vld [vmem:[%s571 + $0x90] sm:$0xff]
        %v860 = vld [vmem:[%s571 + $0x98] sm:$0xff]
        %v861 = vld [vmem:[%s571 + $0xa0] sm:$0xff]
        %v862 = vld [vmem:[%s571 + $0xa8] sm:$0xff]
        %v863 = vld [vmem:[%s571 + $0xb0] sm:$0xff]
        %v864 = vld [vmem:[%s571 + $0xb8] sm:$0xff]
        %v865 = vld [vmem:[%s571 + $0xc0] sm:$0xff]
        %v866 = vld [vmem:[%s571 + $0xc8] sm:$0xff]
        %v867 = vld [vmem:[%s571 + $0xd0] sm:$0xff]
        %v868 = vld [vmem:[%s571 + $0xd8] sm:$0xff]
        %v869 = vld [vmem:[%s571 + $0xe0] sm:$0xff]
        %v870 = vld [vmem:[%s571 + $0xe8] sm:$0xff]
        %v871 = vld [vmem:[%s571 + $0xf0] sm:$0xff]
        %v872 = vld [vmem:[%s571 + $0xf8] sm:$0xff]
        %v873 = vld [vmem:[#allocation11] sm:$0xff]
        %v874 = vld [vmem:[#allocation11 + $0x8] sm:$0xff]
        %v875 = vld [vmem:[#allocation11 + $0x10] sm:$0xff]
        %v876 = vld [vmem:[#allocation11 + $0x18] sm:$0xff]
        %v877 = vld [vmem:[#allocation11 + $0x20] sm:$0xff]
        %v878 = vld [vmem:[#allocation11 + $0x28] sm:$0xff]
        %v879 = vld [vmem:[#allocation11 + $0x30] sm:$0xff]
        %v880 = vld [vmem:[#allocation11 + $0x38] sm:$0xff]
        %v881 = vld [vmem:[#allocation11 + $0x40] sm:$0xff]
        %v882 = vld [vmem:[#allocation11 + $0x48] sm:$0xff]
        %v883 = vld [vmem:[#allocation11 + $0x50] sm:$0xff]
        %v884 = vld [vmem:[#allocation11 + $0x58] sm:$0xff]
        %v885 = vld [vmem:[#allocation11 + $0x60] sm:$0xff]
        %v886 = vld [vmem:[#allocation11 + $0x68] sm:$0xff]
        %v887 = vld [vmem:[#allocation11 + $0x70] sm:$0xff]
        %v888 = vld [vmem:[#allocation11 + $0x78] sm:$0xff]
        %s889 = scalar_lea.vmem [#allocation13], 1
        %v890 = vld [vmem:[%s889] sm:$0x1]
        %v892 = vperm.slane %v890, 0
        %894 = vmatpush.msra.mxu0 %v888
        %895 = vmatpush.msra.mxu0 %v887
        %896 = vmatpush.msra.mxu0 %v886
        %897 = vmatpush.msra.mxu0 %v885
        %898 = vmatpush.msra.mxu0 %v884
        %899 = vmatpush.msra.mxu0 %v883
        %900 = vmatpush.msra.mxu0 %v882
        %901 = vmatpush.msra.mxu0 %v881
        %902 = vmatpush.msra.mxu0 %v880
        %903 = vmatpush.msra.mxu0 %v879
        %904 = vmatpush.msra.mxu0 %v878
        %905 = vmatpush.msra.mxu0 %v877
        %906 = vmatpush.msra.mxu0 %v876
        %907 = vmatpush.msra.mxu0 %v875
        %908 = vmatpush.msra.mxu0 %v874
        %909 = vmatpush.msra.mxu0 %v873
        %910 = vmatmul.f32.gmra.mxu0 %v746
        %v911 = vpop.f32.mrf.mxu0
        %v912 = vadd.f32 %v892, %v911
        %913 = vmatmul.f32.gmra.mxu0 %v749
        %v914 = vpop.f32.mrf.mxu0
        %v915 = vadd.f32 %v892, %v914
        %916 = vmatmul.f32.gmra.mxu0 %v752
        %v917 = vpop.f32.mrf.mxu0
        %v918 = vadd.f32 %v892, %v917
        %919 = vmatmul.f32.gmra.mxu0 %v755
        %v920 = vpop.f32.mrf.mxu0
        %v921 = vadd.f32 %v892, %v920
        %922 = vmatmul.f32.gmra.mxu0 %v758
        %v923 = vpop.f32.mrf.mxu0
        %v924 = vadd.f32 %v892, %v923
        %925 = vmatmul.f32.gmra.mxu0 %v761
        %v926 = vpop.f32.mrf.mxu0
        %v927 = vadd.f32 %v892, %v926
        %928 = vmatmul.f32.gmra.mxu0 %v764
        %v929 = vpop.f32.mrf.mxu0
        %v930 = vadd.f32 %v892, %v929
        %931 = vmatmul.f32.gmra.mxu0 %v767
        %v932 = vpop.f32.mrf.mxu0
        %v933 = vadd.f32 %v892, %v932
        %934 = vmatmul.f32.gmra.mxu0 %v770
        %v935 = vpop.f32.mrf.mxu0
        %v936 = vadd.f32 %v892, %v935
        %937 = vmatmul.f32.gmra.mxu0 %v773
        %v938 = vpop.f32.mrf.mxu0
        %v939 = vadd.f32 %v892, %v938
        %940 = vmatmul.f32.gmra.mxu0 %v776
        %v941 = vpop.f32.mrf.mxu0
        %v942 = vadd.f32 %v892, %v941
        %943 = vmatmul.f32.gmra.mxu0 %v779
        %v944 = vpop.f32.mrf.mxu0
        %v945 = vadd.f32 %v892, %v944
        %946 = vmatmul.f32.gmra.mxu0 %v782
        %v947 = vpop.f32.mrf.mxu0
        %v948 = vadd.f32 %v892, %v947
        %949 = vmatmul.f32.gmra.mxu0 %v785
        %v950 = vpop.f32.mrf.mxu0
        %v951 = vadd.f32 %v892, %v950
        %952 = vmatmul.f32.gmra.mxu0 %v788
        %v953 = vpop.f32.mrf.mxu0
        %v954 = vadd.f32 %v892, %v953
        %955 = vmatmul.f32.gmra.mxu0 %v791
        %v956 = vpop.f32.mrf.mxu0
        %v957 = vadd.f32 %v892, %v956
        %958 = vmatmul.f32.gmra.mxu0 %v794
        %v959 = vpop.f32.mrf.mxu0
        %v960 = vadd.f32 %v892, %v959
        %961 = vmatmul.f32.gmra.mxu0 %v797
        %v962 = vpop.f32.mrf.mxu0
        %v963 = vadd.f32 %v892, %v962
        %964 = vmatmul.f32.gmra.mxu0 %v800
        %v965 = vpop.f32.mrf.mxu0
        %v966 = vadd.f32 %v892, %v965
        %967 = vmatmul.f32.gmra.mxu0 %v803
        %v968 = vpop.f32.mrf.mxu0
        %v969 = vadd.f32 %v892, %v968
        %970 = vmatmul.f32.gmra.mxu0 %v806
        %v971 = vpop.f32.mrf.mxu0
        %v972 = vadd.f32 %v892, %v971
        %973 = vmatmul.f32.gmra.mxu0 %v809
        %v974 = vpop.f32.mrf.mxu0
        %v975 = vadd.f32 %v892, %v974
        %976 = vmatmul.f32.gmra.mxu0 %v812
        %v977 = vpop.f32.mrf.mxu0
        %v978 = vadd.f32 %v892, %v977
        %979 = vmatmul.f32.gmra.mxu0 %v815
        %v980 = vpop.f32.mrf.mxu0
        %v981 = vadd.f32 %v892, %v980
        %982 = vmatmul.f32.gmra.mxu0 %v818
        %v983 = vpop.f32.mrf.mxu0
        %v984 = vadd.f32 %v892, %v983
        %985 = vmatmul.f32.gmra.mxu0 %v821
        %v986 = vpop.f32.mrf.mxu0
        %v987 = vadd.f32 %v892, %v986
        %988 = vmatmul.f32.gmra.mxu0 %v824
        %v989 = vpop.f32.mrf.mxu0
        %v990 = vadd.f32 %v892, %v989
        %991 = vmatmul.f32.gmra.mxu0 %v827
        %v992 = vpop.f32.mrf.mxu0
        %v993 = vadd.f32 %v892, %v992
        %994 = vmatmul.f32.gmra.mxu0 %v830
        %v995 = vpop.f32.mrf.mxu0
        %v996 = vadd.f32 %v892, %v995
        %997 = vmatmul.f32.gmra.mxu0 %v833
        %v998 = vpop.f32.mrf.mxu0
        %v999 = vadd.f32 %v892, %v998
        %1000 = vmatmul.f32.gmra.mxu0 %v836
        %v1001 = vpop.f32.mrf.mxu0
        %v1002 = vadd.f32 %v892, %v1001
        %1003 = vmatmul.f32.gmra.mxu0 %v839
        %v1004 = vpop.f32.mrf.mxu0
        %v1005 = vadd.f32 %v892, %v1004
        %1006 = vdwg.mxu0
        %1007 = vmatpush.msra.mxu0 %v957
        %1008 = vmatpush.msra.mxu0 %v954
        %1009 = vmatpush.msra.mxu0 %v951
        %1010 = vmatpush.msra.mxu0 %v948
        %1011 = vmatpush.msra.mxu0 %v945
        %1012 = vmatpush.msra.mxu0 %v942
        %1013 = vmatpush.msra.mxu0 %v939
        %1014 = vmatpush.msra.mxu0 %v936
        %1015 = vmatpush.msra.mxu0 %v933
        %1016 = vmatpush.msra.mxu0 %v930
        %1017 = vmatpush.msra.mxu0 %v927
        %1018 = vmatpush.msra.mxu0 %v924
        %1019 = vmatpush.msra.mxu0 %v921
        %1020 = vmatpush.msra.mxu0 %v918
        %1021 = vmatpush.msra.mxu0 %v915
        %1022 = vmatpush.msra.mxu0 %v912
        %1023 = vmatmul.f32.gmra.mxu0 %v841
        %v1024 = vpop.f32.mrf.mxu0
        %v1025 = vadd.f32 0.0, %v1024
        %1026 = vmatmul.f32.gmra.mxu0 %v842
        %v1027 = vpop.f32.mrf.mxu0
        %v1028 = vadd.f32 0.0, %v1027
        %1029 = vmatmul.f32.gmra.mxu0 %v843
        %v1030 = vpop.f32.mrf.mxu0
        %v1031 = vadd.f32 0.0, %v1030
        %1032 = vmatmul.f32.gmra.mxu0 %v844
        %v1033 = vpop.f32.mrf.mxu0
        %v1034 = vadd.f32 0.0, %v1033
        %1035 = vmatmul.f32.gmra.mxu0 %v845
        %v1036 = vpop.f32.mrf.mxu0
        %v1037 = vadd.f32 0.0, %v1036
        %1038 = vmatmul.f32.gmra.mxu0 %v846
        %v1039 = vpop.f32.mrf.mxu0
        %v1040 = vadd.f32 0.0, %v1039
        %1041 = vmatmul.f32.gmra.mxu0 %v847
        %v1042 = vpop.f32.mrf.mxu0
        %v1043 = vadd.f32 0.0, %v1042
        %1044 = vmatmul.f32.gmra.mxu0 %v848
        %v1045 = vpop.f32.mrf.mxu0
        %v1046 = vadd.f32 0.0, %v1045
        %1047 = vmatmul.f32.gmra.mxu0 %v849
        %v1048 = vpop.f32.mrf.mxu0
        %v1049 = vadd.f32 0.0, %v1048
        %1050 = vmatmul.f32.gmra.mxu0 %v850
        %v1051 = vpop.f32.mrf.mxu0
        %v1052 = vadd.f32 0.0, %v1051
        %1053 = vmatmul.f32.gmra.mxu0 %v851
        %v1054 = vpop.f32.mrf.mxu0
        %v1055 = vadd.f32 0.0, %v1054
        %1056 = vmatmul.f32.gmra.mxu0 %v852
        %v1057 = vpop.f32.mrf.mxu0
        %v1058 = vadd.f32 0.0, %v1057
        %1059 = vmatmul.f32.gmra.mxu0 %v853
        %v1060 = vpop.f32.mrf.mxu0
        %v1061 = vadd.f32 0.0, %v1060
        %1062 = vmatmul.f32.gmra.mxu0 %v854
        %v1063 = vpop.f32.mrf.mxu0
        %v1064 = vadd.f32 0.0, %v1063
        %1065 = vmatmul.f32.gmra.mxu0 %v855
        %v1066 = vpop.f32.mrf.mxu0
        %v1067 = vadd.f32 0.0, %v1066
        %1068 = vmatmul.f32.gmra.mxu0 %v856
        %v1069 = vpop.f32.mrf.mxu0
        %v1070 = vadd.f32 0.0, %v1069
        %1071 = vdwg.mxu0
        %1072 = vmatpush.msra.mxu0 %v1005
        %1073 = vmatpush.msra.mxu0 %v1002
        %1074 = vmatpush.msra.mxu0 %v999
        %1075 = vmatpush.msra.mxu0 %v996
        %1076 = vmatpush.msra.mxu0 %v993
        %1077 = vmatpush.msra.mxu0 %v990
        %1078 = vmatpush.msra.mxu0 %v987
        %1079 = vmatpush.msra.mxu0 %v984
        %1080 = vmatpush.msra.mxu0 %v981
        %1081 = vmatpush.msra.mxu0 %v978
        %1082 = vmatpush.msra.mxu0 %v975
        %1083 = vmatpush.msra.mxu0 %v972
        %1084 = vmatpush.msra.mxu0 %v969
        %1085 = vmatpush.msra.mxu0 %v966
        %1086 = vmatpush.msra.mxu0 %v963
        %1087 = vmatpush.msra.mxu0 %v960
        %1088 = vmatmul.f32.gmra.mxu0 %v857
        %v1089 = vpop.f32.mrf.mxu0
        %v1090 = vadd.f32 0.0, %v1089
        %1091 = vmatmul.f32.gmra.mxu0 %v858
        %v1092 = vpop.f32.mrf.mxu0
        %v1093 = vadd.f32 0.0, %v1092
        %1094 = vmatmul.f32.gmra.mxu0 %v859
        %v1095 = vpop.f32.mrf.mxu0
        %v1096 = vadd.f32 0.0, %v1095
        %1097 = vmatmul.f32.gmra.mxu0 %v860
        %v1098 = vpop.f32.mrf.mxu0
        %v1099 = vadd.f32 0.0, %v1098
        %1100 = vmatmul.f32.gmra.mxu0 %v861
        %v1101 = vpop.f32.mrf.mxu0
        %v1102 = vadd.f32 0.0, %v1101
        %1103 = vmatmul.f32.gmra.mxu0 %v862
        %v1104 = vpop.f32.mrf.mxu0
        %v1105 = vadd.f32 0.0, %v1104
        %1106 = vmatmul.f32.gmra.mxu0 %v863
        %v1107 = vpop.f32.mrf.mxu0
        %v1108 = vadd.f32 0.0, %v1107
        %1109 = vmatmul.f32.gmra.mxu0 %v864
        %v1110 = vpop.f32.mrf.mxu0
        %v1111 = vadd.f32 0.0, %v1110
        %1112 = vmatmul.f32.gmra.mxu0 %v865
        %v1113 = vpop.f32.mrf.mxu0
        %v1114 = vadd.f32 0.0, %v1113
        %1115 = vmatmul.f32.gmra.mxu0 %v866
        %v1116 = vpop.f32.mrf.mxu0
        %v1117 = vadd.f32 0.0, %v1116
        %1118 = vmatmul.f32.gmra.mxu0 %v867
        %v1119 = vpop.f32.mrf.mxu0
        %v1120 = vadd.f32 0.0, %v1119
        %1121 = vmatmul.f32.gmra.mxu0 %v868
        %v1122 = vpop.f32.mrf.mxu0
        %v1123 = vadd.f32 0.0, %v1122
        %1124 = vmatmul.f32.gmra.mxu0 %v869
        %v1125 = vpop.f32.mrf.mxu0
        %v1126 = vadd.f32 0.0, %v1125
        %1127 = vmatmul.f32.gmra.mxu0 %v870
        %v1128 = vpop.f32.mrf.mxu0
        %v1129 = vadd.f32 0.0, %v1128
        %1130 = vmatmul.f32.gmra.mxu0 %v871
        %v1131 = vpop.f32.mrf.mxu0
        %v1132 = vadd.f32 0.0, %v1131
        %1133 = vmatmul.f32.gmra.mxu0 %v872
        %v1134 = vpop.f32.mrf.mxu0
        %v1135 = vadd.f32 0.0, %v1134
        %1136 = vdwg.mxu0
        %v1137 = vld [vmem:[#allocation8] sm:$0xff]
        %v1138 = vld [vmem:[#allocation8 + $0x8] sm:$0xff]
        %v1139 = vmul.f32 %v1025, %v1137
        %v1140 = vmul.f32 %v1028, %v1138
        %v1141 = vmul.f32 %v1031, %v1137
        %v1142 = vmul.f32 %v1034, %v1138
        %v1143 = vmul.f32 %v1037, %v1137
        %v1144 = vmul.f32 %v1040, %v1138
        %v1145 = vmul.f32 %v1043, %v1137
        %v1146 = vmul.f32 %v1046, %v1138
        %v1147 = vmul.f32 %v1049, %v1137
        %v1148 = vmul.f32 %v1052, %v1138
        %v1149 = vmul.f32 %v1055, %v1137
        %v1150 = vmul.f32 %v1058, %v1138
        %v1151 = vmul.f32 %v1061, %v1137
        %v1152 = vmul.f32 %v1064, %v1138
        %v1153 = vmul.f32 %v1067, %v1137
        %v1154 = vmul.f32 %v1070, %v1138
        %v1155 = vmul.f32 %v1090, %v1137
        %v1156 = vmul.f32 %v1093, %v1138
        %v1157 = vmul.f32 %v1096, %v1137
        %v1158 = vmul.f32 %v1099, %v1138
        %v1159 = vmul.f32 %v1102, %v1137
        %v1160 = vmul.f32 %v1105, %v1138
        %v1161 = vmul.f32 %v1108, %v1137
        %v1162 = vmul.f32 %v1111, %v1138
        %v1163 = vmul.f32 %v1114, %v1137
        %v1164 = vmul.f32 %v1117, %v1138
        %v1165 = vmul.f32 %v1120, %v1137
        %v1166 = vmul.f32 %v1123, %v1138
        %v1167 = vmul.f32 %v1126, %v1137
        %v1168 = vmul.f32 %v1129, %v1138
        %v1169 = vmul.f32 %v1132, %v1137
        %v1170 = vmul.f32 %v1135, %v1138
        %s1171 = scalar_lea.vmem [#allocation8], 32
        %v1172 = vld [vmem:[%s1171] sm:$0xff]
        %v1173 = vld [vmem:[%s1171 + $0x8] sm:$0xff]
        %v1174 = vadd.f32 %v1139, %v1172
        %v1175 = vadd.f32 %v1140, %v1173
        %v1176 = vadd.f32 %v1141, %v1172
        %v1177 = vadd.f32 %v1142, %v1173
        %v1178 = vadd.f32 %v1143, %v1172
        %v1179 = vadd.f32 %v1144, %v1173
        %v1180 = vadd.f32 %v1145, %v1172
        %v1181 = vadd.f32 %v1146, %v1173
        %v1182 = vadd.f32 %v1147, %v1172
        %v1183 = vadd.f32 %v1148, %v1173
        %v1184 = vadd.f32 %v1149, %v1172
        %v1185 = vadd.f32 %v1150, %v1173
        %v1186 = vadd.f32 %v1151, %v1172
        %v1187 = vadd.f32 %v1152, %v1173
        %v1188 = vadd.f32 %v1153, %v1172
        %v1189 = vadd.f32 %v1154, %v1173
        %v1190 = vadd.f32 %v1155, %v1172
        %v1191 = vadd.f32 %v1156, %v1173
        %v1192 = vadd.f32 %v1157, %v1172
        %v1193 = vadd.f32 %v1158, %v1173
        %v1194 = vadd.f32 %v1159, %v1172
        %v1195 = vadd.f32 %v1160, %v1173
        %v1196 = vadd.f32 %v1161, %v1172
        %v1197 = vadd.f32 %v1162, %v1173
        %v1198 = vadd.f32 %v1163, %v1172
        %v1199 = vadd.f32 %v1164, %v1173
        %v1200 = vadd.f32 %v1165, %v1172
        %v1201 = vadd.f32 %v1166, %v1173
        %v1202 = vadd.f32 %v1167, %v1172
        %v1203 = vadd.f32 %v1168, %v1173
        %v1204 = vadd.f32 %v1169, %v1172
        %v1205 = vadd.f32 %v1170, %v1173
        %v1206 = vmax.f32 %v1174, 0.0
        %v1207 = vmax.f32 %v1175, 0.0
        %v1208 = vmax.f32 %v1176, 0.0
        %v1209 = vmax.f32 %v1177, 0.0
        %v1210 = vmax.f32 %v1178, 0.0
        %v1211 = vmax.f32 %v1179, 0.0
        %v1212 = vmax.f32 %v1180, 0.0
        %v1213 = vmax.f32 %v1181, 0.0
        %v1214 = vmax.f32 %v1182, 0.0
        %v1215 = vmax.f32 %v1183, 0.0
        %v1216 = vmax.f32 %v1184, 0.0
        %v1217 = vmax.f32 %v1185, 0.0
        %v1218 = vmax.f32 %v1186, 0.0
        %v1219 = vmax.f32 %v1187, 0.0
        %v1220 = vmax.f32 %v1188, 0.0
        %v1221 = vmax.f32 %v1189, 0.0
        %v1222 = vmax.f32 %v1190, 0.0
        %v1223 = vmax.f32 %v1191, 0.0
        %v1224 = vmax.f32 %v1192, 0.0
        %v1225 = vmax.f32 %v1193, 0.0
        %v1226 = vmax.f32 %v1194, 0.0
        %v1227 = vmax.f32 %v1195, 0.0
        %v1228 = vmax.f32 %v1196, 0.0
        %v1229 = vmax.f32 %v1197, 0.0
        %v1230 = vmax.f32 %v1198, 0.0
        %v1231 = vmax.f32 %v1199, 0.0
        %v1232 = vmax.f32 %v1200, 0.0
        %v1233 = vmax.f32 %v1201, 0.0
        %v1234 = vmax.f32 %v1202, 0.0
        %v1235 = vmax.f32 %v1203, 0.0
        %v1236 = vmax.f32 %v1204, 0.0
        %v1237 = vmax.f32 %v1205, 0.0
        %s1238 = scalar_lea.vmem [#allocation11], 128
        %v1239 = vld [vmem:[%s1238] sm:$0xff]
        %v1240 = vld [vmem:[%s1238 + $0x8] sm:$0xff]
        %v1241 = vld [vmem:[%s1238 + $0x10] sm:$0xff]
        %v1242 = vld [vmem:[%s1238 + $0x18] sm:$0xff]
        %v1243 = vld [vmem:[%s1238 + $0x20] sm:$0xff]
        %v1244 = vld [vmem:[%s1238 + $0x28] sm:$0xff]
        %v1245 = vld [vmem:[%s1238 + $0x30] sm:$0xff]
        %v1246 = vld [vmem:[%s1238 + $0x38] sm:$0xff]
        %v1247 = vld [vmem:[%s1238 + $0x40] sm:$0xff]
        %v1248 = vld [vmem:[%s1238 + $0x48] sm:$0xff]
        %v1249 = vld [vmem:[%s1238 + $0x50] sm:$0xff]
        %v1250 = vld [vmem:[%s1238 + $0x58] sm:$0xff]
        %v1251 = vld [vmem:[%s1238 + $0x60] sm:$0xff]
        %v1252 = vld [vmem:[%s1238 + $0x68] sm:$0xff]
        %v1253 = vld [vmem:[%s1238 + $0x70] sm:$0xff]
        %v1254 = vld [vmem:[%s1238 + $0x78] sm:$0xff]
        %s1255 = scalar_lea.vmem [#allocation13], 2
        %v1256 = vld [vmem:[%s1255] sm:$0x1]
        %v1258 = vperm.slane %v1256, 0
        %1260 = vmatpush.msra.mxu0 %v1254
        %1261 = vmatpush.msra.mxu0 %v1253
        %1262 = vmatpush.msra.mxu0 %v1252
        %1263 = vmatpush.msra.mxu0 %v1251
        %1264 = vmatpush.msra.mxu0 %v1250
        %1265 = vmatpush.msra.mxu0 %v1249
        %1266 = vmatpush.msra.mxu0 %v1248
        %1267 = vmatpush.msra.mxu0 %v1247
        %1268 = vmatpush.msra.mxu0 %v1246
        %1269 = vmatpush.msra.mxu0 %v1245
        %1270 = vmatpush.msra.mxu0 %v1244
        %1271 = vmatpush.msra.mxu0 %v1243
        %1272 = vmatpush.msra.mxu0 %v1242
        %1273 = vmatpush.msra.mxu0 %v1241
        %1274 = vmatpush.msra.mxu0 %v1240
        %1275 = vmatpush.msra.mxu0 %v1239
        %1276 = vmatmul.f32.gmra.mxu0 %v1206
        %v1277 = vpop.f32.mrf.mxu0
        %v1278 = vadd.f32 %v1258, %v1277
        %1279 = vmatmul.f32.gmra.mxu0 %v1207
        %v1280 = vpop.f32.mrf.mxu0
        %v1281 = vadd.f32 %v1258, %v1280
        %1282 = vmatmul.f32.gmra.mxu0 %v1208
        %v1283 = vpop.f32.mrf.mxu0
        %v1284 = vadd.f32 %v1258, %v1283
        %1285 = vmatmul.f32.gmra.mxu0 %v1209
        %v1286 = vpop.f32.mrf.mxu0
        %v1287 = vadd.f32 %v1258, %v1286
        %1288 = vmatmul.f32.gmra.mxu0 %v1210
        %v1289 = vpop.f32.mrf.mxu0
        %v1290 = vadd.f32 %v1258, %v1289
        %1291 = vmatmul.f32.gmra.mxu0 %v1211
        %v1292 = vpop.f32.mrf.mxu0
        %v1293 = vadd.f32 %v1258, %v1292
        %1294 = vmatmul.f32.gmra.mxu0 %v1212
        %v1295 = vpop.f32.mrf.mxu0
        %v1296 = vadd.f32 %v1258, %v1295
        %1297 = vmatmul.f32.gmra.mxu0 %v1213
        %v1298 = vpop.f32.mrf.mxu0
        %v1299 = vadd.f32 %v1258, %v1298
        %1300 = vmatmul.f32.gmra.mxu0 %v1214
        %v1301 = vpop.f32.mrf.mxu0
        %v1302 = vadd.f32 %v1258, %v1301
        %1303 = vmatmul.f32.gmra.mxu0 %v1215
        %v1304 = vpop.f32.mrf.mxu0
        %v1305 = vadd.f32 %v1258, %v1304
        %1306 = vmatmul.f32.gmra.mxu0 %v1216
        %v1307 = vpop.f32.mrf.mxu0
        %v1308 = vadd.f32 %v1258, %v1307
        %1309 = vmatmul.f32.gmra.mxu0 %v1217
        %v1310 = vpop.f32.mrf.mxu0
        %v1311 = vadd.f32 %v1258, %v1310
        %1312 = vmatmul.f32.gmra.mxu0 %v1218
        %v1313 = vpop.f32.mrf.mxu0
        %v1314 = vadd.f32 %v1258, %v1313
        %1315 = vmatmul.f32.gmra.mxu0 %v1219
        %v1316 = vpop.f32.mrf.mxu0
        %v1317 = vadd.f32 %v1258, %v1316
        %1318 = vmatmul.f32.gmra.mxu0 %v1220
        %v1319 = vpop.f32.mrf.mxu0
        %v1320 = vadd.f32 %v1258, %v1319
        %1321 = vmatmul.f32.gmra.mxu0 %v1221
        %v1322 = vpop.f32.mrf.mxu0
        %v1323 = vadd.f32 %v1258, %v1322
        %1324 = vmatmul.f32.gmra.mxu0 %v1222
        %v1325 = vpop.f32.mrf.mxu0
        %v1326 = vadd.f32 %v1258, %v1325
        %1327 = vmatmul.f32.gmra.mxu0 %v1223
        %v1328 = vpop.f32.mrf.mxu0
        %v1329 = vadd.f32 %v1258, %v1328
        %1330 = vmatmul.f32.gmra.mxu0 %v1224
        %v1331 = vpop.f32.mrf.mxu0
        %v1332 = vadd.f32 %v1258, %v1331
        %1333 = vmatmul.f32.gmra.mxu0 %v1225
        %v1334 = vpop.f32.mrf.mxu0
        %v1335 = vadd.f32 %v1258, %v1334
        %1336 = vmatmul.f32.gmra.mxu0 %v1226
        %v1337 = vpop.f32.mrf.mxu0
        %v1338 = vadd.f32 %v1258, %v1337
        %1339 = vmatmul.f32.gmra.mxu0 %v1227
        %v1340 = vpop.f32.mrf.mxu0
        %v1341 = vadd.f32 %v1258, %v1340
        %1342 = vmatmul.f32.gmra.mxu0 %v1228
        %v1343 = vpop.f32.mrf.mxu0
        %v1344 = vadd.f32 %v1258, %v1343
        %1345 = vmatmul.f32.gmra.mxu0 %v1229
        %v1346 = vpop.f32.mrf.mxu0
        %v1347 = vadd.f32 %v1258, %v1346
        %1348 = vmatmul.f32.gmra.mxu0 %v1230
        %v1349 = vpop.f32.mrf.mxu0
        %v1350 = vadd.f32 %v1258, %v1349
        %1351 = vmatmul.f32.gmra.mxu0 %v1231
        %v1352 = vpop.f32.mrf.mxu0
        %v1353 = vadd.f32 %v1258, %v1352
        %1354 = vmatmul.f32.gmra.mxu0 %v1232
        %v1355 = vpop.f32.mrf.mxu0
        %v1356 = vadd.f32 %v1258, %v1355
        %1357 = vmatmul.f32.gmra.mxu0 %v1233
        %v1358 = vpop.f32.mrf.mxu0
        %v1359 = vadd.f32 %v1258, %v1358
        %1360 = vmatmul.f32.gmra.mxu0 %v1234
        %v1361 = vpop.f32.mrf.mxu0
        %v1362 = vadd.f32 %v1258, %v1361
        %1363 = vmatmul.f32.gmra.mxu0 %v1235
        %v1364 = vpop.f32.mrf.mxu0
        %v1365 = vadd.f32 %v1258, %v1364
        %1366 = vmatmul.f32.gmra.mxu0 %v1236
        %v1367 = vpop.f32.mrf.mxu0
        %v1368 = vadd.f32 %v1258, %v1367
        %1369 = vmatmul.f32.gmra.mxu0 %v1237
        %v1370 = vpop.f32.mrf.mxu0
        %v1371 = vadd.f32 %v1258, %v1370
        %1372 = vdwg.mxu0
        %1373 = vmatpush.msra.mxu0 %v1323
        %1374 = vmatpush.msra.mxu0 %v1320
        %1375 = vmatpush.msra.mxu0 %v1317
        %1376 = vmatpush.msra.mxu0 %v1314
        %1377 = vmatpush.msra.mxu0 %v1311
        %1378 = vmatpush.msra.mxu0 %v1308
        %1379 = vmatpush.msra.mxu0 %v1305
        %1380 = vmatpush.msra.mxu0 %v1302
        %1381 = vmatpush.msra.mxu0 %v1299
        %1382 = vmatpush.msra.mxu0 %v1296
        %1383 = vmatpush.msra.mxu0 %v1293
        %1384 = vmatpush.msra.mxu0 %v1290
        %1385 = vmatpush.msra.mxu0 %v1287
        %1386 = vmatpush.msra.mxu0 %v1284
        %1387 = vmatpush.msra.mxu0 %v1281
        %1388 = vmatpush.msra.mxu0 %v1278
        %1389 = vmatmul.f32.gmra.mxu0 %v841
        %v1390 = vpop.f32.mrf.mxu0
        %v1391 = vadd.f32 0.0, %v1390
        %1392 = vmatmul.f32.gmra.mxu0 %v842
        %v1393 = vpop.f32.mrf.mxu0
        %v1394 = vadd.f32 0.0, %v1393
        %1395 = vmatmul.f32.gmra.mxu0 %v843
        %v1396 = vpop.f32.mrf.mxu0
        %v1397 = vadd.f32 0.0, %v1396
        %1398 = vmatmul.f32.gmra.mxu0 %v844
        %v1399 = vpop.f32.mrf.mxu0
        %v1400 = vadd.f32 0.0, %v1399
        %1401 = vmatmul.f32.gmra.mxu0 %v845
        %v1402 = vpop.f32.mrf.mxu0
        %v1403 = vadd.f32 0.0, %v1402
        %1404 = vmatmul.f32.gmra.mxu0 %v846
        %v1405 = vpop.f32.mrf.mxu0
        %v1406 = vadd.f32 0.0, %v1405
        %1407 = vmatmul.f32.gmra.mxu0 %v847
        %v1408 = vpop.f32.mrf.mxu0
        %v1409 = vadd.f32 0.0, %v1408
        %1410 = vmatmul.f32.gmra.mxu0 %v848
        %v1411 = vpop.f32.mrf.mxu0
        %v1412 = vadd.f32 0.0, %v1411
        %1413 = vmatmul.f32.gmra.mxu0 %v849
        %v1414 = vpop.f32.mrf.mxu0
        %v1415 = vadd.f32 0.0, %v1414
        %1416 = vmatmul.f32.gmra.mxu0 %v850
        %v1417 = vpop.f32.mrf.mxu0
        %v1418 = vadd.f32 0.0, %v1417
        %1419 = vmatmul.f32.gmra.mxu0 %v851
        %v1420 = vpop.f32.mrf.mxu0
        %v1421 = vadd.f32 0.0, %v1420
        %1422 = vmatmul.f32.gmra.mxu0 %v852
        %v1423 = vpop.f32.mrf.mxu0
        %v1424 = vadd.f32 0.0, %v1423
        %1425 = vmatmul.f32.gmra.mxu0 %v853
        %v1426 = vpop.f32.mrf.mxu0
        %v1427 = vadd.f32 0.0, %v1426
        %1428 = vmatmul.f32.gmra.mxu0 %v854
        %v1429 = vpop.f32.mrf.mxu0
        %v1430 = vadd.f32 0.0, %v1429
        %1431 = vmatmul.f32.gmra.mxu0 %v855
        %v1432 = vpop.f32.mrf.mxu0
        %v1433 = vadd.f32 0.0, %v1432
        %1434 = vmatmul.f32.gmra.mxu0 %v856
        %v1435 = vpop.f32.mrf.mxu0
        %v1436 = vadd.f32 0.0, %v1435
        %1437 = vdwg.mxu0
        %1438 = vmatpush.msra.mxu0 %v1371
        %1439 = vmatpush.msra.mxu0 %v1368
        %1440 = vmatpush.msra.mxu0 %v1365
        %1441 = vmatpush.msra.mxu0 %v1362
        %1442 = vmatpush.msra.mxu0 %v1359
        %1443 = vmatpush.msra.mxu0 %v1356
        %1444 = vmatpush.msra.mxu0 %v1353
        %1445 = vmatpush.msra.mxu0 %v1350
        %1446 = vmatpush.msra.mxu0 %v1347
        %1447 = vmatpush.msra.mxu0 %v1344
        %1448 = vmatpush.msra.mxu0 %v1341
        %1449 = vmatpush.msra.mxu0 %v1338
        %1450 = vmatpush.msra.mxu0 %v1335
        %1451 = vmatpush.msra.mxu0 %v1332
        %1452 = vmatpush.msra.mxu0 %v1329
        %1453 = vmatpush.msra.mxu0 %v1326
        %1454 = vmatmul.f32.gmra.mxu0 %v857
        %v1455 = vpop.f32.mrf.mxu0
        %v1456 = vadd.f32 0.0, %v1455
        %1457 = vmatmul.f32.gmra.mxu0 %v858
        %v1458 = vpop.f32.mrf.mxu0
        %v1459 = vadd.f32 0.0, %v1458
        %1460 = vmatmul.f32.gmra.mxu0 %v859
        %v1461 = vpop.f32.mrf.mxu0
        %v1462 = vadd.f32 0.0, %v1461
        %1463 = vmatmul.f32.gmra.mxu0 %v860
        %v1464 = vpop.f32.mrf.mxu0
        %v1465 = vadd.f32 0.0, %v1464
        %1466 = vmatmul.f32.gmra.mxu0 %v861
        %v1467 = vpop.f32.mrf.mxu0
        %v1468 = vadd.f32 0.0, %v1467
        %1469 = vmatmul.f32.gmra.mxu0 %v862
        %v1470 = vpop.f32.mrf.mxu0
        %v1471 = vadd.f32 0.0, %v1470
        %1472 = vmatmul.f32.gmra.mxu0 %v863
        %v1473 = vpop.f32.mrf.mxu0
        %v1474 = vadd.f32 0.0, %v1473
        %1475 = vmatmul.f32.gmra.mxu0 %v864
        %v1476 = vpop.f32.mrf.mxu0
        %v1477 = vadd.f32 0.0, %v1476
        %1478 = vmatmul.f32.gmra.mxu0 %v865
        %v1479 = vpop.f32.mrf.mxu0
        %v1480 = vadd.f32 0.0, %v1479
        %1481 = vmatmul.f32.gmra.mxu0 %v866
        %v1482 = vpop.f32.mrf.mxu0
        %v1483 = vadd.f32 0.0, %v1482
        %1484 = vmatmul.f32.gmra.mxu0 %v867
        %v1485 = vpop.f32.mrf.mxu0
        %v1486 = vadd.f32 0.0, %v1485
        %1487 = vmatmul.f32.gmra.mxu0 %v868
        %v1488 = vpop.f32.mrf.mxu0
        %v1489 = vadd.f32 0.0, %v1488
        %1490 = vmatmul.f32.gmra.mxu0 %v869
        %v1491 = vpop.f32.mrf.mxu0
        %v1492 = vadd.f32 0.0, %v1491
        %1493 = vmatmul.f32.gmra.mxu0 %v870
        %v1494 = vpop.f32.mrf.mxu0
        %v1495 = vadd.f32 0.0, %v1494
        %1496 = vmatmul.f32.gmra.mxu0 %v871
        %v1497 = vpop.f32.mrf.mxu0
        %v1498 = vadd.f32 0.0, %v1497
        %1499 = vmatmul.f32.gmra.mxu0 %v872
        %v1500 = vpop.f32.mrf.mxu0
        %v1501 = vadd.f32 0.0, %v1500
        %1502 = vdwg.mxu0
        %s1503 = scalar_lea.vmem [#allocation8], 16
        %v1504 = vld [vmem:[%s1503] sm:$0xff]
        %v1505 = vld [vmem:[%s1503 + $0x8] sm:$0xff]
        %v1506 = vmul.f32 %v1391, %v1504
        %v1507 = vmul.f32 %v1394, %v1505
        %v1508 = vmul.f32 %v1397, %v1504
        %v1509 = vmul.f32 %v1400, %v1505
        %v1510 = vmul.f32 %v1403, %v1504
        %v1511 = vmul.f32 %v1406, %v1505
        %v1512 = vmul.f32 %v1409, %v1504
        %v1513 = vmul.f32 %v1412, %v1505
        %v1514 = vmul.f32 %v1415, %v1504
        %v1515 = vmul.f32 %v1418, %v1505
        %v1516 = vmul.f32 %v1421, %v1504
        %v1517 = vmul.f32 %v1424, %v1505
        %v1518 = vmul.f32 %v1427, %v1504
        %v1519 = vmul.f32 %v1430, %v1505
        %v1520 = vmul.f32 %v1433, %v1504
        %v1521 = vmul.f32 %v1436, %v1505
        %v1522 = vmul.f32 %v1456, %v1504
        %v1523 = vmul.f32 %v1459, %v1505
        %v1524 = vmul.f32 %v1462, %v1504
        %v1525 = vmul.f32 %v1465, %v1505
        %v1526 = vmul.f32 %v1468, %v1504
        %v1527 = vmul.f32 %v1471, %v1505
        %v1528 = vmul.f32 %v1474, %v1504
        %v1529 = vmul.f32 %v1477, %v1505
        %v1530 = vmul.f32 %v1480, %v1504
        %v1531 = vmul.f32 %v1483, %v1505
        %v1532 = vmul.f32 %v1486, %v1504
        %v1533 = vmul.f32 %v1489, %v1505
        %v1534 = vmul.f32 %v1492, %v1504
        %v1535 = vmul.f32 %v1495, %v1505
        %v1536 = vmul.f32 %v1498, %v1504
        %v1537 = vmul.f32 %v1501, %v1505
        %s1538 = scalar_lea.vmem [#allocation8], 48
        %v1539 = vld [vmem:[%s1538] sm:$0xff]
        %v1540 = vld [vmem:[%s1538 + $0x8] sm:$0xff]
        %v1541 = vadd.f32 %v1506, %v1539
        %v1542 = vadd.f32 %v1507, %v1540
        %v1543 = vadd.f32 %v1508, %v1539
        %v1544 = vadd.f32 %v1509, %v1540
        %v1545 = vadd.f32 %v1510, %v1539
        %v1546 = vadd.f32 %v1511, %v1540
        %v1547 = vadd.f32 %v1512, %v1539
        %v1548 = vadd.f32 %v1513, %v1540
        %v1549 = vadd.f32 %v1514, %v1539
        %v1550 = vadd.f32 %v1515, %v1540
        %v1551 = vadd.f32 %v1516, %v1539
        %v1552 = vadd.f32 %v1517, %v1540
        %v1553 = vadd.f32 %v1518, %v1539
        %v1554 = vadd.f32 %v1519, %v1540
        %v1555 = vadd.f32 %v1520, %v1539
        %v1556 = vadd.f32 %v1521, %v1540
        %v1557 = vadd.f32 %v1522, %v1539
        %v1558 = vadd.f32 %v1523, %v1540
        %v1559 = vadd.f32 %v1524, %v1539
        %v1560 = vadd.f32 %v1525, %v1540
        %v1561 = vadd.f32 %v1526, %v1539
        %v1562 = vadd.f32 %v1527, %v1540
        %v1563 = vadd.f32 %v1528, %v1539
        %v1564 = vadd.f32 %v1529, %v1540
        %v1565 = vadd.f32 %v1530, %v1539
        %v1566 = vadd.f32 %v1531, %v1540
        %v1567 = vadd.f32 %v1532, %v1539
        %v1568 = vadd.f32 %v1533, %v1540
        %v1569 = vadd.f32 %v1534, %v1539
        %v1570 = vadd.f32 %v1535, %v1540
        %v1571 = vadd.f32 %v1536, %v1539
        %v1572 = vadd.f32 %v1537, %v1540
        %v1573 = vmax.f32 %v1541, 0.0
        %v1574 = vmax.f32 %v1542, 0.0
        %v1575 = vmax.f32 %v1543, 0.0
        %v1576 = vmax.f32 %v1544, 0.0
        %v1577 = vmax.f32 %v1545, 0.0
        %v1578 = vmax.f32 %v1546, 0.0
        %v1579 = vmax.f32 %v1547, 0.0
        %v1580 = vmax.f32 %v1548, 0.0
        %v1581 = vmax.f32 %v1549, 0.0
        %v1582 = vmax.f32 %v1550, 0.0
        %v1583 = vmax.f32 %v1551, 0.0
        %v1584 = vmax.f32 %v1552, 0.0
        %v1585 = vmax.f32 %v1553, 0.0
        %v1586 = vmax.f32 %v1554, 0.0
        %v1587 = vmax.f32 %v1555, 0.0
        %v1588 = vmax.f32 %v1556, 0.0
        %v1589 = vmax.f32 %v1557, 0.0
        %v1590 = vmax.f32 %v1558, 0.0
        %v1591 = vmax.f32 %v1559, 0.0
        %v1592 = vmax.f32 %v1560, 0.0
        %v1593 = vmax.f32 %v1561, 0.0
        %v1594 = vmax.f32 %v1562, 0.0
        %v1595 = vmax.f32 %v1563, 0.0
        %v1596 = vmax.f32 %v1564, 0.0
        %v1597 = vmax.f32 %v1565, 0.0
        %v1598 = vmax.f32 %v1566, 0.0
        %v1599 = vmax.f32 %v1567, 0.0
        %v1600 = vmax.f32 %v1568, 0.0
        %v1601 = vmax.f32 %v1569, 0.0
        %v1602 = vmax.f32 %v1570, 0.0
        %v1603 = vmax.f32 %v1571, 0.0
        %v1604 = vmax.f32 %v1572, 0.0
        %v1605 = vadd.f32 %v1573, %v1574
        %v1606 = vrot.slane %v1605, 4
        %v1607 = vadd.f32 %v1605, %v1606
        %v1608 = vrot.slane %v1607, 2
        %v1609 = vadd.f32 %v1607, %v1608
        %v1610 = vrot.slane %v1609, 1
        %v1611 = vadd.f32 %v1609, %v1610
        %v1612 = vadd.f32 %v1575, %v1576
        %v1613 = vrot.slane %v1612, 4
        %v1614 = vadd.f32 %v1612, %v1613
        %v1615 = vrot.slane %v1614, 2
        %v1616 = vadd.f32 %v1614, %v1615
        %v1617 = vrot.slane %v1616, 1
        %v1618 = vadd.f32 %v1616, %v1617
        %v1619 = vadd.f32 %v1577, %v1578
        %v1620 = vrot.slane %v1619, 4
        %v1621 = vadd.f32 %v1619, %v1620
        %v1622 = vrot.slane %v1621, 2
        %v1623 = vadd.f32 %v1621, %v1622
        %v1624 = vrot.slane %v1623, 1
        %v1625 = vadd.f32 %v1623, %v1624
        %v1626 = vadd.f32 %v1579, %v1580
        %v1627 = vrot.slane %v1626, 4
        %v1628 = vadd.f32 %v1626, %v1627
        %v1629 = vrot.slane %v1628, 2
        %v1630 = vadd.f32 %v1628, %v1629
        %v1631 = vrot.slane %v1630, 1
        %v1632 = vadd.f32 %v1630, %v1631
        %v1633 = vadd.f32 %v1581, %v1582
        %v1634 = vrot.slane %v1633, 4
        %v1635 = vadd.f32 %v1633, %v1634
        %v1636 = vrot.slane %v1635, 2
        %v1637 = vadd.f32 %v1635, %v1636
        %v1638 = vrot.slane %v1637, 1
        %v1639 = vadd.f32 %v1637, %v1638
        %v1640 = vadd.f32 %v1583, %v1584
        %v1641 = vrot.slane %v1640, 4
        %v1642 = vadd.f32 %v1640, %v1641
        %v1643 = vrot.slane %v1642, 2
        %v1644 = vadd.f32 %v1642, %v1643
        %v1645 = vrot.slane %v1644, 1
        %v1646 = vadd.f32 %v1644, %v1645
        %v1647 = vadd.f32 %v1585, %v1586
        %v1648 = vrot.slane %v1647, 4
        %v1649 = vadd.f32 %v1647, %v1648
        %v1650 = vrot.slane %v1649, 2
        %v1651 = vadd.f32 %v1649, %v1650
        %v1652 = vrot.slane %v1651, 1
        %v1653 = vadd.f32 %v1651, %v1652
        %v1654 = vadd.f32 %v1587, %v1588
        %v1655 = vrot.slane %v1654, 4
        %v1656 = vadd.f32 %v1654, %v1655
        %v1657 = vrot.slane %v1656, 2
        %v1658 = vadd.f32 %v1656, %v1657
        %v1659 = vrot.slane %v1658, 1
        %v1660 = vadd.f32 %v1658, %v1659
        %v1661 = vadd.f32 %v1589, %v1590
        %v1662 = vrot.slane %v1661, 4
        %v1663 = vadd.f32 %v1661, %v1662
        %v1664 = vrot.slane %v1663, 2
        %v1665 = vadd.f32 %v1663, %v1664
        %v1666 = vrot.slane %v1665, 1
        %v1667 = vadd.f32 %v1665, %v1666
        %v1668 = vadd.f32 %v1591, %v1592
        %v1669 = vrot.slane %v1668, 4
        %v1670 = vadd.f32 %v1668, %v1669
        %v1671 = vrot.slane %v1670, 2
        %v1672 = vadd.f32 %v1670, %v1671
        %v1673 = vrot.slane %v1672, 1
        %v1674 = vadd.f32 %v1672, %v1673
        %v1675 = vadd.f32 %v1593, %v1594
        %v1676 = vrot.slane %v1675, 4
        %v1677 = vadd.f32 %v1675, %v1676
        %v1678 = vrot.slane %v1677, 2
        %v1679 = vadd.f32 %v1677, %v1678
        %v1680 = vrot.slane %v1679, 1
        %v1681 = vadd.f32 %v1679, %v1680
        %v1682 = vadd.f32 %v1595, %v1596
        %v1683 = vrot.slane %v1682, 4
        %v1684 = vadd.f32 %v1682, %v1683
        %v1685 = vrot.slane %v1684, 2
        %v1686 = vadd.f32 %v1684, %v1685
        %v1687 = vrot.slane %v1686, 1
        %v1688 = vadd.f32 %v1686, %v1687
        %v1689 = vadd.f32 %v1597, %v1598
        %v1690 = vrot.slane %v1689, 4
        %v1691 = vadd.f32 %v1689, %v1690
        %v1692 = vrot.slane %v1691, 2
        %v1693 = vadd.f32 %v1691, %v1692
        %v1694 = vrot.slane %v1693, 1
        %v1695 = vadd.f32 %v1693, %v1694
        %v1696 = vadd.f32 %v1599, %v1600
        %v1697 = vrot.slane %v1696, 4
        %v1698 = vadd.f32 %v1696, %v1697
        %v1699 = vrot.slane %v1698, 2
        %v1700 = vadd.f32 %v1698, %v1699
        %v1701 = vrot.slane %v1700, 1
        %v1702 = vadd.f32 %v1700, %v1701
        %v1703 = vadd.f32 %v1601, %v1602
        %v1704 = vrot.slane %v1703, 4
        %v1705 = vadd.f32 %v1703, %v1704
        %v1706 = vrot.slane %v1705, 2
        %v1707 = vadd.f32 %v1705, %v1706
        %v1708 = vrot.slane %v1707, 1
        %v1709 = vadd.f32 %v1707, %v1708
        %v1710 = vadd.f32 %v1603, %v1604
        %v1711 = vrot.slane %v1710, 4
        %v1712 = vadd.f32 %v1710, %v1711
        %v1713 = vrot.slane %v1712, 2
        %v1714 = vadd.f32 %v1712, %v1713
        %v1715 = vrot.slane %v1714, 1
        %v1716 = vadd.f32 %v1714, %v1715
        %v1717 = vld [vmem:[#allocation14] sm:$0xff]
        %v1718 = vld [vmem:[#allocation14 + $0x8] sm:$0xff]
        %v1719 = vld [vmem:[#allocation14 + $0x10] sm:$0xff]
        %v1720 = vld [vmem:[#allocation14 + $0x18] sm:$0xff]
        %v1721 = vld [vmem:[#allocation14 + $0x20] sm:$0xff]
        %v1722 = vld [vmem:[#allocation14 + $0x28] sm:$0xff]
        %v1723 = vld [vmem:[#allocation14 + $0x30] sm:$0xff]
        %v1724 = vld [vmem:[#allocation14 + $0x38] sm:$0xff]
        %v1725 = vld [vmem:[#allocation14 + $0x40] sm:$0xff]
        %v1726 = vld [vmem:[#allocation14 + $0x48] sm:$0xff]
        %v1727 = vld [vmem:[#allocation14 + $0x50] sm:$0xff]
        %v1728 = vld [vmem:[#allocation14 + $0x58] sm:$0xff]
        %v1729 = vld [vmem:[#allocation14 + $0x60] sm:$0xff]
        %v1730 = vld [vmem:[#allocation14 + $0x68] sm:$0xff]
        %v1731 = vld [vmem:[#allocation14 + $0x70] sm:$0xff]
        %v1732 = vld [vmem:[#allocation14 + $0x78] sm:$0xff]
        %v1733 = vld [vmem:[%s10] sm:$0x1]
        %v1735 = vperm.slane %v1733, 0
        %vm1753 = vcmask 1041409
        %v1754 = vsel %vm1753, %v1618, %v1611
        %vm1755 = vcmask 1042434
        %v1756 = vsel %vm1755, %v1625, %v1754
        %vm1757 = vcmask 1043459
        %v1758 = vsel %vm1757, %v1632, %v1756
        %vm1759 = vcmask 1044484
        %v1760 = vsel %vm1759, %v1639, %v1758
        %vm1761 = vcmask 1045509
        %v1762 = vsel %vm1761, %v1646, %v1760
        %vm1763 = vcmask 1046534
        %v1764 = vsel %vm1763, %v1653, %v1762
        %vm1765 = vcmask 1047559
        %v1766 = vsel %vm1765, %v1660, %v1764
        %v1767 = vsel %vm1753, %v1674, %v1667
        %v1768 = vsel %vm1755, %v1681, %v1767
        %v1769 = vsel %vm1757, %v1688, %v1768
        %v1770 = vsel %vm1759, %v1695, %v1769
        %v1771 = vsel %vm1761, %v1702, %v1770
        %v1772 = vsel %vm1763, %v1709, %v1771
        %v1773 = vsel %vm1765, %v1716, %v1772
        %1776 = vmatpush.msra.mxu0 %v1732
        %1777 = vmatpush.msra.mxu0 %v1731
        %1778 = vmatpush.msra.mxu0 %v1730
        %1779 = vmatpush.msra.mxu0 %v1729
        %1780 = vmatpush.msra.mxu0 %v1728
        %1781 = vmatpush.msra.mxu0 %v1727
        %1782 = vmatpush.msra.mxu0 %v1726
        %1783 = vmatpush.msra.mxu0 %v1725
        %1784 = vmatpush.msra.mxu0 %v1724
        %1785 = vmatpush.msra.mxu0 %v1723
        %1786 = vmatpush.msra.mxu0 %v1722
        %1787 = vmatpush.msra.mxu0 %v1721
        %1788 = vmatpush.msra.mxu0 %v1720
        %1789 = vmatpush.msra.mxu0 %v1719
        %1790 = vmatpush.msra.mxu0 %v1718
        %1791 = vmatpush.msra.mxu0 %v1717
        %1792 = vmatmul.f32.gmra.mxu0 %v1766
        %v1793 = vpop.f32.mrf.mxu0
        %v1794 = vadd.f32 %v1735, %v1793
        %1795 = vmatmul.f32.gmra.mxu0 %v1773
        %v1796 = vpop.f32.mrf.mxu0
        %v1797 = vadd.f32 %v1735, %v1796
        %1798 = vdwg.mxu0
        %v1799 = vmax.f32 %v1794, 0.0
        %v1800 = vmax.f32 %v1797, 0.0
        %v1801 = vld [vmem:[#allocation16] sm:$0xff]
        %v1802 = vld [vmem:[#allocation16 + $0x8] sm:$0xff]
        %v1803 = vld [vmem:[#allocation16 + $0x10] sm:$0xff]
        %v1804 = vld [vmem:[#allocation16 + $0x18] sm:$0xff]
        %v1805 = vld [vmem:[#allocation16 + $0x20] sm:$0xff]
        %v1806 = vld [vmem:[#allocation16 + $0x28] sm:$0xff]
        %v1807 = vld [vmem:[#allocation16 + $0x30] sm:$0xff]
        %v1808 = vld [vmem:[#allocation16 + $0x38] sm:$0xff]
        %v1809 = vld [vmem:[#allocation16 + $0x40] sm:$0xff]
        %v1810 = vld [vmem:[#allocation16 + $0x48] sm:$0xff]
        %v1811 = vld [vmem:[#allocation16 + $0x50] sm:$0xff]
        %v1812 = vld [vmem:[#allocation16 + $0x58] sm:$0xff]
        %v1813 = vld [vmem:[#allocation16 + $0x60] sm:$0xff]
        %v1814 = vld [vmem:[#allocation16 + $0x68] sm:$0xff]
        %v1815 = vld [vmem:[#allocation16 + $0x70] sm:$0xff]
        %v1816 = vld [vmem:[#allocation16 + $0x78] sm:$0xff]
        %v1817 = vld [vmem:[%s581] sm:$0xff]
        %v1818 = vld [vmem:[%s581 + $0x8] sm:$0xff]
        %v1819 = vld [vmem:[#allocation17] sm:$0xff]
        %v1820 = vld [vmem:[#allocation17 + $0x8] sm:$0xff]
        %v1821 = vld [vmem:[#allocation17 + $0x10] sm:$0xff]
        %v1822 = vld [vmem:[#allocation17 + $0x18] sm:$0xff]
        %v1823 = vld [vmem:[#allocation17 + $0x20] sm:$0xff]
        %v1824 = vld [vmem:[#allocation17 + $0x28] sm:$0xff]
        %v1825 = vld [vmem:[#allocation17 + $0x30] sm:$0xff]
        %v1826 = vld [vmem:[#allocation17 + $0x38] sm:$0xff]
        %v1827 = vld [vmem:[#allocation17 + $0x40] sm:$0xff]
        %v1828 = vld [vmem:[#allocation17 + $0x48] sm:$0xff]
        %v1829 = vld [vmem:[#allocation17 + $0x50] sm:$0xff]
        %v1830 = vld [vmem:[#allocation17 + $0x58] sm:$0xff]
        %v1831 = vld [vmem:[#allocation17 + $0x60] sm:$0xff]
        %v1832 = vld [vmem:[#allocation17 + $0x68] sm:$0xff]
        %v1833 = vld [vmem:[#allocation17 + $0x70] sm:$0xff]
        %v1834 = vld [vmem:[#allocation17 + $0x78] sm:$0xff]
        %1835 = vmatpush.msra.mxu0 %v1834
        %1836 = vmatpush.msra.mxu0 %v1833
        %1837 = vmatpush.msra.mxu0 %v1832
        %1838 = vmatpush.msra.mxu0 %v1831
        %1839 = vmatpush.msra.mxu0 %v1830
        %1840 = vmatpush.msra.mxu0 %v1829
        %1841 = vmatpush.msra.mxu0 %v1828
        %1842 = vmatpush.msra.mxu0 %v1827
        %1843 = vmatpush.msra.mxu0 %v1826
        %1844 = vmatpush.msra.mxu0 %v1825
        %1845 = vmatpush.msra.mxu0 %v1824
        %1846 = vmatpush.msra.mxu0 %v1823
        %1847 = vmatpush.msra.mxu0 %v1822
        %1848 = vmatpush.msra.mxu0 %v1821
        %1849 = vmatpush.msra.mxu0 %v1820
        %1850 = vmatpush.msra.mxu0 %v1819
        %1851 = vmatmul.f32.gmra.mxu0 %v1817
        %v1852 = vpop.f32.mrf.mxu0
        %v1853 = vadd.f32 0.0, %v1852
        %1854 = vmatmul.f32.gmra.mxu0 %v1818
        %v1855 = vpop.f32.mrf.mxu0
        %v1856 = vadd.f32 0.0, %v1855
        %1857 = vdwg.mxu0
        %1858 = vmatpush.msra.mxu0 %v1816
        %1859 = vmatpush.msra.mxu0 %v1815
        %1860 = vmatpush.msra.mxu0 %v1814
        %1861 = vmatpush.msra.mxu0 %v1813
        %1862 = vmatpush.msra.mxu0 %v1812
        %1863 = vmatpush.msra.mxu0 %v1811
        %1864 = vmatpush.msra.mxu0 %v1810
        %1865 = vmatpush.msra.mxu0 %v1809
        %1866 = vmatpush.msra.mxu0 %v1808
        %1867 = vmatpush.msra.mxu0 %v1807
        %1868 = vmatpush.msra.mxu0 %v1806
        %1869 = vmatpush.msra.mxu0 %v1805
        %1870 = vmatpush.msra.mxu0 %v1804
        %1871 = vmatpush.msra.mxu0 %v1803
        %1872 = vmatpush.msra.mxu0 %v1802
        %1873 = vmatpush.msra.mxu0 %v1801
        %1874 = vmatmul.f32.gmra.mxu0 %v1799
        %v1875 = vpop.f32.mrf.mxu0
        %v1876 = vadd.f32 %v1853, %v1875
        %1877 = vmatmul.f32.gmra.mxu0 %v1800
        %v1878 = vpop.f32.mrf.mxu0
        %v1879 = vadd.f32 %v1856, %v1878
        %1880 = vdwg.mxu0
        %s1881 = scalar_lea.vmem %s10, 1
        %v1882 = vld [vmem:[%s1881] sm:$0x1]
        %v1884 = vperm.slane %v1882, 0
        %v1886 = vadd.f32 %v1876, %v1884
        %v1887 = vadd.f32 %v1879, %v1884
        %s1888 = scalar_lea.vmem %s10, 3
        %v1889 = vld [vmem:[%s1888] sm:$0x1]
        %v1891 = vperm.slane %v1889, 0
        %v1893 = vmul.f32 %v1886, %v1891
        %v1894 = vmul.f32 %v1887, %v1891
        %s1895 = scalar_lea.vmem %s10, 5
        %v1896 = vld [vmem:[%s1895] sm:$0x1]
        %v1898 = vperm.slane %v1896, 0
        %v1900 = vadd.f32 %v1893, %v1898
        %v1901 = vadd.f32 %v1894, %v1898
        %v1902 = vmax.f32 %v1900, 0.0
        %v1903 = vmax.f32 %v1901, 0.0
        %s1904 = scalar_lea.vmem [#allocation16], 128
        %v1905 = vld [vmem:[%s1904] sm:$0xff]
        %v1906 = vld [vmem:[%s1904 + $0x8] sm:$0xff]
        %v1907 = vld [vmem:[%s1904 + $0x10] sm:$0xff]
        %v1908 = vld [vmem:[%s1904 + $0x18] sm:$0xff]
        %v1909 = vld [vmem:[%s1904 + $0x20] sm:$0xff]
        %v1910 = vld [vmem:[%s1904 + $0x28] sm:$0xff]
        %v1911 = vld [vmem:[%s1904 + $0x30] sm:$0xff]
        %v1912 = vld [vmem:[%s1904 + $0x38] sm:$0xff]
        %v1913 = vld [vmem:[%s1904 + $0x40] sm:$0xff]
        %v1914 = vld [vmem:[%s1904 + $0x48] sm:$0xff]
        %v1915 = vld [vmem:[%s1904 + $0x50] sm:$0xff]
        %v1916 = vld [vmem:[%s1904 + $0x58] sm:$0xff]
        %v1917 = vld [vmem:[%s1904 + $0x60] sm:$0xff]
        %v1918 = vld [vmem:[%s1904 + $0x68] sm:$0xff]
        %v1919 = vld [vmem:[%s1904 + $0x70] sm:$0xff]
        %v1920 = vld [vmem:[%s1904 + $0x78] sm:$0xff]
        %s1921 = scalar_lea.vmem %s10, 2
        %v1922 = vld [vmem:[%s1921] sm:$0x1]
        %v1924 = vperm.slane %v1922, 0
        %1926 = vmatpush.msra.mxu0 %v1920
        %1927 = vmatpush.msra.mxu0 %v1919
        %1928 = vmatpush.msra.mxu0 %v1918
        %1929 = vmatpush.msra.mxu0 %v1917
        %1930 = vmatpush.msra.mxu0 %v1916
        %1931 = vmatpush.msra.mxu0 %v1915
        %1932 = vmatpush.msra.mxu0 %v1914
        %1933 = vmatpush.msra.mxu0 %v1913
        %1934 = vmatpush.msra.mxu0 %v1912
        %1935 = vmatpush.msra.mxu0 %v1911
        %1936 = vmatpush.msra.mxu0 %v1910
        %1937 = vmatpush.msra.mxu0 %v1909
        %1938 = vmatpush.msra.mxu0 %v1908
        %1939 = vmatpush.msra.mxu0 %v1907
        %1940 = vmatpush.msra.mxu0 %v1906
        %1941 = vmatpush.msra.mxu0 %v1905
        %1942 = vmatmul.f32.gmra.mxu0 %v1902
        %v1943 = vpop.f32.mrf.mxu0
        %v1944 = vadd.f32 %v1924, %v1943
        %1945 = vmatmul.f32.gmra.mxu0 %v1903
        %v1946 = vpop.f32.mrf.mxu0
        %v1947 = vadd.f32 %v1924, %v1946
        %1948 = vdwg.mxu0
        %s1949 = scalar_lea.vmem %s10, 4
        %v1950 = vld [vmem:[%s1949] sm:$0x1]
        %v1952 = vperm.slane %v1950, 0
        %v1954 = vmul.f32 %v1944, %v1952
        %v1955 = vmul.f32 %v1947, %v1952
        %s1956 = scalar_lea.vmem %s10, 6
        %v1957 = vld [vmem:[%s1956] sm:$0x1]
        %v1959 = vperm.slane %v1957, 0
        %v1961 = vadd.f32 %v1954, %v1959
        %v1962 = vadd.f32 %v1955, %v1959
        %v1963 = vmax.f32 %v1961, 0.0
        %v1964 = vmax.f32 %v1962, 0.0
        %v1965 = vld [vmem:[#allocation19] sm:$0xff]
        %v1966 = vld [vmem:[#allocation19 + $0x8] sm:$0xff]
        %v1967 = vld [vmem:[#allocation19 + $0x10] sm:$0xff]
        %v1968 = vld [vmem:[#allocation19 + $0x18] sm:$0xff]
        %v1969 = vld [vmem:[#allocation19 + $0x20] sm:$0xff]
        %v1970 = vld [vmem:[#allocation19 + $0x28] sm:$0xff]
        %v1971 = vld [vmem:[#allocation19 + $0x30] sm:$0xff]
        %v1972 = vld [vmem:[#allocation19 + $0x38] sm:$0xff]
        %v1973 = vld [vmem:[#allocation19 + $0x40] sm:$0xff]
        %v1974 = vld [vmem:[#allocation19 + $0x48] sm:$0xff]
        %v1975 = vld [vmem:[#allocation19 + $0x50] sm:$0xff]
        %v1976 = vld [vmem:[#allocation19 + $0x58] sm:$0xff]
        %v1977 = vld [vmem:[#allocation19 + $0x60] sm:$0xff]
        %v1978 = vld [vmem:[#allocation19 + $0x68] sm:$0xff]
        %v1979 = vld [vmem:[#allocation19 + $0x70] sm:$0xff]
        %v1980 = vld [vmem:[#allocation19 + $0x78] sm:$0xff]
        %v1981 = vld [vmem:[%s12] sm:$0x1]
        %v1983 = vperm.slane %v1981, 0
        %1985 = vmatpush.msra.mxu0 %v1980
        %1986 = vmatpush.msra.mxu0 %v1979
        %1987 = vmatpush.msra.mxu0 %v1978
        %1988 = vmatpush.msra.mxu0 %v1977
        %1989 = vmatpush.msra.mxu0 %v1976
        %1990 = vmatpush.msra.mxu0 %v1975
        %1991 = vmatpush.msra.mxu0 %v1974
        %1992 = vmatpush.msra.mxu0 %v1973
        %1993 = vmatpush.msra.mxu0 %v1972
        %1994 = vmatpush.msra.mxu0 %v1971
        %1995 = vmatpush.msra.mxu0 %v1970
        %1996 = vmatpush.msra.mxu0 %v1969
        %1997 = vmatpush.msra.mxu0 %v1968
        %1998 = vmatpush.msra.mxu0 %v1967
        %1999 = vmatpush.msra.mxu0 %v1966
        %2000 = vmatpush.msra.mxu0 %v1965
        %2001 = vmatmul.f32.gmra.mxu0 %v1963
        %v2002 = vpop.f32.mrf.mxu0
        %v2003 = vadd.f32 %v1983, %v2002
        %2004 = vmatmul.f32.gmra.mxu0 %v1964
        %v2005 = vpop.f32.mrf.mxu0
        %v2006 = vadd.f32 %v1983, %v2005
        %2007 = vdwg.mxu0
        %2008 = vst [vmem:[%s674] sm:$0xff] %v2003
        %2009 = vst [vmem:[%s674 + $0x8] sm:$0xff] %v2006
        %s2010 = sand.u32 %s333, 1
        %s2011 = scalar_lea.sflag [#allocation4], %s2010
        %s2012 = sand.u32 %s333, 1
        %s2013 = smul.addr %s2012, 16
        %s2014 = scalar_lea.vmem [#allocation20], %s2013
        // Predicated region
        $region117: #{tpu_custom_call.1} parent=71 // pred_check
          %p2015 = pneg %p343
        $region118: #{tpu_custom_call.1} parent=71 // pred_check_branch
          %2017 = sbr.rel (%p2015) target = $region120
        $region119: #{tpu_custom_call.1} parent=71 // pred_region
          %2019 = vsyncadd %s2011, 0
          %s2020 = smul.addr %s37, 2
          %s2021 = smul.addr %s2020, 8
          %s2022 = scalar_lea.hbm %s13, %s2021
          %s2023 = sshll.u32 %s2014, 4
          %s2024 = int_to_ptr.vmem [resolvable:$true] %s2023
          %s2025 = sshll.u32 %s2022, 4
          %s2026 = int_to_ptr.hbm [resolvable:$true] %s2025
          %2031 = dma.vmem_to_hbm [thread:$0]  %s2024, 256, %s2026, %s2011, 128, 128, 8
        $region120: #{tpu_custom_call.1} parent=71 // pred_fallthru
          _
      $region72: #{tpu_custom_call.1} parent=5 // pred_fallthru
        _
      %p2032 = scmp.le.s32.totalorder 2, %s32
      // Predicated region
      $region121: #{tpu_custom_call.1} parent=5 // pred_check
        %p2033 = pneg %p2032
      $region122: #{tpu_custom_call.1} parent=5 // pred_check_branch
        %2035 = sbr.rel (%p2033) target = $region124
      $region123: #{tpu_custom_call.1} parent=5 // pred_region
        %s2036 = ssub.s32 %s32, 2
        // Predicated region
        $region125: #{tpu_custom_call.1} parent=123 // pred_check
          %p2037 = pneg %p349
        $region126: #{tpu_custom_call.1} parent=123 // pred_check_branch
          %2039 = sbr.rel (%p2037) target = $region128
        $region127: #{tpu_custom_call.1} parent=123 // pred_region
          %s2040 = sand.u32 %s334, 1
          %s2041 = scalar_lea.sflag [#allocation4], %s2040
          %s2042 = sand.u32 %s334, 1
          %s2043 = smul.addr %s2042, 16
          %s2044 = scalar_lea.vmem [#allocation20], %s2043
          %2046 = dma.done %s2041, 256
        $region128: #{tpu_custom_call.1} parent=123 // pred_fallthru
          _
      $region124: #{tpu_custom_call.1} parent=5 // pred_fallthru
        _
    $region6: #{tpu_custom_call.1} parent=1 // loop_footer
      %s36 = sadd.s32 1, %s32
    $region7: #{tpu_custom_call.1} parent=1 // loop_footer_branch
      %31 = sbr.rel target = $region3
    $region8: #{tpu_custom_call.1} parent=1 // loop_exit
      _
    %2047 = vsyncpa [#allocation3], 1
    %s2048 = scalar_lea.sflag [#allocation3], 1
    %2049 = vsyncpa %s2048, 1
    %2050 = vsyncpa [#allocation6], 1
    %s2051 = scalar_lea.sflag [#allocation6], 1
    %2052 = vsyncpa %s2051, 1
    %2053 = vsyncpa [#allocation9], 1
    %2054 = vsyncpa [#allocation12], 1
    %2055 = vsyncpa [#allocation15], 1
    %2056 = vsyncpa [#allocation18], 1
    %2057 = vsyncpa [#allocation4], 1
    %s2058 = scalar_lea.sflag [#allocation4], 1
    %2059 = vsyncpa %s2058, 1

// kernel: tpu_custom_call.1
$region0: #{tpu_custom_call.1}
  #allocation0 [shape = 'u32[]', space=smem, size = 0x4, offset = 0x4, fixed_abs, tag = 'smem constant byte address 0x4 - core index']
  #allocation1 [shape = 'u32[72,128]{1,0:T(1,128)}', space=vmem, size = 0x9000, scoped, tag = 'internal scratch']
  %s0 = inlined_call_operand.hbm [shape: f32[2,256,128], index: 0, kind: input, shape index: {}]
  %s1 = inlined_call_operand.hbm [shape: f32[4,128,128], index: 1, kind: input, shape index: {}]
  %s2 = inlined_call_operand.hbm [shape: f32[2,16,128], index: 2, kind: input, shape index: {}]
  %s3 = inlined_call_operand.hbm [shape: f32[4,16,128], index: 3, kind: input, shape index: {}]
  %s4 = inlined_call_operand.hbm [shape: f32[128,128], index: 4, kind: input, shape index: {}]
  %s5 = inlined_call_operand.hbm [shape: f32[2,128,128], index: 5, kind: input, shape index: {}]
  %s6 = inlined_call_operand.hbm [shape: f32[3,1,128], index: 6, kind: input, shape index: {}]
  %s7 = inlined_call_operand.hbm [shape: f32[128,128], index: 7, kind: input, shape index: {}]
  %s8 = inlined_call_operand.hbm [shape: f32[2,128,128], index: 8, kind: input, shape index: {}]
  %s9 = inlined_call_operand.hbm [shape: f32[128,128], index: 9, kind: input, shape index: {}]
  %s10 = inlined_call_operand.vmem [shape: f32[7,1,128], index: 10, kind: input, shape index: {}]
  %s11 = inlined_call_operand.hbm [shape: f32[128,128], index: 11, kind: input, shape index: {}]
  %s12 = inlined_call_operand.vmem [shape: f32[1,128], index: 12, kind: input, shape index: {}]
  %s13 = inlined_call_operand.hbm [shape: f32[2,16,128], index: 13, kind: output, shape index: {}]
  %s14 = sld [smem:[#allocation0]]
  $region129: #{tpu_custom_call.1} parent=0
    _
  %s16 = ssub.s32 1, %s14
  %s17 = scalar_select 0, %s16, %s14
  $region1: #{tpu_custom_call.1} parent=0
    #allocation2 [shape = 'u8[262144]{0}', space=vmem, size = 0x40000, scoped, tag = 'input window, operand 0']
    #allocation3 [shape = 's32[2]{0}', space=sflag, size = 0x8, scoped, tag = 'scoped memory for tpu_custom_call.1']
    #allocation4 [shape = 's32[2]{0}', space=sflag, size = 0x8, scoped, tag = 'scoped memory for tpu_custom_call.1']
    #allocation5 [shape = 'u8[262144]{0}', space=vmem, size = 0x40000, scoped, tag = 'input window, operand 1']
    #allocation6 [shape = 's32[2]{0}', space=sflag, size = 0x8, scoped, tag = 'scoped memory for tpu_custom_call.1']
    #allocation7 [shape = 'u8[16384]{0}', space=vmem, size = 0x4000, scoped, tag = 'input window, operand 2']
    #allocation8 [shape = 'u8[32768]{0}', space=vmem, size = 0x8000, scoped, tag = 'input window, operand 3, single buffered']
    #allocation9 [shape = 's32[1]{0}', space=sflag, size = 0x4, scoped, tag = 'scoped memory for tpu_custom_call.1']
    #allocation10 [shape = 'u8[65536]{0}', space=vmem, size = 0x10000, scoped, tag = 'input window, operand 4, single buffered']
    #allocation11 [shape = 'u8[131072]{0}', space=vmem, size = 0x20000, scoped, tag = 'input window, operand 5, single buffered']
    #allocation12 [shape = 's32[1]{0}', space=sflag, size = 0x4, scoped, tag = 'scoped memory for tpu_custom_call.1']
    #allocation13 [shape = 'u8[1536]{0}', space=vmem, size = 0x800, scoped, tag = 'input window, operand 6, single buffered']
    #allocation14 [shape = 'u8[65536]{0}', space=vmem, size = 0x10000, scoped, tag = 'input window, operand 7, single buffered']
    #allocation15 [shape = 's32[1]{0}', space=sflag, size = 0x4, scoped, tag = 'scoped memory for tpu_custom_call.1']
    #allocation16 [shape = 'u8[131072]{0}', space=vmem, size = 0x20000, scoped, tag = 'input window, operand 8, single buffered']
    #allocation17 [shape = 'u8[65536]{0}', space=vmem, size = 0x10000, scoped, tag = 'input window, operand 9, single buffered']
    #allocation18 [shape = 's32[1]{0}', space=sflag, size = 0x4, scoped, tag = 'scoped memory for tpu_custom_call.1']
    #allocation19 [shape = 'u8[65536]{0}', space=vmem, size = 0x10000, scoped, tag = 'input window, operand 11, single buffered']
    #allocation20 [shape = 'u8[16384]{0}', space=vmem, size = 0x4000, scoped, tag = 'output window, operand 0']
    %18 = vsyncpa [#allocation3], 0
    %s19 = scalar_lea.sflag [#allocation3], 1
    %20 = vsyncpa %s19, 0
    %21 = vsyncpa [#allocation6], 0
    %s22 = scalar_lea.sflag [#allocation6], 1
    %23 = vsyncpa %s22, 0
    %24 = vsyncpa [#allocation9], 0
    %25 = vsyncpa [#allocation12], 0
    %26 = vsyncpa [#allocation15], 0
    %27 = vsyncpa [#allocation18], 0
    %28 = vsyncpa [#allocation4], 0
    %s29 = scalar_lea.sflag [#allocation4], 1
    %30 = vsyncpa %s29, 0
    loop: start=0, step=1, limit=4
    $region2: #{tpu_custom_call.1} parent=1 // loop_pre_header
      _
    $region3: #{tpu_custom_call.1} parent=1 // loop_header
      %s32 = sphi 0, %s36
      %p33 = scmp.ge.s32.totalorder %s32, 4
      %s42 = sphi 0, %s44
      %s45 = sphi 0, %s42
      %s46 = sphi 0, %s45
      %s62 = sphi 0, %s46
      %s68 = sphi 0, %s70
      %s71 = sphi 0, %s68
      %s72 = sphi 0, %s71
      %s88 = sphi 0, %s72
      %s94 = sphi 0, %s96
      %s97 = sphi 0, %s94
      %s98 = sphi 0, %s97
      %s114 = sphi 0, %s98
      %s118 = sphi 0, %s118
      %s120 = sphi 0, %s118
      %s121 = sphi 0, %s120
      %s135 = sphi 0, %s121
      %s139 = sphi 0, %s139
      %s141 = sphi 0, %s139
      %s142 = sphi 0, %s141
      %s156 = sphi 0, %s142
      %s160 = sphi 0, %s160
      %s162 = sphi 0, %s160
      %s163 = sphi 0, %s162
      %s177 = sphi 0, %s163
      %s181 = sphi 0, %s181
      %s183 = sphi 0, %s181
      %s184 = sphi 0, %s183
      %s198 = sphi 0, %s184
      %s202 = sphi 0, %s202
      %s204 = sphi 0, %s202
      %s205 = sphi 0, %s204
      %s219 = sphi 0, %s205
      %s223 = sphi 0, %s223
      %s225 = sphi 0, %s223
      %s226 = sphi 0, %s225
      %s240 = sphi 0, %s226
      %s244 = sphi 0, %s244
      %s246 = sphi 0, %s244
      %s247 = sphi 0, %s246
      %s261 = sphi 0, %s247
      %s265 = sphi 0, %s265
      %s267 = sphi 0, %s265
      %s268 = sphi 0, %s267
      %s282 = sphi 0, %s268
      %s286 = sphi 0, %s286
      %s288 = sphi 0, %s286
      %s289 = sphi 0, %s288
      %s303 = sphi 0, %s289
      %s307 = sphi 0, %s307
      %s309 = sphi 0, %s307
      %s310 = sphi 0, %s309
      %s324 = sphi 0, %s310
      %s330 = sphi 0, %s332
      %s333 = sphi 0, %s330
      %s334 = sphi 0, %s333
      %s350 = sphi 0, %s334
    $region4: #{tpu_custom_call.1} parent=1 // loop_header_branch
      %35 = sbr.rel (%p33) target = $region8
    $region5: #{tpu_custom_call.1} parent=1 // loop_body
      %s37 = ssub.s32 %s32, 1
      %s38 = ssub.s32 %s32, 2
      %s39 = sadd.s32 %s32, 1
      %s40 = ssub.s32 %s32, %s39
      %p41 = scmp.eq.s32.totalorder %s40, 0
      %s43 = sadd.s32 %s42, 1
      %s44 = scalar_select %p41, %s42, %s43
      %p47 = pneg %p41
      %p48 = scmp.eq.s32.totalorder %s32, 1
      %p49 = por %p47, %p48
      %p50 = scmp.ne.s32.totalorder %s42, %s45
      %p51 = scmp.eq.s32.totalorder %s32, 0
      %p52 = por %p50, %p51
      %p53 = scmp.ne.s32.totalorder %s42, %s45
      %p54 = scmp.eq.s32.totalorder %s37, 1
      %p55 = por %p53, %p54
      %p56 = scmp.ne.s32.totalorder %s45, %s46
      %p57 = scmp.eq.s32.totalorder %s37, 0
      %p58 = por %p56, %p57
      %p59 = scmp.ne.s32.totalorder %s45, %s46
      %p60 = scmp.eq.s32.totalorder %s38, 1
      %p61 = por %p59, %p60
      %p63 = scmp.ne.s32.totalorder %s46, %s62
      %p64 = scmp.eq.s32.totalorder %s38, 0
      %p65 = por %p63, %p64
      %s66 = ssub.s32 %s32, %s39
      %p67 = scmp.eq.s32.totalorder %s66, 0
      %s69 = sadd.s32 %s68, 1
      %s70 = scalar_select %p67, %s68, %s69
      %p73 = pneg %p67
      %p74 = scmp.eq.s32.totalorder %s32, 1
      %p75 = por %p73, %p74
      %p76 = scmp.ne.s32.totalorder %s68, %s71
      %p77 = scmp.eq.s32.totalorder %s32, 0
      %p78 = por %p76, %p77
      %p79 = scmp.ne.s32.totalorder %s68, %s71
      %p80 = scmp.eq.s32.totalorder %s37, 1
      %p81 = por %p79, %p80
      %p82 = scmp.ne.s32.totalorder %s71, %s72
      %p83 = scmp.eq.s32.totalorder %s37, 0
      %p84 = por %p82, %p83
      %p85 = scmp.ne.s32.totalorder %s71, %s72
      %p86 = scmp.eq.s32.totalorder %s38, 1
      %p87 = por %p85, %p86
      %p89 = scmp.ne.s32.totalorder %s72, %s88
      %p90 = scmp.eq.s32.totalorder %s38, 0
      %p91 = por %p89, %p90
      %s92 = ssub.s32 %s32, %s39
      %p93 = scmp.eq.s32.totalorder %s92, 0
      %s95 = sadd.s32 %s94, 1
      %s96 = scalar_select %p93, %s94, %s95
      %p99 = pneg %p93
      %p100 = scmp.eq.s32.totalorder %s32, 1
      %p101 = por %p99, %p100
      %p102 = scmp.ne.s32.totalorder %s94, %s97
      %p103 = scmp.eq.s32.totalorder %s32, 0
      %p104 = por %p102, %p103
      %p105 = scmp.ne.s32.totalorder %s94, %s97
      %p106 = scmp.eq.s32.totalorder %s37, 1
      %p107 = por %p105, %p106
      %p108 = scmp.ne.s32.totalorder %s97, %s98
      %p109 = scmp.eq.s32.totalorder %s37, 0
      %p110 = por %p108, %p109
      %p111 = scmp.ne.s32.totalorder %s97, %s98
      %p112 = scmp.eq.s32.totalorder %s38, 1
      %p113 = por %p111, %p112
      %p115 = scmp.ne.s32.totalorder %s98, %s114
      %p116 = scmp.eq.s32.totalorder %s38, 0
      %p117 = por %p115, %p116
      %s119 = sadd.s32 %s118, 1
      %p122 = scmp.eq.s32.totalorder %s32, 1
      %p123 = scmp.ne.s32.totalorder %s118, %s120
      %p124 = scmp.eq.s32.totalorder %s32, 0
      %p125 = por %p123, %p124
      %p126 = scmp.ne.s32.totalorder %s118, %s120
      %p127 = scmp.eq.s32.totalorder %s37, 1
      %p128 = por %p126, %p127
      %p129 = scmp.ne.s32.totalorder %s120, %s121
      %p130 = scmp.eq.s32.totalorder %s37, 0
      %p131 = por %p129, %p130
      %p132 = scmp.ne.s32.totalorder %s120, %s121
      %p133 = scmp.eq.s32.totalorder %s38, 1
      %p134 = por %p132, %p133
      %p136 = scmp.ne.s32.totalorder %s121, %s135
      %p137 = scmp.eq.s32.totalorder %s38, 0
      %p138 = por %p136, %p137
      %s140 = sadd.s32 %s139, 1
      %p143 = scmp.eq.s32.totalorder %s32, 1
      %p144 = scmp.ne.s32.totalorder %s139, %s141
      %p145 = scmp.eq.s32.totalorder %s32, 0
      %p146 = por %p144, %p145
      %p147 = scmp.ne.s32.totalorder %s139, %s141
      %p148 = scmp.eq.s32.totalorder %s37, 1
      %p149 = por %p147, %p148
      %p150 = scmp.ne.s32.totalorder %s141, %s142
      %p151 = scmp.eq.s32.totalorder %s37, 0
      %p152 = por %p150, %p151
      %p153 = scmp.ne.s32.totalorder %s141, %s142
      %p154 = scmp.eq.s32.totalorder %s38, 1
      %p155 = por %p153, %p154
      %p157 = scmp.ne.s32.totalorder %s142, %s156
      %p158 = scmp.eq.s32.totalorder %s38, 0
      %p159 = por %p157, %p158
      %s161 = sadd.s32 %s160, 1
      %p164 = scmp.eq.s32.totalorder %s32, 1
      %p165 = scmp.ne.s32.totalorder %s160, %s162
      %p166 = scmp.eq.s32.totalorder %s32, 0
      %p167 = por %p165, %p166
      %p168 = scmp.ne.s32.totalorder %s160, %s162
      %p169 = scmp.eq.s32.totalorder %s37, 1
      %p170 = por %p168, %p169
      %p171 = scmp.ne.s32.totalorder %s162, %s163
      %p172 = scmp.eq.s32.totalorder %s37, 0
      %p173 = por %p171, %p172
      %p174 = scmp.ne.s32.totalorder %s162, %s163
      %p175 = scmp.eq.s32.totalorder %s38, 1
      %p176 = por %p174, %p175
      %p178 = scmp.ne.s32.totalorder %s163, %s177
      %p179 = scmp.eq.s32.totalorder %s38, 0
      %p180 = por %p178, %p179
      %s182 = sadd.s32 %s181, 1
      %p185 = scmp.eq.s32.totalorder %s32, 1
      %p186 = scmp.ne.s32.totalorder %s181, %s183
      %p187 = scmp.eq.s32.totalorder %s32, 0
      %p188 = por %p186, %p187
      %p189 = scmp.ne.s32.totalorder %s181, %s183
      %p190 = scmp.eq.s32.totalorder %s37, 1
      %p191 = por %p189, %p190
      %p192 = scmp.ne.s32.totalorder %s183, %s184
      %p193 = scmp.eq.s32.totalorder %s37, 0
      %p194 = por %p192, %p193
      %p195 = scmp.ne.s32.totalorder %s183, %s184
      %p196 = scmp.eq.s32.totalorder %s38, 1
      %p197 = por %p195, %p196
      %p199 = scmp.ne.s32.totalorder %s184, %s198
      %p200 = scmp.eq.s32.totalorder %s38, 0
      %p201 = por %p199, %p200
      %s203 = sadd.s32 %s202, 1
      %p206 = scmp.eq.s32.totalorder %s32, 1
      %p207 = scmp.ne.s32.totalorder %s202, %s204
      %p208 = scmp.eq.s32.totalorder %s32, 0
      %p209 = por %p207, %p208
      %p210 = scmp.ne.s32.totalorder %s202, %s204
      %p211 = scmp.eq.s32.totalorder %s37, 1
      %p212 = por %p210, %p211
      %p213 = scmp.ne.s32.totalorder %s204, %s205
      %p214 = scmp.eq.s32.totalorder %s37, 0
      %p215 = por %p213, %p214
      %p216 = scmp.ne.s32.totalorder %s204, %s205
      %p217 = scmp.eq.s32.totalorder %s38, 1
      %p218 = por %p216, %p217
      %p220 = scmp.ne.s32.totalorder %s205, %s219
      %p221 = scmp.eq.s32.totalorder %s38, 0
      %p222 = por %p220, %p221
      %s224 = sadd.s32 %s223, 1
      %p227 = scmp.eq.s32.totalorder %s32, 1
      %p228 = scmp.ne.s32.totalorder %s223, %s225
      %p229 = scmp.eq.s32.totalorder %s32, 0
      %p230 = por %p228, %p229
      %p231 = scmp.ne.s32.totalorder %s223, %s225
      %p232 = scmp.eq.s32.totalorder %s37, 1
      %p233 = por %p231, %p232
      %p234 = scmp.ne.s32.totalorder %s225, %s226
      %p235 = scmp.eq.s32.totalorder %s37, 0
      %p236 = por %p234, %p235
      %p237 = scmp.ne.s32.totalorder %s225, %s226
      %p238 = scmp.eq.s32.totalorder %s38, 1
      %p239 = por %p237, %p238
      %p241 = scmp.ne.s32.totalorder %s226, %s240
      %p242 = scmp.eq.s32.totalorder %s38, 0
      %p243 = por %p241, %p242
      %s245 = sadd.s32 %s244, 1
      %p248 = scmp.eq.s32.totalorder %s32, 1
      %p249 = scmp.ne.s32.totalorder %s244, %s246
      %p250 = scmp.eq.s32.totalorder %s32, 0
      %p251 = por %p249, %p250
      %p252 = scmp.ne.s32.totalorder %s244, %s246
      %p253 = scmp.eq.s32.totalorder %s37, 1
      %p254 = por %p252, %p253
      %p255 = scmp.ne.s32.totalorder %s246, %s247
      %p256 = scmp.eq.s32.totalorder %s37, 0
      %p257 = por %p255, %p256
      %p258 = scmp.ne.s32.totalorder %s246, %s247
      %p259 = scmp.eq.s32.totalorder %s38, 1
      %p260 = por %p258, %p259
      %p262 = scmp.ne.s32.totalorder %s247, %s261
      %p263 = scmp.eq.s32.totalorder %s38, 0
      %p264 = por %p262, %p263
      %s266 = sadd.s32 %s265, 1
      %p269 = scmp.eq.s32.totalorder %s32, 1
      %p270 = scmp.ne.s32.totalorder %s265, %s267
      %p271 = scmp.eq.s32.totalorder %s32, 0
      %p272 = por %p270, %p271
      %p273 = scmp.ne.s32.totalorder %s265, %s267
      %p274 = scmp.eq.s32.totalorder %s37, 1
      %p275 = por %p273, %p274
      %p276 = scmp.ne.s32.totalorder %s267, %s268
      %p277 = scmp.eq.s32.totalorder %s37, 0
      %p278 = por %p276, %p277
      %p279 = scmp.ne.s32.totalorder %s267, %s268
      %p280 = scmp.eq.s32.totalorder %s38, 1
      %p281 = por %p279, %p280
      %p283 = scmp.ne.s32.totalorder %s268, %s282
      %p284 = scmp.eq.s32.totalorder %s38, 0
      %p285 = por %p283, %p284
      %s287 = sadd.s32 %s286, 1
      %p290 = scmp.eq.s32.totalorder %s32, 1
      %p291 = scmp.ne.s32.totalorder %s286, %s288
      %p292 = scmp.eq.s32.totalorder %s32, 0
      %p293 = por %p291, %p292
      %p294 = scmp.ne.s32.totalorder %s286, %s288
      %p295 = scmp.eq.s32.totalorder %s37, 1
      %p296 = por %p294, %p295
      %p297 = scmp.ne.s32.totalorder %s288, %s289
      %p298 = scmp.eq.s32.totalorder %s37, 0
      %p299 = por %p297, %p298
      %p300 = scmp.ne.s32.totalorder %s288, %s289
      %p301 = scmp.eq.s32.totalorder %s38, 1
      %p302 = por %p300, %p301
      %p304 = scmp.ne.s32.totalorder %s289, %s303
      %p305 = scmp.eq.s32.totalorder %s38, 0
      %p306 = por %p304, %p305
      %s308 = sadd.s32 %s307, 1
      %p311 = scmp.eq.s32.totalorder %s32, 1
      %p312 = scmp.ne.s32.totalorder %s307, %s309
      %p313 = scmp.eq.s32.totalorder %s32, 0
      %p314 = por %p312, %p313
      %p315 = scmp.ne.s32.totalorder %s307, %s309
      %p316 = scmp.eq.s32.totalorder %s37, 1
      %p317 = por %p315, %p316
      %p318 = scmp.ne.s32.totalorder %s309, %s310
      %p319 = scmp.eq.s32.totalorder %s37, 0
      %p320 = por %p318, %p319
      %p321 = scmp.ne.s32.totalorder %s309, %s310
      %p322 = scmp.eq.s32.totalorder %s38, 1
      %p323 = por %p321, %p322
      %p325 = scmp.ne.s32.totalorder %s310, %s324
      %p326 = scmp.eq.s32.totalorder %s38, 0
      %p327 = por %p325, %p326
      %s328 = ssub.s32 %s32, %s39
      %p329 = scmp.eq.s32.totalorder %s328, 0
      %s331 = sadd.s32 %s330, 1
      %s332 = scalar_select %p329, %s330, %s331
      %p335 = pneg %p329
      %p336 = scmp.eq.s32.totalorder %s32, 1
      %p337 = por %p335, %p336
      %p338 = scmp.ne.s32.totalorder %s330, %s333
      %p339 = scmp.eq.s32.totalorder %s32, 0
      %p340 = por %p338, %p339
      %p341 = scmp.ne.s32.totalorder %s330, %s333
      %p342 = scmp.eq.s32.totalorder %s37, 1
      %p343 = por %p341, %p342
      %p344 = scmp.ne.s32.totalorder %s333, %s334
      %p345 = scmp.eq.s32.totalorder %s37, 0
      %p346 = por %p344, %p345
      %p347 = scmp.ne.s32.totalorder %s333, %s334
      %p348 = scmp.eq.s32.totalorder %s38, 1
      %p349 = por %p347, %p348
      %p351 = scmp.ne.s32.totalorder %s334, %s350
      %p352 = scmp.eq.s32.totalorder %s38, 0
      %p353 = por %p351, %p352
      %p354 = scmp.le.s32.totalorder 1, %s32
      %p355 = scmp.lt.s32.totalorder %s32, 3
      %p356 = pnand %p354, %p355
      %p357 = pneg %p356
      // Predicated region
      $region9: #{tpu_custom_call.1} parent=5 // pred_check
        _
      $region10: #{tpu_custom_call.1} parent=5 // pred_check_branch
        %359 = sbr.rel (%p356) target = $region12
      $region11: #{tpu_custom_call.1} parent=5 // pred_region
        %s360 = ssub.s32 %s32, 1
        // Predicated region
        $region13: #{tpu_custom_call.1} parent=11 // pred_check
          %p361 = pneg %p131
        $region14: #{tpu_custom_call.1} parent=11 // pred_check_branch
          %363 = sbr.rel (%p361) target = $region16
        $region15: #{tpu_custom_call.1} parent=11 // pred_region
          %365 = vsyncadd [#allocation9], 0
          %s366 = sshll.u32 %s3, 4
          %s367 = int_to_ptr.hbm [resolvable:$true] %s366
          %s368 = sshll.u32 [#allocation8], 4
          %s369 = int_to_ptr.vmem [resolvable:$true] %s368
          %374 = dma.hbm_to_vmem [thread:$0]  %s367, 1024, %s369, [#allocation9], 128, 128, 8
        $region16: #{tpu_custom_call.1} parent=11 // pred_fallthru
          _
        // Predicated region
        $region17: #{tpu_custom_call.1} parent=11 // pred_check
          %p375 = pneg %p152
        $region18: #{tpu_custom_call.1} parent=11 // pred_check_branch
          %377 = sbr.rel (%p375) target = $region20
        $region19: #{tpu_custom_call.1} parent=11 // pred_region
          %379 = vsyncadd [#allocation9], 0
          %s380 = sshll.u32 %s4, 4
          %s381 = int_to_ptr.hbm [resolvable:$true] %s380
          %s382 = sshll.u32 [#allocation10], 4
          %s383 = int_to_ptr.vmem [resolvable:$true] %s382
          %388 = dma.hbm_to_vmem [thread:$0]  %s381, 2048, %s383, [#allocation9], 128, 128, 8
        $region20: #{tpu_custom_call.1} parent=11 // pred_fallthru
          _
        // Predicated region
        $region21: #{tpu_custom_call.1} parent=11 // pred_check
          %p389 = pneg %p173
        $region22: #{tpu_custom_call.1} parent=11 // pred_check_branch
          %391 = sbr.rel (%p389) target = $region24
        $region23: #{tpu_custom_call.1} parent=11 // pred_region
          %393 = vsyncadd [#allocation12], 0
          %s394 = sshll.u32 %s5, 4
          %s395 = int_to_ptr.hbm [resolvable:$true] %s394
          %s396 = sshll.u32 [#allocation11], 4
          %s397 = int_to_ptr.vmem [resolvable:$true] %s396
          %402 = dma.hbm_to_vmem [thread:$0]  %s395, 4096, %s397, [#allocation12], 128, 128, 8
        $region24: #{tpu_custom_call.1} parent=11 // pred_fallthru
          _
        // Predicated region
        $region25: #{tpu_custom_call.1} parent=11 // pred_check
          %p403 = pneg %p194
        $region26: #{tpu_custom_call.1} parent=11 // pred_check_branch
          %405 = sbr.rel (%p403) target = $region28
        $region27: #{tpu_custom_call.1} parent=11 // pred_region
          %407 = vsyncadd [#allocation12], 0
          %s408 = sshll.u32 %s6, 4
          %s409 = int_to_ptr.hbm [resolvable:$true] %s408
          %s410 = sshll.u32 [#allocation13], 4
          %s411 = int_to_ptr.vmem [resolvable:$true] %s410
          %416 = dma.hbm_to_vmem [thread:$0]  %s409, 48, %s411, [#allocation12], 16, 16, 1
        $region28: #{tpu_custom_call.1} parent=11 // pred_fallthru
          _
        // Predicated region
        $region29: #{tpu_custom_call.1} parent=11 // pred_check
          %p417 = pneg %p215
        $region30: #{tpu_custom_call.1} parent=11 // pred_check_branch
          %419 = sbr.rel (%p417) target = $region32
        $region31: #{tpu_custom_call.1} parent=11 // pred_region
          %421 = vsyncadd [#allocation15], 0
          %s422 = sshll.u32 %s7, 4
          %s423 = int_to_ptr.hbm [resolvable:$true] %s422
          %s424 = sshll.u32 [#allocation14], 4
          %s425 = int_to_ptr.vmem [resolvable:$true] %s424
          %430 = dma.hbm_to_vmem [thread:$0]  %s423, 2048, %s425, [#allocation15], 128, 128, 8
        $region32: #{tpu_custom_call.1} parent=11 // pred_fallthru
          _
        // Predicated region
        $region33: #{tpu_custom_call.1} parent=11 // pred_check
          %p431 = pneg %p236
        $region34: #{tpu_custom_call.1} parent=11 // pred_check_branch
          %433 = sbr.rel (%p431) target = $region36
        $region35: #{tpu_custom_call.1} parent=11 // pred_region
          %435 = vsyncadd [#allocation15], 0
          %s436 = sshll.u32 %s8, 4
          %s437 = int_to_ptr.hbm [resolvable:$true] %s436
          %s438 = sshll.u32 [#allocation16], 4
          %s439 = int_to_ptr.vmem [resolvable:$true] %s438
          %444 = dma.hbm_to_vmem [thread:$0]  %s437, 4096, %s439, [#allocation15], 128, 128, 8
        $region36: #{tpu_custom_call.1} parent=11 // pred_fallthru
          _
        // Predicated region
        $region37: #{tpu_custom_call.1} parent=11 // pred_check
          %p445 = pneg %p257
        $region38: #{tpu_custom_call.1} parent=11 // pred_check_branch
          %447 = sbr.rel (%p445) target = $region40
        $region39: #{tpu_custom_call.1} parent=11 // pred_region
          %449 = vsyncadd [#allocation18], 0
          %s450 = sshll.u32 %s9, 4
          %s451 = int_to_ptr.hbm [resolvable:$true] %s450
          %s452 = sshll.u32 [#allocation17], 4
          %s453 = int_to_ptr.vmem [resolvable:$true] %s452
          %458 = dma.hbm_to_vmem [thread:$0]  %s451, 2048, %s453, [#allocation18], 128, 128, 8
        $region40: #{tpu_custom_call.1} parent=11 // pred_fallthru
          _
        // Predicated region
        $region41: #{tpu_custom_call.1} parent=11 // pred_check
          %p459 = pneg %p278
        $region42: #{tpu_custom_call.1} parent=11 // pred_check_branch
          %461 = sbr.rel (%p459) target = $region44
        $region43: #{tpu_custom_call.1} parent=11 // pred_region
          _
        $region44: #{tpu_custom_call.1} parent=11 // pred_fallthru
          _
        // Predicated region
        $region45: #{tpu_custom_call.1} parent=11 // pred_check
          %p462 = pneg %p299
        $region46: #{tpu_custom_call.1} parent=11 // pred_check_branch
          %464 = sbr.rel (%p462) target = $region48
        $region47: #{tpu_custom_call.1} parent=11 // pred_region
          %466 = vsyncadd [#allocation18], 0
          %s467 = sshll.u32 %s11, 4
          %s468 = int_to_ptr.hbm [resolvable:$true] %s467
          %s469 = sshll.u32 [#allocation19], 4
          %s470 = int_to_ptr.vmem [resolvable:$true] %s469
          %475 = dma.hbm_to_vmem [thread:$0]  %s468, 2048, %s470, [#allocation18], 128, 128, 8
        $region48: #{tpu_custom_call.1} parent=11 // pred_fallthru
          _
        // Predicated region
        $region49: #{tpu_custom_call.1} parent=11 // pred_check
          %p476 = pneg %p320
        $region50: #{tpu_custom_call.1} parent=11 // pred_check_branch
          %478 = sbr.rel (%p476) target = $region52
        $region51: #{tpu_custom_call.1} parent=11 // pred_region
          _
        $region52: #{tpu_custom_call.1} parent=11 // pred_fallthru
          _
      $region12: #{tpu_custom_call.1} parent=5 // pred_fallthru
        _
      %p479 = scmp.lt.s32.totalorder %s32, 2
      // Predicated region
      $region53: #{tpu_custom_call.1} parent=5 // pred_check
        %p480 = pneg %p479
      $region54: #{tpu_custom_call.1} parent=5 // pred_check_branch
        %482 = sbr.rel (%p480) target = $region56
      $region55: #{tpu_custom_call.1} parent=5 // pred_region
        // Predicated region
        $region57: #{tpu_custom_call.1} parent=55 // pred_check
          %p483 = pneg %p52
        $region58: #{tpu_custom_call.1} parent=55 // pred_check_branch
          %485 = sbr.rel (%p483) target = $region60
        $region59: #{tpu_custom_call.1} parent=55 // pred_region
          %s486 = sand.u32 %s42, 1
          %s487 = scalar_lea.sflag [#allocation3], %s486
          %s488 = sand.u32 %s42, 1
          %s489 = smul.addr %s488, 256
          %s490 = scalar_lea.vmem [#allocation2], %s489
          %492 = vsyncadd %s487, 0
          %s493 = smul.addr %s32, 32
          %s494 = smul.addr %s493, 8
          %s495 = scalar_lea.hbm %s0, %s494
          %s496 = sshll.u32 %s495, 4
          %s497 = int_to_ptr.hbm [resolvable:$true] %s496
          %s498 = sshll.u32 %s490, 4
          %s499 = int_to_ptr.vmem [resolvable:$true] %s498
          %504 = dma.hbm_to_vmem [thread:$0]  %s497, 4096, %s499, %s487, 128, 128, 8
        $region60: #{tpu_custom_call.1} parent=55 // pred_fallthru
          _
        // Predicated region
        $region61: #{tpu_custom_call.1} parent=55 // pred_check
          %p505 = pneg %p78
        $region62: #{tpu_custom_call.1} parent=55 // pred_check_branch
          %507 = sbr.rel (%p505) target = $region64
        $region63: #{tpu_custom_call.1} parent=55 // pred_region
          %s508 = sand.u32 %s32, 1
          %s509 = scalar_lea.sflag [#allocation6], %s508
          %s510 = sand.u32 %s68, 1
          %s511 = smul.addr %s510, 256
          %s512 = scalar_lea.vmem [#allocation5], %s511
          %s513 = smul.u32 2, %s32
          %515 = vsyncadd %s509, 0
          %s516 = smul.addr %s513, 16
          %s517 = smul.addr %s516, 8
          %s518 = scalar_lea.hbm %s1, %s517
          %s519 = sshll.u32 %s518, 4
          %s520 = int_to_ptr.hbm [resolvable:$true] %s519
          %s521 = sshll.u32 %s512, 4
          %s522 = int_to_ptr.vmem [resolvable:$true] %s521
          %527 = dma.hbm_to_vmem [thread:$0]  %s520, 4096, %s522, %s509, 128, 128, 8
        $region64: #{tpu_custom_call.1} parent=55 // pred_fallthru
          _
        // Predicated region
        $region65: #{tpu_custom_call.1} parent=55 // pred_check
          %p528 = pneg %p104
        $region66: #{tpu_custom_call.1} parent=55 // pred_check_branch
          %530 = sbr.rel (%p528) target = $region68
        $region67: #{tpu_custom_call.1} parent=55 // pred_region
          %s531 = sand.u32 %s32, 1
          %s532 = scalar_lea.sflag [#allocation6], %s531
          %s533 = sand.u32 %s94, 1
          %s534 = smul.addr %s533, 16
          %s535 = scalar_lea.vmem [#allocation7], %s534
          %537 = vsyncadd %s532, 0
          %s538 = smul.addr %s32, 2
          %s539 = smul.addr %s538, 8
          %s540 = scalar_lea.hbm %s2, %s539
          %s541 = sshll.u32 %s540, 4
          %s542 = int_to_ptr.hbm [resolvable:$true] %s541
          %s543 = sshll.u32 %s535, 4
          %s544 = int_to_ptr.vmem [resolvable:$true] %s543
          %549 = dma.hbm_to_vmem [thread:$0]  %s542, 256, %s544, %s532, 128, 128, 8
        $region68: #{tpu_custom_call.1} parent=55 // pred_fallthru
          _
      $region56: #{tpu_custom_call.1} parent=5 // pred_fallthru
        _
      %p550 = scmp.le.s32.totalorder 1, %s32
      %p551 = scmp.lt.s32.totalorder %s32, 3
      %p552 = pnand %p550, %p551
      %p553 = pneg %p552
      // Predicated region
      $region69: #{tpu_custom_call.1} parent=5 // pred_check
        _
      $region70: #{tpu_custom_call.1} parent=5 // pred_check_branch
        %555 = sbr.rel (%p552) target = $region72
      $region71: #{tpu_custom_call.1} parent=5 // pred_region
        %s556 = ssub.s32 %s32, 1
        %s557 = sand.u32 %s45, 1
        %s558 = scalar_lea.sflag [#allocation3], %s557
        %s559 = sand.u32 %s45, 1
        %s560 = smul.addr %s559, 256
        %s561 = scalar_lea.vmem [#allocation2], %s560
        // Predicated region
        $region73: #{tpu_custom_call.1} parent=71 // pred_check
          %p562 = pneg %p58
        $region74: #{tpu_custom_call.1} parent=71 // pred_check_branch
          %564 = sbr.rel (%p562) target = $region76
        $region75: #{tpu_custom_call.1} parent=71 // pred_region
          %566 = dma.done %s558, 4096
        $region76: #{tpu_custom_call.1} parent=71 // pred_fallthru
          _
        %s567 = sand.u32 %s37, 1
        %s568 = scalar_lea.sflag [#allocation6], %s567
        %s569 = sand.u32 %s71, 1
        %s570 = smul.addr %s569, 256
        %s571 = scalar_lea.vmem [#allocation5], %s570
        // Predicated region
        $region77: #{tpu_custom_call.1} parent=71 // pred_check
          %p572 = pneg %p84
        $region78: #{tpu_custom_call.1} parent=71 // pred_check_branch
          %574 = sbr.rel (%p572) target = $region80
        $region79: #{tpu_custom_call.1} parent=71 // pred_region
          %576 = dma.done %s568, 4096
        $region80: #{tpu_custom_call.1} parent=71 // pred_fallthru
          _
        %s577 = sand.u32 %s37, 1
        %s578 = scalar_lea.sflag [#allocation6], %s577
        %s579 = sand.u32 %s97, 1
        %s580 = smul.addr %s579, 16
        %s581 = scalar_lea.vmem [#allocation7], %s580
        // Predicated region
        $region81: #{tpu_custom_call.1} parent=71 // pred_check
          %p582 = pneg %p110
        $region82: #{tpu_custom_call.1} parent=71 // pred_check_branch
          %584 = sbr.rel (%p582) target = $region84
        $region83: #{tpu_custom_call.1} parent=71 // pred_region
          %586 = dma.done %s578, 256
        $region84: #{tpu_custom_call.1} parent=71 // pred_fallthru
          _
        // Predicated region
        $region85: #{tpu_custom_call.1} parent=71 // pred_check
          %p587 = pneg %p131
        $region86: #{tpu_custom_call.1} parent=71 // pred_check_branch
          %589 = sbr.rel (%p587) target = $region88
        $region87: #{tpu_custom_call.1} parent=71 // pred_region
          %591 = dma.done [#allocation9], 1024
        $region88: #{tpu_custom_call.1} parent=71 // pred_fallthru
          _
        // Predicated region
        $region89: #{tpu_custom_call.1} parent=71 // pred_check
          %p592 = pneg %p152
        $region90: #{tpu_custom_call.1} parent=71 // pred_check_branch
          %594 = sbr.rel (%p592) target = $region92
        $region91: #{tpu_custom_call.1} parent=71 // pred_region
          %596 = dma.done [#allocation9], 2048
        $region92: #{tpu_custom_call.1} parent=71 // pred_fallthru
          _
        // Predicated region
        $region93: #{tpu_custom_call.1} parent=71 // pred_check
          %p597 = pneg %p173
        $region94: #{tpu_custom_call.1} parent=71 // pred_check_branch
          %599 = sbr.rel (%p597) target = $region96
        $region95: #{tpu_custom_call.1} parent=71 // pred_region
          %601 = dma.done [#allocation12], 4096
        $region96: #{tpu_custom_call.1} parent=71 // pred_fallthru
          _
        // Predicated region
        $region97: #{tpu_custom_call.1} parent=71 // pred_check
          %p602 = pneg %p194
        $region98: #{tpu_custom_call.1} parent=71 // pred_check_branch
          %604 = sbr.rel (%p602) target = $region100
        $region99: #{tpu_custom_call.1} parent=71 // pred_region
          %606 = dma.done [#allocation12], 48
        $region100: #{tpu_custom_call.1} parent=71 // pred_fallthru
          _
        // Predicated region
        $region101: #{tpu_custom_call.1} parent=71 // pred_check
          %p607 = pneg %p215
        $region102: #{tpu_custom_call.1} parent=71 // pred_check_branch
          %609 = sbr.rel (%p607) target = $region104
        $region103: #{tpu_custom_call.1} parent=71 // pred_region
          %611 = dma.done [#allocation15], 2048
        $region104: #{tpu_custom_call.1} parent=71 // pred_fallthru
          _
        // Predicated region
        $region105: #{tpu_custom_call.1} parent=71 // pred_check
          %p612 = pneg %p236
        $region106: #{tpu_custom_call.1} parent=71 // pred_check_branch
          %614 = sbr.rel (%p612) target = $region108
        $region107: #{tpu_custom_call.1} parent=71 // pred_region
          %616 = dma.done [#allocation15], 4096
        $region108: #{tpu_custom_call.1} parent=71 // pred_fallthru
          _
        // Predicated region
        $region109: #{tpu_custom_call.1} parent=71 // pred_check
          %p617 = pneg %p257
        $region110: #{tpu_custom_call.1} parent=71 // pred_check_branch
          %619 = sbr.rel (%p617) target = $region112
        $region111: #{tpu_custom_call.1} parent=71 // pred_region
          %621 = dma.done [#allocation18], 2048
        $region112: #{tpu_custom_call.1} parent=71 // pred_fallthru
          _
        // Predicated region
        $region113: #{tpu_custom_call.1} parent=71 // pred_check
          %p622 = pneg %p299
        $region114: #{tpu_custom_call.1} parent=71 // pred_check_branch
          %624 = sbr.rel (%p622) target = $region116
        $region115: #{tpu_custom_call.1} parent=71 // pred_region
          %626 = dma.done [#allocation18], 2048
        $region116: #{tpu_custom_call.1} parent=71 // pred_fallthru
          _
        %s627 = sand.u32 %s45, 1
        %s628 = scalar_lea.sflag [#allocation3], %s627
        %s629 = sand.u32 %s45, 1
        %s630 = smul.addr %s629, 256
        %s631 = scalar_lea.vmem [#allocation2], %s630
        %p632 = pneg %p58
        %p633 = pneg %p55
        %s634 = sand.u32 %s37, 1
        %s635 = scalar_lea.sflag [#allocation6], %s634
        %s636 = sand.u32 %s71, 1
        %s637 = smul.addr %s636, 256
        %s638 = scalar_lea.vmem [#allocation5], %s637
        %p639 = pneg %p84
        %p640 = pneg %p81
        %s641 = sand.u32 %s37, 1
        %s642 = scalar_lea.sflag [#allocation6], %s641
        %s643 = sand.u32 %s97, 1
        %s644 = smul.addr %s643, 16
        %s645 = scalar_lea.vmem [#allocation7], %s644
        %p646 = pneg %p110
        %p647 = pneg %p107
        %p648 = pneg %p131
        %p649 = pneg %p128
        %p650 = pneg %p152
        %p651 = pneg %p149
        %p652 = pneg %p173
        %p653 = pneg %p170
        %p654 = pneg %p194
        %p655 = pneg %p191
        %p656 = pneg %p215
        %p657 = pneg %p212
        %p658 = pneg %p236
        %p659 = pneg %p233
        %p660 = pneg %p257
        %p661 = pneg %p254
        %p662 = pneg %p278
        %p663 = pneg %p275
        %p664 = pneg %p299
        %p665 = pneg %p296
        %p666 = pneg %p320
        %p667 = pneg %p317
        %p668 = pneg %p346
        %p669 = pneg %p343
        %s670 = sand.u32 %s333, 1
        %s671 = scalar_lea.sflag [#allocation4], %s670
        %s672 = sand.u32 %s333, 1
        %s673 = smul.addr %s672, 16
        %s674 = scalar_lea.vmem [#allocation20], %s673
        %s675 = smul.u32 2, %s37
        %v676 = vld [vmem:[%s561] sm:$0xff]
        %v677 = vld [vmem:[%s561 + $0x8] sm:$0xff]
        %v678 = vld [vmem:[%s561 + $0x10] sm:$0xff]
        %v679 = vld [vmem:[%s561 + $0x18] sm:$0xff]
        %v680 = vld [vmem:[%s561 + $0x20] sm:$0xff]
        %v681 = vld [vmem:[%s561 + $0x28] sm:$0xff]
        %v682 = vld [vmem:[%s561 + $0x30] sm:$0xff]
        %v683 = vld [vmem:[%s561 + $0x38] sm:$0xff]
        %v684 = vld [vmem:[%s561 + $0x40] sm:$0xff]
        %v685 = vld [vmem:[%s561 + $0x48] sm:$0xff]
        %v686 = vld [vmem:[%s561 + $0x50] sm:$0xff]
        %v687 = vld [vmem:[%s561 + $0x58] sm:$0xff]
        %v688 = vld [vmem:[%s561 + $0x60] sm:$0xff]
        %v689 = vld [vmem:[%s561 + $0x68] sm:$0xff]
        %v690 = vld [vmem:[%s561 + $0x70] sm:$0xff]
        %v691 = vld [vmem:[%s561 + $0x78] sm:$0xff]
        %v692 = vld [vmem:[%s561 + $0x80] sm:$0xff]
        %v693 = vld [vmem:[%s561 + $0x88] sm:$0xff]
        %v694 = vld [vmem:[%s561 + $0x90] sm:$0xff]
        %v695 = vld [vmem:[%s561 + $0x98] sm:$0xff]
        %v696 = vld [vmem:[%s561 + $0xa0] sm:$0xff]
        %v697 = vld [vmem:[%s561 + $0xa8] sm:$0xff]
        %v698 = vld [vmem:[%s561 + $0xb0] sm:$0xff]
        %v699 = vld [vmem:[%s561 + $0xb8] sm:$0xff]
        %v700 = vld [vmem:[%s561 + $0xc0] sm:$0xff]
        %v701 = vld [vmem:[%s561 + $0xc8] sm:$0xff]
        %v702 = vld [vmem:[%s561 + $0xd0] sm:$0xff]
        %v703 = vld [vmem:[%s561 + $0xd8] sm:$0xff]
        %v704 = vld [vmem:[%s561 + $0xe0] sm:$0xff]
        %v705 = vld [vmem:[%s561 + $0xe8] sm:$0xff]
        %v706 = vld [vmem:[%s561 + $0xf0] sm:$0xff]
        %v707 = vld [vmem:[%s561 + $0xf8] sm:$0xff]
        %v708 = vld [vmem:[#allocation10] sm:$0xff]
        %v709 = vld [vmem:[#allocation10 + $0x8] sm:$0xff]
        %v710 = vld [vmem:[#allocation10 + $0x10] sm:$0xff]
        %v711 = vld [vmem:[#allocation10 + $0x18] sm:$0xff]
        %v712 = vld [vmem:[#allocation10 + $0x20] sm:$0xff]
        %v713 = vld [vmem:[#allocation10 + $0x28] sm:$0xff]
        %v714 = vld [vmem:[#allocation10 + $0x30] sm:$0xff]
        %v715 = vld [vmem:[#allocation10 + $0x38] sm:$0xff]
        %v716 = vld [vmem:[#allocation10 + $0x40] sm:$0xff]
        %v717 = vld [vmem:[#allocation10 + $0x48] sm:$0xff]
        %v718 = vld [vmem:[#allocation10 + $0x50] sm:$0xff]
        %v719 = vld [vmem:[#allocation10 + $0x58] sm:$0xff]
        %v720 = vld [vmem:[#allocation10 + $0x60] sm:$0xff]
        %v721 = vld [vmem:[#allocation10 + $0x68] sm:$0xff]
        %v722 = vld [vmem:[#allocation10 + $0x70] sm:$0xff]
        %v723 = vld [vmem:[#allocation10 + $0x78] sm:$0xff]
        %v724 = vld [vmem:[#allocation13] sm:$0x1]
        %v726 = vperm.slane %v724, 0
        %728 = vmatpush.msra.mxu0 %v723
        %729 = vmatpush.msra.mxu0 %v722
        %730 = vmatpush.msra.mxu0 %v721
        %731 = vmatpush.msra.mxu0 %v720
        %732 = vmatpush.msra.mxu0 %v719
        %733 = vmatpush.msra.mxu0 %v718
        %734 = vmatpush.msra.mxu0 %v717
        %735 = vmatpush.msra.mxu0 %v716
        %736 = vmatpush.msra.mxu0 %v715
        %737 = vmatpush.msra.mxu0 %v714
        %738 = vmatpush.msra.mxu0 %v713
        %739 = vmatpush.msra.mxu0 %v712
        %740 = vmatpush.msra.mxu0 %v711
        %741 = vmatpush.msra.mxu0 %v710
        %742 = vmatpush.msra.mxu0 %v709
        %743 = vmatpush.msra.mxu0 %v708
        %744 = vmatmul.f32.gmra.mxu0 %v676
        %v745 = vpop.f32.mrf.mxu0
        %v746 = vadd.f32 %v726, %v745
        %747 = vmatmul.f32.gmra.mxu0 %v677
        %v748 = vpop.f32.mrf.mxu0
        %v749 = vadd.f32 %v726, %v748
        %750 = vmatmul.f32.gmra.mxu0 %v678
        %v751 = vpop.f32.mrf.mxu0
        %v752 = vadd.f32 %v726, %v751
        %753 = vmatmul.f32.gmra.mxu0 %v679
        %v754 = vpop.f32.mrf.mxu0
        %v755 = vadd.f32 %v726, %v754
        %756 = vmatmul.f32.gmra.mxu0 %v680
        %v757 = vpop.f32.mrf.mxu0
        %v758 = vadd.f32 %v726, %v757
        %759 = vmatmul.f32.gmra.mxu0 %v681
        %v760 = vpop.f32.mrf.mxu0
        %v761 = vadd.f32 %v726, %v760
        %762 = vmatmul.f32.gmra.mxu0 %v682
        %v763 = vpop.f32.mrf.mxu0
        %v764 = vadd.f32 %v726, %v763
        %765 = vmatmul.f32.gmra.mxu0 %v683
        %v766 = vpop.f32.mrf.mxu0
        %v767 = vadd.f32 %v726, %v766
        %768 = vmatmul.f32.gmra.mxu0 %v684
        %v769 = vpop.f32.mrf.mxu0
        %v770 = vadd.f32 %v726, %v769
        %771 = vmatmul.f32.gmra.mxu0 %v685
        %v772 = vpop.f32.mrf.mxu0
        %v773 = vadd.f32 %v726, %v772
        %774 = vmatmul.f32.gmra.mxu0 %v686
        %v775 = vpop.f32.mrf.mxu0
        %v776 = vadd.f32 %v726, %v775
        %777 = vmatmul.f32.gmra.mxu0 %v687
        %v778 = vpop.f32.mrf.mxu0
        %v779 = vadd.f32 %v726, %v778
        %780 = vmatmul.f32.gmra.mxu0 %v688
        %v781 = vpop.f32.mrf.mxu0
        %v782 = vadd.f32 %v726, %v781
        %783 = vmatmul.f32.gmra.mxu0 %v689
        %v784 = vpop.f32.mrf.mxu0
        %v785 = vadd.f32 %v726, %v784
        %786 = vmatmul.f32.gmra.mxu0 %v690
        %v787 = vpop.f32.mrf.mxu0
        %v788 = vadd.f32 %v726, %v787
        %789 = vmatmul.f32.gmra.mxu0 %v691
        %v790 = vpop.f32.mrf.mxu0
        %v791 = vadd.f32 %v726, %v790
        %792 = vmatmul.f32.gmra.mxu0 %v692
        %v793 = vpop.f32.mrf.mxu0
        %v794 = vadd.f32 %v726, %v793
        %795 = vmatmul.f32.gmra.mxu0 %v693
        %v796 = vpop.f32.mrf.mxu0
        %v797 = vadd.f32 %v726, %v796
        %798 = vmatmul.f32.gmra.mxu0 %v694
        %v799 = vpop.f32.mrf.mxu0
        %v800 = vadd.f32 %v726, %v799
        %801 = vmatmul.f32.gmra.mxu0 %v695
        %v802 = vpop.f32.mrf.mxu0
        %v803 = vadd.f32 %v726, %v802
        %804 = vmatmul.f32.gmra.mxu0 %v696
        %v805 = vpop.f32.mrf.mxu0
        %v806 = vadd.f32 %v726, %v805
        %807 = vmatmul.f32.gmra.mxu0 %v697
        %v808 = vpop.f32.mrf.mxu0
        %v809 = vadd.f32 %v726, %v808
        %810 = vmatmul.f32.gmra.mxu0 %v698
        %v811 = vpop.f32.mrf.mxu0
        %v812 = vadd.f32 %v726, %v811
        %813 = vmatmul.f32.gmra.mxu0 %v699
        %v814 = vpop.f32.mrf.mxu0
        %v815 = vadd.f32 %v726, %v814
        %816 = vmatmul.f32.gmra.mxu0 %v700
        %v817 = vpop.f32.mrf.mxu0
        %v818 = vadd.f32 %v726, %v817
        %819 = vmatmul.f32.gmra.mxu0 %v701
        %v820 = vpop.f32.mrf.mxu0
        %v821 = vadd.f32 %v726, %v820
        %822 = vmatmul.f32.gmra.mxu0 %v702
        %v823 = vpop.f32.mrf.mxu0
        %v824 = vadd.f32 %v726, %v823
        %825 = vmatmul.f32.gmra.mxu0 %v703
        %v826 = vpop.f32.mrf.mxu0
        %v827 = vadd.f32 %v726, %v826
        %828 = vmatmul.f32.gmra.mxu0 %v704
        %v829 = vpop.f32.mrf.mxu0
        %v830 = vadd.f32 %v726, %v829
        %831 = vmatmul.f32.gmra.mxu0 %v705
        %v832 = vpop.f32.mrf.mxu0
        %v833 = vadd.f32 %v726, %v832
        %834 = vmatmul.f32.gmra.mxu0 %v706
        %v835 = vpop.f32.mrf.mxu0
        %v836 = vadd.f32 %v726, %v835
        %837 = vmatmul.f32.gmra.mxu0 %v707
        %v838 = vpop.f32.mrf.mxu0
        %v839 = vadd.f32 %v726, %v838
        %840 = vdwg.mxu0
        %v841 = vld [vmem:[%s571] sm:$0xff]
        %v842 = vld [vmem:[%s571 + $0x8] sm:$0xff]
        %v843 = vld [vmem:[%s571 + $0x10] sm:$0xff]
        %v844 = vld [vmem:[%s571 + $0x18] sm:$0xff]
        %v845 = vld [vmem:[%s571 + $0x20] sm:$0xff]
        %v846 = vld [vmem:[%s571 + $0x28] sm:$0xff]
        %v847 = vld [vmem:[%s571 + $0x30] sm:$0xff]
        %v848 = vld [vmem:[%s571 + $0x38] sm:$0xff]
        %v849 = vld [vmem:[%s571 + $0x40] sm:$0xff]
        %v850 = vld [vmem:[%s571 + $0x48] sm:$0xff]
        %v851 = vld [vmem:[%s571 + $0x50] sm:$0xff]
        %v852 = vld [vmem:[%s571 + $0x58] sm:$0xff]
        %v853 = vld [vmem:[%s571 + $0x60] sm:$0xff]
        %v854 = vld [vmem:[%s571 + $0x68] sm:$0xff]
        %v855 = vld [vmem:[%s571 + $0x70] sm:$0xff]
        %v856 = vld [vmem:[%s571 + $0x78] sm:$0xff]
        %v857 = vld [vmem:[%s571 + $0x80] sm:$0xff]
        %v858 = vld [vmem:[%s571 + $0x88] sm:$0xff]
        %v859 = vld [vmem:[%s571 + $0x90] sm:$0xff]
        %v860 = vld [vmem:[%s571 + $0x98] sm:$0xff]
        %v861 = vld [vmem:[%s571 + $0xa0] sm:$0xff]
        %v862 = vld [vmem:[%s571 + $0xa8] sm:$0xff]
        %v863 = vld [vmem:[%s571 + $0xb0] sm:$0xff]
        %v864 = vld [vmem:[%s571 + $0xb8] sm:$0xff]
        %v865 = vld [vmem:[%s571 + $0xc0] sm:$0xff]
        %v866 = vld [vmem:[%s571 + $0xc8] sm:$0xff]
        %v867 = vld [vmem:[%s571 + $0xd0] sm:$0xff]
        %v868 = vld [vmem:[%s571 + $0xd8] sm:$0xff]
        %v869 = vld [vmem:[%s571 + $0xe0] sm:$0xff]
        %v870 = vld [vmem:[%s571 + $0xe8] sm:$0xff]
        %v871 = vld [vmem:[%s571 + $0xf0] sm:$0xff]
        %v872 = vld [vmem:[%s571 + $0xf8] sm:$0xff]
        %v873 = vld [vmem:[#allocation11] sm:$0xff]
        %v874 = vld [vmem:[#allocation11 + $0x8] sm:$0xff]
        %v875 = vld [vmem:[#allocation11 + $0x10] sm:$0xff]
        %v876 = vld [vmem:[#allocation11 + $0x18] sm:$0xff]
        %v877 = vld [vmem:[#allocation11 + $0x20] sm:$0xff]
        %v878 = vld [vmem:[#allocation11 + $0x28] sm:$0xff]
        %v879 = vld [vmem:[#allocation11 + $0x30] sm:$0xff]
        %v880 = vld [vmem:[#allocation11 + $0x38] sm:$0xff]
        %v881 = vld [vmem:[#allocation11 + $0x40] sm:$0xff]
        %v882 = vld [vmem:[#allocation11 + $0x48] sm:$0xff]
        %v883 = vld [vmem:[#allocation11 + $0x50] sm:$0xff]
        %v884 = vld [vmem:[#allocation11 + $0x58] sm:$0xff]
        %v885 = vld [vmem:[#allocation11 + $0x60] sm:$0xff]
        %v886 = vld [vmem:[#allocation11 + $0x68] sm:$0xff]
        %v887 = vld [vmem:[#allocation11 + $0x70] sm:$0xff]
        %v888 = vld [vmem:[#allocation11 + $0x78] sm:$0xff]
        %s889 = scalar_lea.vmem [#allocation13], 1
        %v890 = vld [vmem:[%s889] sm:$0x1]
        %v892 = vperm.slane %v890, 0
        %894 = vmatpush.msra.mxu0 %v888
        %895 = vmatpush.msra.mxu0 %v887
        %896 = vmatpush.msra.mxu0 %v886
        %897 = vmatpush.msra.mxu0 %v885
        %898 = vmatpush.msra.mxu0 %v884
        %899 = vmatpush.msra.mxu0 %v883
        %900 = vmatpush.msra.mxu0 %v882
        %901 = vmatpush.msra.mxu0 %v881
        %902 = vmatpush.msra.mxu0 %v880
        %903 = vmatpush.msra.mxu0 %v879
        %904 = vmatpush.msra.mxu0 %v878
        %905 = vmatpush.msra.mxu0 %v877
        %906 = vmatpush.msra.mxu0 %v876
        %907 = vmatpush.msra.mxu0 %v875
        %908 = vmatpush.msra.mxu0 %v874
        %909 = vmatpush.msra.mxu0 %v873
        %910 = vmatmul.f32.gmra.mxu0 %v746
        %v911 = vpop.f32.mrf.mxu0
        %v912 = vadd.f32 %v892, %v911
        %913 = vmatmul.f32.gmra.mxu0 %v749
        %v914 = vpop.f32.mrf.mxu0
        %v915 = vadd.f32 %v892, %v914
        %916 = vmatmul.f32.gmra.mxu0 %v752
        %v917 = vpop.f32.mrf.mxu0
        %v918 = vadd.f32 %v892, %v917
        %919 = vmatmul.f32.gmra.mxu0 %v755
        %v920 = vpop.f32.mrf.mxu0
        %v921 = vadd.f32 %v892, %v920
        %922 = vmatmul.f32.gmra.mxu0 %v758
        %v923 = vpop.f32.mrf.mxu0
        %v924 = vadd.f32 %v892, %v923
        %925 = vmatmul.f32.gmra.mxu0 %v761
        %v926 = vpop.f32.mrf.mxu0
        %v927 = vadd.f32 %v892, %v926
        %928 = vmatmul.f32.gmra.mxu0 %v764
        %v929 = vpop.f32.mrf.mxu0
        %v930 = vadd.f32 %v892, %v929
        %931 = vmatmul.f32.gmra.mxu0 %v767
        %v932 = vpop.f32.mrf.mxu0
        %v933 = vadd.f32 %v892, %v932
        %934 = vmatmul.f32.gmra.mxu0 %v770
        %v935 = vpop.f32.mrf.mxu0
        %v936 = vadd.f32 %v892, %v935
        %937 = vmatmul.f32.gmra.mxu0 %v773
        %v938 = vpop.f32.mrf.mxu0
        %v939 = vadd.f32 %v892, %v938
        %940 = vmatmul.f32.gmra.mxu0 %v776
        %v941 = vpop.f32.mrf.mxu0
        %v942 = vadd.f32 %v892, %v941
        %943 = vmatmul.f32.gmra.mxu0 %v779
        %v944 = vpop.f32.mrf.mxu0
        %v945 = vadd.f32 %v892, %v944
        %946 = vmatmul.f32.gmra.mxu0 %v782
        %v947 = vpop.f32.mrf.mxu0
        %v948 = vadd.f32 %v892, %v947
        %949 = vmatmul.f32.gmra.mxu0 %v785
        %v950 = vpop.f32.mrf.mxu0
        %v951 = vadd.f32 %v892, %v950
        %952 = vmatmul.f32.gmra.mxu0 %v788
        %v953 = vpop.f32.mrf.mxu0
        %v954 = vadd.f32 %v892, %v953
        %955 = vmatmul.f32.gmra.mxu0 %v791
        %v956 = vpop.f32.mrf.mxu0
        %v957 = vadd.f32 %v892, %v956
        %958 = vmatmul.f32.gmra.mxu0 %v794
        %v959 = vpop.f32.mrf.mxu0
        %v960 = vadd.f32 %v892, %v959
        %961 = vmatmul.f32.gmra.mxu0 %v797
        %v962 = vpop.f32.mrf.mxu0
        %v963 = vadd.f32 %v892, %v962
        %964 = vmatmul.f32.gmra.mxu0 %v800
        %v965 = vpop.f32.mrf.mxu0
        %v966 = vadd.f32 %v892, %v965
        %967 = vmatmul.f32.gmra.mxu0 %v803
        %v968 = vpop.f32.mrf.mxu0
        %v969 = vadd.f32 %v892, %v968
        %970 = vmatmul.f32.gmra.mxu0 %v806
        %v971 = vpop.f32.mrf.mxu0
        %v972 = vadd.f32 %v892, %v971
        %973 = vmatmul.f32.gmra.mxu0 %v809
        %v974 = vpop.f32.mrf.mxu0
        %v975 = vadd.f32 %v892, %v974
        %976 = vmatmul.f32.gmra.mxu0 %v812
        %v977 = vpop.f32.mrf.mxu0
        %v978 = vadd.f32 %v892, %v977
        %979 = vmatmul.f32.gmra.mxu0 %v815
        %v980 = vpop.f32.mrf.mxu0
        %v981 = vadd.f32 %v892, %v980
        %982 = vmatmul.f32.gmra.mxu0 %v818
        %v983 = vpop.f32.mrf.mxu0
        %v984 = vadd.f32 %v892, %v983
        %985 = vmatmul.f32.gmra.mxu0 %v821
        %v986 = vpop.f32.mrf.mxu0
        %v987 = vadd.f32 %v892, %v986
        %988 = vmatmul.f32.gmra.mxu0 %v824
        %v989 = vpop.f32.mrf.mxu0
        %v990 = vadd.f32 %v892, %v989
        %991 = vmatmul.f32.gmra.mxu0 %v827
        %v992 = vpop.f32.mrf.mxu0
        %v993 = vadd.f32 %v892, %v992
        %994 = vmatmul.f32.gmra.mxu0 %v830
        %v995 = vpop.f32.mrf.mxu0
        %v996 = vadd.f32 %v892, %v995
        %997 = vmatmul.f32.gmra.mxu0 %v833
        %v998 = vpop.f32.mrf.mxu0
        %v999 = vadd.f32 %v892, %v998
        %1000 = vmatmul.f32.gmra.mxu0 %v836
        %v1001 = vpop.f32.mrf.mxu0
        %v1002 = vadd.f32 %v892, %v1001
        %1003 = vmatmul.f32.gmra.mxu0 %v839
        %v1004 = vpop.f32.mrf.mxu0
        %v1005 = vadd.f32 %v892, %v1004
        %1006 = vdwg.mxu0
        %1007 = vmatpush.msra.mxu0 %v957
        %1008 = vmatpush.msra.mxu0 %v954
        %1009 = vmatpush.msra.mxu0 %v951
        %1010 = vmatpush.msra.mxu0 %v948
        %1011 = vmatpush.msra.mxu0 %v945
        %1012 = vmatpush.msra.mxu0 %v942
        %1013 = vmatpush.msra.mxu0 %v939
        %1014 = vmatpush.msra.mxu0 %v936
        %1015 = vmatpush.msra.mxu0 %v933
        %1016 = vmatpush.msra.mxu0 %v930
        %1017 = vmatpush.msra.mxu0 %v927
        %1018 = vmatpush.msra.mxu0 %v924
        %1019 = vmatpush.msra.mxu0 %v921
        %1020 = vmatpush.msra.mxu0 %v918
        %1021 = vmatpush.msra.mxu0 %v915
        %1022 = vmatpush.msra.mxu0 %v912
        %1023 = vmatmul.f32.gmra.mxu0 %v841
        %v1024 = vpop.f32.mrf.mxu0
        %v1025 = vadd.f32 0.0, %v1024
        %1026 = vmatmul.f32.gmra.mxu0 %v842
        %v1027 = vpop.f32.mrf.mxu0
        %v1028 = vadd.f32 0.0, %v1027
        %1029 = vmatmul.f32.gmra.mxu0 %v843
        %v1030 = vpop.f32.mrf.mxu0
        %v1031 = vadd.f32 0.0, %v1030
        %1032 = vmatmul.f32.gmra.mxu0 %v844
        %v1033 = vpop.f32.mrf.mxu0
        %v1034 = vadd.f32 0.0, %v1033
        %1035 = vmatmul.f32.gmra.mxu0 %v845
        %v1036 = vpop.f32.mrf.mxu0
        %v1037 = vadd.f32 0.0, %v1036
        %1038 = vmatmul.f32.gmra.mxu0 %v846
        %v1039 = vpop.f32.mrf.mxu0
        %v1040 = vadd.f32 0.0, %v1039
        %1041 = vmatmul.f32.gmra.mxu0 %v847
        %v1042 = vpop.f32.mrf.mxu0
        %v1043 = vadd.f32 0.0, %v1042
        %1044 = vmatmul.f32.gmra.mxu0 %v848
        %v1045 = vpop.f32.mrf.mxu0
        %v1046 = vadd.f32 0.0, %v1045
        %1047 = vmatmul.f32.gmra.mxu0 %v849
        %v1048 = vpop.f32.mrf.mxu0
        %v1049 = vadd.f32 0.0, %v1048
        %1050 = vmatmul.f32.gmra.mxu0 %v850
        %v1051 = vpop.f32.mrf.mxu0
        %v1052 = vadd.f32 0.0, %v1051
        %1053 = vmatmul.f32.gmra.mxu0 %v851
        %v1054 = vpop.f32.mrf.mxu0
        %v1055 = vadd.f32 0.0, %v1054
        %1056 = vmatmul.f32.gmra.mxu0 %v852
        %v1057 = vpop.f32.mrf.mxu0
        %v1058 = vadd.f32 0.0, %v1057
        %1059 = vmatmul.f32.gmra.mxu0 %v853
        %v1060 = vpop.f32.mrf.mxu0
        %v1061 = vadd.f32 0.0, %v1060
        %1062 = vmatmul.f32.gmra.mxu0 %v854
        %v1063 = vpop.f32.mrf.mxu0
        %v1064 = vadd.f32 0.0, %v1063
        %1065 = vmatmul.f32.gmra.mxu0 %v855
        %v1066 = vpop.f32.mrf.mxu0
        %v1067 = vadd.f32 0.0, %v1066
        %1068 = vmatmul.f32.gmra.mxu0 %v856
        %v1069 = vpop.f32.mrf.mxu0
        %v1070 = vadd.f32 0.0, %v1069
        %1071 = vdwg.mxu0
        %1072 = vmatpush.msra.mxu0 %v1005
        %1073 = vmatpush.msra.mxu0 %v1002
        %1074 = vmatpush.msra.mxu0 %v999
        %1075 = vmatpush.msra.mxu0 %v996
        %1076 = vmatpush.msra.mxu0 %v993
        %1077 = vmatpush.msra.mxu0 %v990
        %1078 = vmatpush.msra.mxu0 %v987
        %1079 = vmatpush.msra.mxu0 %v984
        %1080 = vmatpush.msra.mxu0 %v981
        %1081 = vmatpush.msra.mxu0 %v978
        %1082 = vmatpush.msra.mxu0 %v975
        %1083 = vmatpush.msra.mxu0 %v972
        %1084 = vmatpush.msra.mxu0 %v969
        %1085 = vmatpush.msra.mxu0 %v966
        %1086 = vmatpush.msra.mxu0 %v963
        %1087 = vmatpush.msra.mxu0 %v960
        %1088 = vmatmul.f32.gmra.mxu0 %v857
        %v1089 = vpop.f32.mrf.mxu0
        %v1090 = vadd.f32 0.0, %v1089
        %1091 = vmatmul.f32.gmra.mxu0 %v858
        %v1092 = vpop.f32.mrf.mxu0
        %v1093 = vadd.f32 0.0, %v1092
        %1094 = vmatmul.f32.gmra.mxu0 %v859
        %v1095 = vpop.f32.mrf.mxu0
        %v1096 = vadd.f32 0.0, %v1095
        %1097 = vmatmul.f32.gmra.mxu0 %v860
        %v1098 = vpop.f32.mrf.mxu0
        %v1099 = vadd.f32 0.0, %v1098
        %1100 = vmatmul.f32.gmra.mxu0 %v861
        %v1101 = vpop.f32.mrf.mxu0
        %v1102 = vadd.f32 0.0, %v1101
        %1103 = vmatmul.f32.gmra.mxu0 %v862
        %v1104 = vpop.f32.mrf.mxu0
        %v1105 = vadd.f32 0.0, %v1104
        %1106 = vmatmul.f32.gmra.mxu0 %v863
        %v1107 = vpop.f32.mrf.mxu0
        %v1108 = vadd.f32 0.0, %v1107
        %1109 = vmatmul.f32.gmra.mxu0 %v864
        %v1110 = vpop.f32.mrf.mxu0
        %v1111 = vadd.f32 0.0, %v1110
        %1112 = vmatmul.f32.gmra.mxu0 %v865
        %v1113 = vpop.f32.mrf.mxu0
        %v1114 = vadd.f32 0.0, %v1113
        %1115 = vmatmul.f32.gmra.mxu0 %v866
        %v1116 = vpop.f32.mrf.mxu0
        %v1117 = vadd.f32 0.0, %v1116
        %1118 = vmatmul.f32.gmra.mxu0 %v867
        %v1119 = vpop.f32.mrf.mxu0
        %v1120 = vadd.f32 0.0, %v1119
        %1121 = vmatmul.f32.gmra.mxu0 %v868
        %v1122 = vpop.f32.mrf.mxu0
        %v1123 = vadd.f32 0.0, %v1122
        %1124 = vmatmul.f32.gmra.mxu0 %v869
        %v1125 = vpop.f32.mrf.mxu0
        %v1126 = vadd.f32 0.0, %v1125
        %1127 = vmatmul.f32.gmra.mxu0 %v870
        %v1128 = vpop.f32.mrf.mxu0
        %v1129 = vadd.f32 0.0, %v1128
        %1130 = vmatmul.f32.gmra.mxu0 %v871
        %v1131 = vpop.f32.mrf.mxu0
        %v1132 = vadd.f32 0.0, %v1131
        %1133 = vmatmul.f32.gmra.mxu0 %v872
        %v1134 = vpop.f32.mrf.mxu0
        %v1135 = vadd.f32 0.0, %v1134
        %1136 = vdwg.mxu0
        %v1137 = vld [vmem:[#allocation8] sm:$0xff]
        %v1138 = vld [vmem:[#allocation8 + $0x8] sm:$0xff]
        %v1139 = vmul.f32 %v1025, %v1137
        %v1140 = vmul.f32 %v1028, %v1138
        %v1141 = vmul.f32 %v1031, %v1137
        %v1142 = vmul.f32 %v1034, %v1138
        %v1143 = vmul.f32 %v1037, %v1137
        %v1144 = vmul.f32 %v1040, %v1138
        %v1145 = vmul.f32 %v1043, %v1137
        %v1146 = vmul.f32 %v1046, %v1138
        %v1147 = vmul.f32 %v1049, %v1137
        %v1148 = vmul.f32 %v1052, %v1138
        %v1149 = vmul.f32 %v1055, %v1137
        %v1150 = vmul.f32 %v1058, %v1138
        %v1151 = vmul.f32 %v1061, %v1137
        %v1152 = vmul.f32 %v1064, %v1138
        %v1153 = vmul.f32 %v1067, %v1137
        %v1154 = vmul.f32 %v1070, %v1138
        %v1155 = vmul.f32 %v1090, %v1137
        %v1156 = vmul.f32 %v1093, %v1138
        %v1157 = vmul.f32 %v1096, %v1137
        %v1158 = vmul.f32 %v1099, %v1138
        %v1159 = vmul.f32 %v1102, %v1137
        %v1160 = vmul.f32 %v1105, %v1138
        %v1161 = vmul.f32 %v1108, %v1137
        %v1162 = vmul.f32 %v1111, %v1138
        %v1163 = vmul.f32 %v1114, %v1137
        %v1164 = vmul.f32 %v1117, %v1138
        %v1165 = vmul.f32 %v1120, %v1137
        %v1166 = vmul.f32 %v1123, %v1138
        %v1167 = vmul.f32 %v1126, %v1137
        %v1168 = vmul.f32 %v1129, %v1138
        %v1169 = vmul.f32 %v1132, %v1137
        %v1170 = vmul.f32 %v1135, %v1138
        %s1171 = scalar_lea.vmem [#allocation8], 32
        %v1172 = vld [vmem:[%s1171] sm:$0xff]
        %v1173 = vld [vmem:[%s1171 + $0x8] sm:$0xff]
        %v1174 = vadd.f32 %v1139, %v1172
        %v1175 = vadd.f32 %v1140, %v1173
        %v1176 = vadd.f32 %v1141, %v1172
        %v1177 = vadd.f32 %v1142, %v1173
        %v1178 = vadd.f32 %v1143, %v1172
        %v1179 = vadd.f32 %v1144, %v1173
        %v1180 = vadd.f32 %v1145, %v1172
        %v1181 = vadd.f32 %v1146, %v1173
        %v1182 = vadd.f32 %v1147, %v1172
        %v1183 = vadd.f32 %v1148, %v1173
        %v1184 = vadd.f32 %v1149, %v1172
        %v1185 = vadd.f32 %v1150, %v1173
        %v1186 = vadd.f32 %v1151, %v1172
        %v1187 = vadd.f32 %v1152, %v1173
        %v1188 = vadd.f32 %v1153, %v1172
        %v1189 = vadd.f32 %v1154, %v1173
        %v1190 = vadd.f32 %v1155, %v1172
        %v1191 = vadd.f32 %v1156, %v1173
        %v1192 = vadd.f32 %v1157, %v1172
        %v1193 = vadd.f32 %v1158, %v1173
        %v1194 = vadd.f32 %v1159, %v1172
        %v1195 = vadd.f32 %v1160, %v1173
        %v1196 = vadd.f32 %v1161, %v1172
        %v1197 = vadd.f32 %v1162, %v1173
        %v1198 = vadd.f32 %v1163, %v1172
        %v1199 = vadd.f32 %v1164, %v1173
        %v1200 = vadd.f32 %v1165, %v1172
        %v1201 = vadd.f32 %v1166, %v1173
        %v1202 = vadd.f32 %v1167, %v1172
        %v1203 = vadd.f32 %v1168, %v1173
        %v1204 = vadd.f32 %v1169, %v1172
        %v1205 = vadd.f32 %v1170, %v1173
        %v1206 = vmax.f32 %v1174, 0.0
        %v1207 = vmax.f32 %v1175, 0.0
        %v1208 = vmax.f32 %v1176, 0.0
        %v1209 = vmax.f32 %v1177, 0.0
        %v1210 = vmax.f32 %v1178, 0.0
        %v1211 = vmax.f32 %v1179, 0.0
        %v1212 = vmax.f32 %v1180, 0.0
        %v1213 = vmax.f32 %v1181, 0.0
        %v1214 = vmax.f32 %v1182, 0.0
        %v1215 = vmax.f32 %v1183, 0.0
        %v1216 = vmax.f32 %v1184, 0.0
        %v1217 = vmax.f32 %v1185, 0.0
        %v1218 = vmax.f32 %v1186, 0.0
        %v1219 = vmax.f32 %v1187, 0.0
        %v1220 = vmax.f32 %v1188, 0.0
        %v1221 = vmax.f32 %v1189, 0.0
        %v1222 = vmax.f32 %v1190, 0.0
        %v1223 = vmax.f32 %v1191, 0.0
        %v1224 = vmax.f32 %v1192, 0.0
        %v1225 = vmax.f32 %v1193, 0.0
        %v1226 = vmax.f32 %v1194, 0.0
        %v1227 = vmax.f32 %v1195, 0.0
        %v1228 = vmax.f32 %v1196, 0.0
        %v1229 = vmax.f32 %v1197, 0.0
        %v1230 = vmax.f32 %v1198, 0.0
        %v1231 = vmax.f32 %v1199, 0.0
        %v1232 = vmax.f32 %v1200, 0.0
        %v1233 = vmax.f32 %v1201, 0.0
        %v1234 = vmax.f32 %v1202, 0.0
        %v1235 = vmax.f32 %v1203, 0.0
        %v1236 = vmax.f32 %v1204, 0.0
        %v1237 = vmax.f32 %v1205, 0.0
        %s1238 = scalar_lea.vmem [#allocation11], 128
        %v1239 = vld [vmem:[%s1238] sm:$0xff]
        %v1240 = vld [vmem:[%s1238 + $0x8] sm:$0xff]
        %v1241 = vld [vmem:[%s1238 + $0x10] sm:$0xff]
        %v1242 = vld [vmem:[%s1238 + $0x18] sm:$0xff]
        %v1243 = vld [vmem:[%s1238 + $0x20] sm:$0xff]
        %v1244 = vld [vmem:[%s1238 + $0x28] sm:$0xff]
        %v1245 = vld [vmem:[%s1238 + $0x30] sm:$0xff]
        %v1246 = vld [vmem:[%s1238 + $0x38] sm:$0xff]
        %v1247 = vld [vmem:[%s1238 + $0x40] sm:$0xff]
        %v1248 = vld [vmem:[%s1238 + $0x48] sm:$0xff]
        %v1249 = vld [vmem:[%s1238 + $0x50] sm:$0xff]
        %v1250 = vld [vmem:[%s1238 + $0x58] sm:$0xff]
        %v1251 = vld [vmem:[%s1238 + $0x60] sm:$0xff]
        %v1252 = vld [vmem:[%s1238 + $0x68] sm:$0xff]
        %v1253 = vld [vmem:[%s1238 + $0x70] sm:$0xff]
        %v1254 = vld [vmem:[%s1238 + $0x78] sm:$0xff]
        %s1255 = scalar_lea.vmem [#allocation13], 2
        %v1256 = vld [vmem:[%s1255] sm:$0x1]
        %v1258 = vperm.slane %v1256, 0
        %1260 = vmatpush.msra.mxu0 %v1254
        %1261 = vmatpush.msra.mxu0 %v1253
        %1262 = vmatpush.msra.mxu0 %v1252
        %1263 = vmatpush.msra.mxu0 %v1251
        %1264 = vmatpush.msra.mxu0 %v1250
        %1265 = vmatpush.msra.mxu0 %v1249
        %1266 = vmatpush.msra.mxu0 %v1248
        %1267 = vmatpush.msra.mxu0 %v1247
        %1268 = vmatpush.msra.mxu0 %v1246
        %1269 = vmatpush.msra.mxu0 %v1245
        %1270 = vmatpush.msra.mxu0 %v1244
        %1271 = vmatpush.msra.mxu0 %v1243
        %1272 = vmatpush.msra.mxu0 %v1242
        %1273 = vmatpush.msra.mxu0 %v1241
        %1274 = vmatpush.msra.mxu0 %v1240
        %1275 = vmatpush.msra.mxu0 %v1239
        %1276 = vmatmul.f32.gmra.mxu0 %v1206
        %v1277 = vpop.f32.mrf.mxu0
        %v1278 = vadd.f32 %v1258, %v1277
        %1279 = vmatmul.f32.gmra.mxu0 %v1207
        %v1280 = vpop.f32.mrf.mxu0
        %v1281 = vadd.f32 %v1258, %v1280
        %1282 = vmatmul.f32.gmra.mxu0 %v1208
        %v1283 = vpop.f32.mrf.mxu0
        %v1284 = vadd.f32 %v1258, %v1283
        %1285 = vmatmul.f32.gmra.mxu0 %v1209
        %v1286 = vpop.f32.mrf.mxu0
        %v1287 = vadd.f32 %v1258, %v1286
        %1288 = vmatmul.f32.gmra.mxu0 %v1210
        %v1289 = vpop.f32.mrf.mxu0
        %v1290 = vadd.f32 %v1258, %v1289
        %1291 = vmatmul.f32.gmra.mxu0 %v1211
        %v1292 = vpop.f32.mrf.mxu0
        %v1293 = vadd.f32 %v1258, %v1292
        %1294 = vmatmul.f32.gmra.mxu0 %v1212
        %v1295 = vpop.f32.mrf.mxu0
        %v1296 = vadd.f32 %v1258, %v1295
        %1297 = vmatmul.f32.gmra.mxu0 %v1213
        %v1298 = vpop.f32.mrf.mxu0
        %v1299 = vadd.f32 %v1258, %v1298
        %1300 = vmatmul.f32.gmra.mxu0 %v1214
        %v1301 = vpop.f32.mrf.mxu0
        %v1302 = vadd.f32 %v1258, %v1301
        %1303 = vmatmul.f32.gmra.mxu0 %v1215
        %v1304 = vpop.f32.mrf.mxu0
        %v1305 = vadd.f32 %v1258, %v1304
        %1306 = vmatmul.f32.gmra.mxu0 %v1216
        %v1307 = vpop.f32.mrf.mxu0
        %v1308 = vadd.f32 %v1258, %v1307
        %1309 = vmatmul.f32.gmra.mxu0 %v1217
        %v1310 = vpop.f32.mrf.mxu0
        %v1311 = vadd.f32 %v1258, %v1310
        %1312 = vmatmul.f32.gmra.mxu0 %v1218
        %v1313 = vpop.f32.mrf.mxu0
        %v1314 = vadd.f32 %v1258, %v1313
        %1315 = vmatmul.f32.gmra.mxu0 %v1219
        %v1316 = vpop.f32.mrf.mxu0
        %v1317 = vadd.f32 %v1258, %v1316
        %1318 = vmatmul.f32.gmra.mxu0 %v1220
        %v1319 = vpop.f32.mrf.mxu0
        %v1320 = vadd.f32 %v1258, %v1319
        %1321 = vmatmul.f32.gmra.mxu0 %v1221
        %v1322 = vpop.f32.mrf.mxu0
        %v1323 = vadd.f32 %v1258, %v1322
        %1324 = vmatmul.f32.gmra.mxu0 %v1222
        %v1325 = vpop.f32.mrf.mxu0
        %v1326 = vadd.f32 %v1258, %v1325
        %1327 = vmatmul.f32.gmra.mxu0 %v1223
        %v1328 = vpop.f32.mrf.mxu0
        %v1329 = vadd.f32 %v1258, %v1328
        %1330 = vmatmul.f32.gmra.mxu0 %v1224
        %v1331 = vpop.f32.mrf.mxu0
        %v1332 = vadd.f32 %v1258, %v1331
        %1333 = vmatmul.f32.gmra.mxu0 %v1225
        %v1334 = vpop.f32.mrf.mxu0
        %v1335 = vadd.f32 %v1258, %v1334
        %1336 = vmatmul.f32.gmra.mxu0 %v1226
        %v1337 = vpop.f32.mrf.mxu0
        %v1338 = vadd.f32 %v1258, %v1337
        %1339 = vmatmul.f32.gmra.mxu0 %v1227
        %v1340 = vpop.f32.mrf.mxu0
        %v1341 = vadd.f32 %v1258, %v1340
        %1342 = vmatmul.f32.gmra.mxu0 %v1228
        %v1343 = vpop.f32.mrf.mxu0
        %v1344 = vadd.f32 %v1258, %v1343
        %1345 = vmatmul.f32.gmra.mxu0 %v1229
        %v1346 = vpop.f32.mrf.mxu0
        %v1347 = vadd.f32 %v1258, %v1346
        %1348 = vmatmul.f32.gmra.mxu0 %v1230
        %v1349 = vpop.f32.mrf.mxu0
        %v1350 = vadd.f32 %v1258, %v1349
        %1351 = vmatmul.f32.gmra.mxu0 %v1231
        %v1352 = vpop.f32.mrf.mxu0
        %v1353 = vadd.f32 %v1258, %v1352
        %1354 = vmatmul.f32.gmra.mxu0 %v1232
        %v1355 = vpop.f32.mrf.mxu0
        %v1356 = vadd.f32 %v1258, %v1355
        %1357 = vmatmul.f32.gmra.mxu0 %v1233
        %v1358 = vpop.f32.mrf.mxu0
        %v1359 = vadd.f32 %v1258, %v1358
        %1360 = vmatmul.f32.gmra.mxu0 %v1234
        %v1361 = vpop.f32.mrf.mxu0
        %v1362 = vadd.f32 %v1258, %v1361
        %1363 = vmatmul.f32.gmra.mxu0 %v1235
        %v1364 = vpop.f32.mrf.mxu0
        %v1365 = vadd.f32 %v1258, %v1364
        %1366 = vmatmul.f32.gmra.mxu0 %v1236
        %v1367 = vpop.f32.mrf.mxu0
        %v1368 = vadd.f32 %v1258, %v1367
        %1369 = vmatmul.f32.gmra.mxu0 %v1237
        %v1370 = vpop.f32.mrf.mxu0
        %v1371 = vadd.f32 %v1258, %v1370
        %1372 = vdwg.mxu0
        %1373 = vmatpush.msra.mxu0 %v1323
        %1374 = vmatpush.msra.mxu0 %v1320
        %1375 = vmatpush.msra.mxu0 %v1317
        %1376 = vmatpush.msra.mxu0 %v1314
        %1377 = vmatpush.msra.mxu0 %v1311
        %1378 = vmatpush.msra.mxu0 %v1308
        %1379 = vmatpush.msra.mxu0 %v1305
        %1380 = vmatpush.msra.mxu0 %v1302
        %1381 = vmatpush.msra.mxu0 %v1299
        %1382 = vmatpush.msra.mxu0 %v1296
        %1383 = vmatpush.msra.mxu0 %v1293
        %1384 = vmatpush.msra.mxu0 %v1290
        %1385 = vmatpush.msra.mxu0 %v1287
        %1386 = vmatpush.msra.mxu0 %v1284
        %1387 = vmatpush.msra.mxu0 %v1281
        %1388 = vmatpush.msra.mxu0 %v1278
        %1389 = vmatmul.f32.gmra.mxu0 %v841
        %v1390 = vpop.f32.mrf.mxu0
        %v1391 = vadd.f32 0.0, %v1390
        %1392 = vmatmul.f32.gmra.mxu0 %v842
        %v1393 = vpop.f32.mrf.mxu0
        %v1394 = vadd.f32 0.0, %v1393
        %1395 = vmatmul.f32.gmra.mxu0 %v843
        %v1396 = vpop.f32.mrf.mxu0
        %v1397 = vadd.f32 0.0, %v1396
        %1398 = vmatmul.f32.gmra.mxu0 %v844
        %v1399 = vpop.f32.mrf.mxu0
        %v1400 = vadd.f32 0.0, %v1399
        %1401 = vmatmul.f32.gmra.mxu0 %v845
        %v1402 = vpop.f32.mrf.mxu0
        %v1403 = vadd.f32 0.0, %v1402
        %1404 = vmatmul.f32.gmra.mxu0 %v846
        %v1405 = vpop.f32.mrf.mxu0
        %v1406 = vadd.f32 0.0, %v1405
        %1407 = vmatmul.f32.gmra.mxu0 %v847
        %v1408 = vpop.f32.mrf.mxu0
        %v1409 = vadd.f32 0.0, %v1408
        %1410 = vmatmul.f32.gmra.mxu0 %v848
        %v1411 = vpop.f32.mrf.mxu0
        %v1412 = vadd.f32 0.0, %v1411
        %1413 = vmatmul.f32.gmra.mxu0 %v849
        %v1414 = vpop.f32.mrf.mxu0
        %v1415 = vadd.f32 0.0, %v1414
        %1416 = vmatmul.f32.gmra.mxu0 %v850
        %v1417 = vpop.f32.mrf.mxu0
        %v1418 = vadd.f32 0.0, %v1417
        %1419 = vmatmul.f32.gmra.mxu0 %v851
        %v1420 = vpop.f32.mrf.mxu0
        %v1421 = vadd.f32 0.0, %v1420
        %1422 = vmatmul.f32.gmra.mxu0 %v852
        %v1423 = vpop.f32.mrf.mxu0
        %v1424 = vadd.f32 0.0, %v1423
        %1425 = vmatmul.f32.gmra.mxu0 %v853
        %v1426 = vpop.f32.mrf.mxu0
        %v1427 = vadd.f32 0.0, %v1426
        %1428 = vmatmul.f32.gmra.mxu0 %v854
        %v1429 = vpop.f32.mrf.mxu0
        %v1430 = vadd.f32 0.0, %v1429
        %1431 = vmatmul.f32.gmra.mxu0 %v855
        %v1432 = vpop.f32.mrf.mxu0
        %v1433 = vadd.f32 0.0, %v1432
        %1434 = vmatmul.f32.gmra.mxu0 %v856
        %v1435 = vpop.f32.mrf.mxu0
        %v1436 = vadd.f32 0.0, %v1435
        %1437 = vdwg.mxu0
        %1438 = vmatpush.msra.mxu0 %v1371
        %1439 = vmatpush.msra.mxu0 %v1368
        %1440 = vmatpush.msra.mxu0 %v1365
        %1441 = vmatpush.msra.mxu0 %v1362
        %1442 = vmatpush.msra.mxu0 %v1359
        %1443 = vmatpush.msra.mxu0 %v1356
        %1444 = vmatpush.msra.mxu0 %v1353
        %1445 = vmatpush.msra.mxu0 %v1350
        %1446 = vmatpush.msra.mxu0 %v1347
        %1447 = vmatpush.msra.mxu0 %v1344
        %1448 = vmatpush.msra.mxu0 %v1341
        %1449 = vmatpush.msra.mxu0 %v1338
        %1450 = vmatpush.msra.mxu0 %v1335
        %1451 = vmatpush.msra.mxu0 %v1332
        %1452 = vmatpush.msra.mxu0 %v1329
        %1453 = vmatpush.msra.mxu0 %v1326
        %1454 = vmatmul.f32.gmra.mxu0 %v857
        %v1455 = vpop.f32.mrf.mxu0
        %v1456 = vadd.f32 0.0, %v1455
        %1457 = vmatmul.f32.gmra.mxu0 %v858
        %v1458 = vpop.f32.mrf.mxu0
        %v1459 = vadd.f32 0.0, %v1458
        %1460 = vmatmul.f32.gmra.mxu0 %v859
        %v1461 = vpop.f32.mrf.mxu0
        %v1462 = vadd.f32 0.0, %v1461
        %1463 = vmatmul.f32.gmra.mxu0 %v860
        %v1464 = vpop.f32.mrf.mxu0
        %v1465 = vadd.f32 0.0, %v1464
        %1466 = vmatmul.f32.gmra.mxu0 %v861
        %v1467 = vpop.f32.mrf.mxu0
        %v1468 = vadd.f32 0.0, %v1467
        %1469 = vmatmul.f32.gmra.mxu0 %v862
        %v1470 = vpop.f32.mrf.mxu0
        %v1471 = vadd.f32 0.0, %v1470
        %1472 = vmatmul.f32.gmra.mxu0 %v863
        %v1473 = vpop.f32.mrf.mxu0
        %v1474 = vadd.f32 0.0, %v1473
        %1475 = vmatmul.f32.gmra.mxu0 %v864
        %v1476 = vpop.f32.mrf.mxu0
        %v1477 = vadd.f32 0.0, %v1476
        %1478 = vmatmul.f32.gmra.mxu0 %v865
        %v1479 = vpop.f32.mrf.mxu0
        %v1480 = vadd.f32 0.0, %v1479
        %1481 = vmatmul.f32.gmra.mxu0 %v866
        %v1482 = vpop.f32.mrf.mxu0
        %v1483 = vadd.f32 0.0, %v1482
        %1484 = vmatmul.f32.gmra.mxu0 %v867
        %v1485 = vpop.f32.mrf.mxu0
        %v1486 = vadd.f32 0.0, %v1485
        %1487 = vmatmul.f32.gmra.mxu0 %v868
        %v1488 = vpop.f32.mrf.mxu0
        %v1489 = vadd.f32 0.0, %v1488
        %1490 = vmatmul.f32.gmra.mxu0 %v869
        %v1491 = vpop.f32.mrf.mxu0
        %v1492 = vadd.f32 0.0, %v1491
        %1493 = vmatmul.f32.gmra.mxu0 %v870
        %v1494 = vpop.f32.mrf.mxu0
        %v1495 = vadd.f32 0.0, %v1494
        %1496 = vmatmul.f32.gmra.mxu0 %v871
        %v1497 = vpop.f32.mrf.mxu0
        %v1498 = vadd.f32 0.0, %v1497
        %1499 = vmatmul.f32.gmra.mxu0 %v872
        %v1500 = vpop.f32.mrf.mxu0
        %v1501 = vadd.f32 0.0, %v1500
        %1502 = vdwg.mxu0
        %s1503 = scalar_lea.vmem [#allocation8], 16
        %v1504 = vld [vmem:[%s1503] sm:$0xff]
        %v1505 = vld [vmem:[%s1503 + $0x8] sm:$0xff]
        %v1506 = vmul.f32 %v1391, %v1504
        %v1507 = vmul.f32 %v1394, %v1505
        %v1508 = vmul.f32 %v1397, %v1504
        %v1509 = vmul.f32 %v1400, %v1505
        %v1510 = vmul.f32 %v1403, %v1504
        %v1511 = vmul.f32 %v1406, %v1505
        %v1512 = vmul.f32 %v1409, %v1504
        %v1513 = vmul.f32 %v1412, %v1505
        %v1514 = vmul.f32 %v1415, %v1504
        %v1515 = vmul.f32 %v1418, %v1505
        %v1516 = vmul.f32 %v1421, %v1504
        %v1517 = vmul.f32 %v1424, %v1505
        %v1518 = vmul.f32 %v1427, %v1504
        %v1519 = vmul.f32 %v1430, %v1505
        %v1520 = vmul.f32 %v1433, %v1504
        %v1521 = vmul.f32 %v1436, %v1505
        %v1522 = vmul.f32 %v1456, %v1504
        %v1523 = vmul.f32 %v1459, %v1505
        %v1524 = vmul.f32 %v1462, %v1504
        %v1525 = vmul.f32 %v1465, %v1505
        %v1526 = vmul.f32 %v1468, %v1504
        %v1527 = vmul.f32 %v1471, %v1505
        %v1528 = vmul.f32 %v1474, %v1504
        %v1529 = vmul.f32 %v1477, %v1505
        %v1530 = vmul.f32 %v1480, %v1504
        %v1531 = vmul.f32 %v1483, %v1505
        %v1532 = vmul.f32 %v1486, %v1504
        %v1533 = vmul.f32 %v1489, %v1505
        %v1534 = vmul.f32 %v1492, %v1504
        %v1535 = vmul.f32 %v1495, %v1505
        %v1536 = vmul.f32 %v1498, %v1504
        %v1537 = vmul.f32 %v1501, %v1505
        %s1538 = scalar_lea.vmem [#allocation8], 48
        %v1539 = vld [vmem:[%s1538] sm:$0xff]
        %v1540 = vld [vmem:[%s1538 + $0x8] sm:$0xff]
        %v1541 = vadd.f32 %v1506, %v1539
        %v1542 = vadd.f32 %v1507, %v1540
        %v1543 = vadd.f32 %v1508, %v1539
        %v1544 = vadd.f32 %v1509, %v1540
        %v1545 = vadd.f32 %v1510, %v1539
        %v1546 = vadd.f32 %v1511, %v1540
        %v1547 = vadd.f32 %v1512, %v1539
        %v1548 = vadd.f32 %v1513, %v1540
        %v1549 = vadd.f32 %v1514, %v1539
        %v1550 = vadd.f32 %v1515, %v1540
        %v1551 = vadd.f32 %v1516, %v1539
        %v1552 = vadd.f32 %v1517, %v1540
        %v1553 = vadd.f32 %v1518, %v1539
        %v1554 = vadd.f32 %v1519, %v1540
        %v1555 = vadd.f32 %v1520, %v1539
        %v1556 = vadd.f32 %v1521, %v1540
        %v1557 = vadd.f32 %v1522, %v1539
        %v1558 = vadd.f32 %v1523, %v1540
        %v1559 = vadd.f32 %v1524, %v1539
        %v1560 = vadd.f32 %v1525, %v1540
        %v1561 = vadd.f32 %v1526, %v1539
        %v1562 = vadd.f32 %v1527, %v1540
        %v1563 = vadd.f32 %v1528, %v1539
        %v1564 = vadd.f32 %v1529, %v1540
        %v1565 = vadd.f32 %v1530, %v1539
        %v1566 = vadd.f32 %v1531, %v1540
        %v1567 = vadd.f32 %v1532, %v1539
        %v1568 = vadd.f32 %v1533, %v1540
        %v1569 = vadd.f32 %v1534, %v1539
        %v1570 = vadd.f32 %v1535, %v1540
        %v1571 = vadd.f32 %v1536, %v1539
        %v1572 = vadd.f32 %v1537, %v1540
        %v1573 = vmax.f32 %v1541, 0.0
        %v1574 = vmax.f32 %v1542, 0.0
        %v1575 = vmax.f32 %v1543, 0.0
        %v1576 = vmax.f32 %v1544, 0.0
        %v1577 = vmax.f32 %v1545, 0.0
        %v1578 = vmax.f32 %v1546, 0.0
        %v1579 = vmax.f32 %v1547, 0.0
        %v1580 = vmax.f32 %v1548, 0.0
        %v1581 = vmax.f32 %v1549, 0.0
        %v1582 = vmax.f32 %v1550, 0.0
        %v1583 = vmax.f32 %v1551, 0.0
        %v1584 = vmax.f32 %v1552, 0.0
        %v1585 = vmax.f32 %v1553, 0.0
        %v1586 = vmax.f32 %v1554, 0.0
        %v1587 = vmax.f32 %v1555, 0.0
        %v1588 = vmax.f32 %v1556, 0.0
        %v1589 = vmax.f32 %v1557, 0.0
        %v1590 = vmax.f32 %v1558, 0.0
        %v1591 = vmax.f32 %v1559, 0.0
        %v1592 = vmax.f32 %v1560, 0.0
        %v1593 = vmax.f32 %v1561, 0.0
        %v1594 = vmax.f32 %v1562, 0.0
        %v1595 = vmax.f32 %v1563, 0.0
        %v1596 = vmax.f32 %v1564, 0.0
        %v1597 = vmax.f32 %v1565, 0.0
        %v1598 = vmax.f32 %v1566, 0.0
        %v1599 = vmax.f32 %v1567, 0.0
        %v1600 = vmax.f32 %v1568, 0.0
        %v1601 = vmax.f32 %v1569, 0.0
        %v1602 = vmax.f32 %v1570, 0.0
        %v1603 = vmax.f32 %v1571, 0.0
        %v1604 = vmax.f32 %v1572, 0.0
        %v1605 = vadd.f32 %v1573, %v1574
        %v1606 = vrot.slane %v1605, 4
        %v1607 = vadd.f32 %v1605, %v1606
        %v1608 = vrot.slane %v1607, 2
        %v1609 = vadd.f32 %v1607, %v1608
        %v1610 = vrot.slane %v1609, 1
        %v1611 = vadd.f32 %v1609, %v1610
        %v1612 = vadd.f32 %v1575, %v1576
        %v1613 = vrot.slane %v1612, 4
        %v1614 = vadd.f32 %v1612, %v1613
        %v1615 = vrot.slane %v1614, 2
        %v1616 = vadd.f32 %v1614, %v1615
        %v1617 = vrot.slane %v1616, 1
        %v1618 = vadd.f32 %v1616, %v1617
        %v1619 = vadd.f32 %v1577, %v1578
        %v1620 = vrot.slane %v1619, 4
        %v1621 = vadd.f32 %v1619, %v1620
        %v1622 = vrot.slane %v1621, 2
        %v1623 = vadd.f32 %v1621, %v1622
        %v1624 = vrot.slane %v1623, 1
        %v1625 = vadd.f32 %v1623, %v1624
        %v1626 = vadd.f32 %v1579, %v1580
        %v1627 = vrot.slane %v1626, 4
        %v1628 = vadd.f32 %v1626, %v1627
        %v1629 = vrot.slane %v1628, 2
        %v1630 = vadd.f32 %v1628, %v1629
        %v1631 = vrot.slane %v1630, 1
        %v1632 = vadd.f32 %v1630, %v1631
        %v1633 = vadd.f32 %v1581, %v1582
        %v1634 = vrot.slane %v1633, 4
        %v1635 = vadd.f32 %v1633, %v1634
        %v1636 = vrot.slane %v1635, 2
        %v1637 = vadd.f32 %v1635, %v1636
        %v1638 = vrot.slane %v1637, 1
        %v1639 = vadd.f32 %v1637, %v1638
        %v1640 = vadd.f32 %v1583, %v1584
        %v1641 = vrot.slane %v1640, 4
        %v1642 = vadd.f32 %v1640, %v1641
        %v1643 = vrot.slane %v1642, 2
        %v1644 = vadd.f32 %v1642, %v1643
        %v1645 = vrot.slane %v1644, 1
        %v1646 = vadd.f32 %v1644, %v1645
        %v1647 = vadd.f32 %v1585, %v1586
        %v1648 = vrot.slane %v1647, 4
        %v1649 = vadd.f32 %v1647, %v1648
        %v1650 = vrot.slane %v1649, 2
        %v1651 = vadd.f32 %v1649, %v1650
        %v1652 = vrot.slane %v1651, 1
        %v1653 = vadd.f32 %v1651, %v1652
        %v1654 = vadd.f32 %v1587, %v1588
        %v1655 = vrot.slane %v1654, 4
        %v1656 = vadd.f32 %v1654, %v1655
        %v1657 = vrot.slane %v1656, 2
        %v1658 = vadd.f32 %v1656, %v1657
        %v1659 = vrot.slane %v1658, 1
        %v1660 = vadd.f32 %v1658, %v1659
        %v1661 = vadd.f32 %v1589, %v1590
        %v1662 = vrot.slane %v1661, 4
        %v1663 = vadd.f32 %v1661, %v1662
        %v1664 = vrot.slane %v1663, 2
        %v1665 = vadd.f32 %v1663, %v1664
        %v1666 = vrot.slane %v1665, 1
        %v1667 = vadd.f32 %v1665, %v1666
        %v1668 = vadd.f32 %v1591, %v1592
        %v1669 = vrot.slane %v1668, 4
        %v1670 = vadd.f32 %v1668, %v1669
        %v1671 = vrot.slane %v1670, 2
        %v1672 = vadd.f32 %v1670, %v1671
        %v1673 = vrot.slane %v1672, 1
        %v1674 = vadd.f32 %v1672, %v1673
        %v1675 = vadd.f32 %v1593, %v1594
        %v1676 = vrot.slane %v1675, 4
        %v1677 = vadd.f32 %v1675, %v1676
        %v1678 = vrot.slane %v1677, 2
        %v1679 = vadd.f32 %v1677, %v1678
        %v1680 = vrot.slane %v1679, 1
        %v1681 = vadd.f32 %v1679, %v1680
        %v1682 = vadd.f32 %v1595, %v1596
        %v1683 = vrot.slane %v1682, 4
        %v1684 = vadd.f32 %v1682, %v1683
        %v1685 = vrot.slane %v1684, 2
        %v1686 = vadd.f32 %v1684, %v1685
        %v1687 = vrot.slane %v1686, 1
        %v1688 = vadd.f32 %v1686, %v1687
        %v1689 = vadd.f32 %v1597, %v1598
        %v1690 = vrot.slane %v1689, 4
        %v1691 = vadd.f32 %v1689, %v1690
        %v1692 = vrot.slane %v1691, 2
        %v1693 = vadd.f32 %v1691, %v1692
        %v1694 = vrot.slane %v1693, 1
        %v1695 = vadd.f32 %v1693, %v1694
        %v1696 = vadd.f32 %v1599, %v1600
        %v1697 = vrot.slane %v1696, 4
        %v1698 = vadd.f32 %v1696, %v1697
        %v1699 = vrot.slane %v1698, 2
        %v1700 = vadd.f32 %v1698, %v1699
        %v1701 = vrot.slane %v1700, 1
        %v1702 = vadd.f32 %v1700, %v1701
        %v1703 = vadd.f32 %v1601, %v1602
        %v1704 = vrot.slane %v1703, 4
        %v1705 = vadd.f32 %v1703, %v1704
        %v1706 = vrot.slane %v1705, 2
        %v1707 = vadd.f32 %v1705, %v1706
        %v1708 = vrot.slane %v1707, 1
        %v1709 = vadd.f32 %v1707, %v1708
        %v1710 = vadd.f32 %v1603, %v1604
        %v1711 = vrot.slane %v1710, 4
        %v1712 = vadd.f32 %v1710, %v1711
        %v1713 = vrot.slane %v1712, 2
        %v1714 = vadd.f32 %v1712, %v1713
        %v1715 = vrot.slane %v1714, 1
        %v1716 = vadd.f32 %v1714, %v1715
        %v1717 = vld [vmem:[#allocation14] sm:$0xff]
        %v1718 = vld [vmem:[#allocation14 + $0x8] sm:$0xff]
        %v1719 = vld [vmem:[#allocation14 + $0x10] sm:$0xff]
        %v1720 = vld [vmem:[#allocation14 + $0x18] sm:$0xff]
        %v1721 = vld [vmem:[#allocation14 + $0x20] sm:$0xff]
        %v1722 = vld [vmem:[#allocation14 + $0x28] sm:$0xff]
        %v1723 = vld [vmem:[#allocation14 + $0x30] sm:$0xff]
        %v1724 = vld [vmem:[#allocation14 + $0x38] sm:$0xff]
        %v1725 = vld [vmem:[#allocation14 + $0x40] sm:$0xff]
        %v1726 = vld [vmem:[#allocation14 + $0x48] sm:$0xff]
        %v1727 = vld [vmem:[#allocation14 + $0x50] sm:$0xff]
        %v1728 = vld [vmem:[#allocation14 + $0x58] sm:$0xff]
        %v1729 = vld [vmem:[#allocation14 + $0x60] sm:$0xff]
        %v1730 = vld [vmem:[#allocation14 + $0x68] sm:$0xff]
        %v1731 = vld [vmem:[#allocation14 + $0x70] sm:$0xff]
        %v1732 = vld [vmem:[#allocation14 + $0x78] sm:$0xff]
        %v1733 = vld [vmem:[%s10] sm:$0x1]
        %v1735 = vperm.slane %v1733, 0
        %vm1753 = vcmask 1041409
        %v1754 = vsel %vm1753, %v1618, %v1611
        %vm1755 = vcmask 1042434
        %v1756 = vsel %vm1755, %v1625, %v1754
        %vm1757 = vcmask 1043459
        %v1758 = vsel %vm1757, %v1632, %v1756
        %vm1759 = vcmask 1044484
        %v1760 = vsel %vm1759, %v1639, %v1758
        %vm1761 = vcmask 1045509
        %v1762 = vsel %vm1761, %v1646, %v1760
        %vm1763 = vcmask 1046534
        %v1764 = vsel %vm1763, %v1653, %v1762
        %vm1765 = vcmask 1047559
        %v1766 = vsel %vm1765, %v1660, %v1764
        %v1767 = vsel %vm1753, %v1674, %v1667
        %v1768 = vsel %vm1755, %v1681, %v1767
        %v1769 = vsel %vm1757, %v1688, %v1768
        %v1770 = vsel %vm1759, %v1695, %v1769
        %v1771 = vsel %vm1761, %v1702, %v1770
        %v1772 = vsel %vm1763, %v1709, %v1771
        %v1773 = vsel %vm1765, %v1716, %v1772
        %1776 = vmatpush.msra.mxu0 %v1732
        %1777 = vmatpush.msra.mxu0 %v1731
        %1778 = vmatpush.msra.mxu0 %v1730
        %1779 = vmatpush.msra.mxu0 %v1729
        %1780 = vmatpush.msra.mxu0 %v1728
        %1781 = vmatpush.msra.mxu0 %v1727
        %1782 = vmatpush.msra.mxu0 %v1726
        %1783 = vmatpush.msra.mxu0 %v1725
        %1784 = vmatpush.msra.mxu0 %v1724
        %1785 = vmatpush.msra.mxu0 %v1723
        %1786 = vmatpush.msra.mxu0 %v1722
        %1787 = vmatpush.msra.mxu0 %v1721
        %1788 = vmatpush.msra.mxu0 %v1720
        %1789 = vmatpush.msra.mxu0 %v1719
        %1790 = vmatpush.msra.mxu0 %v1718
        %1791 = vmatpush.msra.mxu0 %v1717
        %1792 = vmatmul.f32.gmra.mxu0 %v1766
        %v1793 = vpop.f32.mrf.mxu0
        %v1794 = vadd.f32 %v1735, %v1793
        %1795 = vmatmul.f32.gmra.mxu0 %v1773
        %v1796 = vpop.f32.mrf.mxu0
        %v1797 = vadd.f32 %v1735, %v1796
        %1798 = vdwg.mxu0
        %v1799 = vmax.f32 %v1794, 0.0
        %v1800 = vmax.f32 %v1797, 0.0
        %v1801 = vld [vmem:[#allocation16] sm:$0xff]
        %v1802 = vld [vmem:[#allocation16 + $0x8] sm:$0xff]
        %v1803 = vld [vmem:[#allocation16 + $0x10] sm:$0xff]
        %v1804 = vld [vmem:[#allocation16 + $0x18] sm:$0xff]
        %v1805 = vld [vmem:[#allocation16 + $0x20] sm:$0xff]
        %v1806 = vld [vmem:[#allocation16 + $0x28] sm:$0xff]
        %v1807 = vld [vmem:[#allocation16 + $0x30] sm:$0xff]
        %v1808 = vld [vmem:[#allocation16 + $0x38] sm:$0xff]
        %v1809 = vld [vmem:[#allocation16 + $0x40] sm:$0xff]
        %v1810 = vld [vmem:[#allocation16 + $0x48] sm:$0xff]
        %v1811 = vld [vmem:[#allocation16 + $0x50] sm:$0xff]
        %v1812 = vld [vmem:[#allocation16 + $0x58] sm:$0xff]
        %v1813 = vld [vmem:[#allocation16 + $0x60] sm:$0xff]
        %v1814 = vld [vmem:[#allocation16 + $0x68] sm:$0xff]
        %v1815 = vld [vmem:[#allocation16 + $0x70] sm:$0xff]
        %v1816 = vld [vmem:[#allocation16 + $0x78] sm:$0xff]
        %v1817 = vld [vmem:[%s581] sm:$0xff]
        %v1818 = vld [vmem:[%s581 + $0x8] sm:$0xff]
        %v1819 = vld [vmem:[#allocation17] sm:$0xff]
        %v1820 = vld [vmem:[#allocation17 + $0x8] sm:$0xff]
        %v1821 = vld [vmem:[#allocation17 + $0x10] sm:$0xff]
        %v1822 = vld [vmem:[#allocation17 + $0x18] sm:$0xff]
        %v1823 = vld [vmem:[#allocation17 + $0x20] sm:$0xff]
        %v1824 = vld [vmem:[#allocation17 + $0x28] sm:$0xff]
        %v1825 = vld [vmem:[#allocation17 + $0x30] sm:$0xff]
        %v1826 = vld [vmem:[#allocation17 + $0x38] sm:$0xff]
        %v1827 = vld [vmem:[#allocation17 + $0x40] sm:$0xff]
        %v1828 = vld [vmem:[#allocation17 + $0x48] sm:$0xff]
        %v1829 = vld [vmem:[#allocation17 + $0x50] sm:$0xff]
        %v1830 = vld [vmem:[#allocation17 + $0x58] sm:$0xff]
        %v1831 = vld [vmem:[#allocation17 + $0x60] sm:$0xff]
        %v1832 = vld [vmem:[#allocation17 + $0x68] sm:$0xff]
        %v1833 = vld [vmem:[#allocation17 + $0x70] sm:$0xff]
        %v1834 = vld [vmem:[#allocation17 + $0x78] sm:$0xff]
        %1835 = vmatpush.msra.mxu0 %v1834
        %1836 = vmatpush.msra.mxu0 %v1833
        %1837 = vmatpush.msra.mxu0 %v1832
        %1838 = vmatpush.msra.mxu0 %v1831
        %1839 = vmatpush.msra.mxu0 %v1830
        %1840 = vmatpush.msra.mxu0 %v1829
        %1841 = vmatpush.msra.mxu0 %v1828
        %1842 = vmatpush.msra.mxu0 %v1827
        %1843 = vmatpush.msra.mxu0 %v1826
        %1844 = vmatpush.msra.mxu0 %v1825
        %1845 = vmatpush.msra.mxu0 %v1824
        %1846 = vmatpush.msra.mxu0 %v1823
        %1847 = vmatpush.msra.mxu0 %v1822
        %1848 = vmatpush.msra.mxu0 %v1821
        %1849 = vmatpush.msra.mxu0 %v1820
        %1850 = vmatpush.msra.mxu0 %v1819
        %1851 = vmatmul.f32.gmra.mxu0 %v1817
        %v1852 = vpop.f32.mrf.mxu0
        %v1853 = vadd.f32 0.0, %v1852
        %1854 = vmatmul.f32.gmra.mxu0 %v1818
        %v1855 = vpop.f32.mrf.mxu0
        %v1856 = vadd.f32 0.0, %v1855
        %1857 = vdwg.mxu0
        %1858 = vmatpush.msra.mxu0 %v1816
        %1859 = vmatpush.msra.mxu0 %v1815
        %1860 = vmatpush.msra.mxu0 %v1814
        %1861 = vmatpush.msra.mxu0 %v1813
        %1862 = vmatpush.msra.mxu0 %v1812
        %1863 = vmatpush.msra.mxu0 %v1811
        %1864 = vmatpush.msra.mxu0 %v1810
        %1865 = vmatpush.msra.mxu0 %v1809
        %1866 = vmatpush.msra.mxu0 %v1808
        %1867 = vmatpush.msra.mxu0 %v1807
        %1868 = vmatpush.msra.mxu0 %v1806
        %1869 = vmatpush.msra.mxu0 %v1805
        %1870 = vmatpush.msra.mxu0 %v1804
        %1871 = vmatpush.msra.mxu0 %v1803
        %1872 = vmatpush.msra.mxu0 %v1802
        %1873 = vmatpush.msra.mxu0 %v1801
        %1874 = vmatmul.f32.gmra.mxu0 %v1799
        %v1875 = vpop.f32.mrf.mxu0
        %v1876 = vadd.f32 %v1853, %v1875
        %1877 = vmatmul.f32.gmra.mxu0 %v1800
        %v1878 = vpop.f32.mrf.mxu0
        %v1879 = vadd.f32 %v1856, %v1878
        %1880 = vdwg.mxu0
        %s1881 = scalar_lea.vmem %s10, 1
        %v1882 = vld [vmem:[%s1881] sm:$0x1]
        %v1884 = vperm.slane %v1882, 0
        %v1886 = vadd.f32 %v1876, %v1884
        %v1887 = vadd.f32 %v1879, %v1884
        %s1888 = scalar_lea.vmem %s10, 3
        %v1889 = vld [vmem:[%s1888] sm:$0x1]
        %v1891 = vperm.slane %v1889, 0
        %v1893 = vmul.f32 %v1886, %v1891
        %v1894 = vmul.f32 %v1887, %v1891
        %s1895 = scalar_lea.vmem %s10, 5
        %v1896 = vld [vmem:[%s1895] sm:$0x1]
        %v1898 = vperm.slane %v1896, 0
        %v1900 = vadd.f32 %v1893, %v1898
        %v1901 = vadd.f32 %v1894, %v1898
        %v1902 = vmax.f32 %v1900, 0.0
        %v1903 = vmax.f32 %v1901, 0.0
        %s1904 = scalar_lea.vmem [#allocation16], 128
        %v1905 = vld [vmem:[%s1904] sm:$0xff]
        %v1906 = vld [vmem:[%s1904 + $0x8] sm:$0xff]
        %v1907 = vld [vmem:[%s1904 + $0x10] sm:$0xff]
        %v1908 = vld [vmem:[%s1904 + $0x18] sm:$0xff]
        %v1909 = vld [vmem:[%s1904 + $0x20] sm:$0xff]
        %v1910 = vld [vmem:[%s1904 + $0x28] sm:$0xff]
        %v1911 = vld [vmem:[%s1904 + $0x30] sm:$0xff]
        %v1912 = vld [vmem:[%s1904 + $0x38] sm:$0xff]
        %v1913 = vld [vmem:[%s1904 + $0x40] sm:$0xff]
        %v1914 = vld [vmem:[%s1904 + $0x48] sm:$0xff]
        %v1915 = vld [vmem:[%s1904 + $0x50] sm:$0xff]
        %v1916 = vld [vmem:[%s1904 + $0x58] sm:$0xff]
        %v1917 = vld [vmem:[%s1904 + $0x60] sm:$0xff]
        %v1918 = vld [vmem:[%s1904 + $0x68] sm:$0xff]
        %v1919 = vld [vmem:[%s1904 + $0x70] sm:$0xff]
        %v1920 = vld [vmem:[%s1904 + $0x78] sm:$0xff]
        %s1921 = scalar_lea.vmem %s10, 2
        %v1922 = vld [vmem:[%s1921] sm:$0x1]
        %v1924 = vperm.slane %v1922, 0
        %1926 = vmatpush.msra.mxu0 %v1920
        %1927 = vmatpush.msra.mxu0 %v1919
        %1928 = vmatpush.msra.mxu0 %v1918
        %1929 = vmatpush.msra.mxu0 %v1917
        %1930 = vmatpush.msra.mxu0 %v1916
        %1931 = vmatpush.msra.mxu0 %v1915
        %1932 = vmatpush.msra.mxu0 %v1914
        %1933 = vmatpush.msra.mxu0 %v1913
        %1934 = vmatpush.msra.mxu0 %v1912
        %1935 = vmatpush.msra.mxu0 %v1911
        %1936 = vmatpush.msra.mxu0 %v1910
        %1937 = vmatpush.msra.mxu0 %v1909
        %1938 = vmatpush.msra.mxu0 %v1908
        %1939 = vmatpush.msra.mxu0 %v1907
        %1940 = vmatpush.msra.mxu0 %v1906
        %1941 = vmatpush.msra.mxu0 %v1905
        %1942 = vmatmul.f32.gmra.mxu0 %v1902
        %v1943 = vpop.f32.mrf.mxu0
        %v1944 = vadd.f32 %v1924, %v1943
        %1945 = vmatmul.f32.gmra.mxu0 %v1903
        %v1946 = vpop.f32.mrf.mxu0
        %v1947 = vadd.f32 %v1924, %v1946
        %1948 = vdwg.mxu0
        %s1949 = scalar_lea.vmem %s10, 4
        %v1950 = vld [vmem:[%s1949] sm:$0x1]
        %v1952 = vperm.slane %v1950, 0
        %v1954 = vmul.f32 %v1944, %v1952
        %v1955 = vmul.f32 %v1947, %v1952
        %s1956 = scalar_lea.vmem %s10, 6
        %v1957 = vld [vmem:[%s1956] sm:$0x1]
        %v1959 = vperm.slane %v1957, 0
        %v1961 = vadd.f32 %v1954, %v1959
        %v1962 = vadd.f32 %v1955, %v1959
        %v1963 = vmax.f32 %v1961, 0.0
        %v1964 = vmax.f32 %v1962, 0.0
        %v1965 = vld [vmem:[#allocation19] sm:$0xff]
        %v1966 = vld [vmem:[#allocation19 + $0x8] sm:$0xff]
        %v1967 = vld [vmem:[#allocation19 + $0x10] sm:$0xff]
        %v1968 = vld [vmem:[#allocation19 + $0x18] sm:$0xff]
        %v1969 = vld [vmem:[#allocation19 + $0x20] sm:$0xff]
        %v1970 = vld [vmem:[#allocation19 + $0x28] sm:$0xff]
        %v1971 = vld [vmem:[#allocation19 + $0x30] sm:$0xff]
        %v1972 = vld [vmem:[#allocation19 + $0x38] sm:$0xff]
        %v1973 = vld [vmem:[#allocation19 + $0x40] sm:$0xff]
        %v1974 = vld [vmem:[#allocation19 + $0x48] sm:$0xff]
        %v1975 = vld [vmem:[#allocation19 + $0x50] sm:$0xff]
        %v1976 = vld [vmem:[#allocation19 + $0x58] sm:$0xff]
        %v1977 = vld [vmem:[#allocation19 + $0x60] sm:$0xff]
        %v1978 = vld [vmem:[#allocation19 + $0x68] sm:$0xff]
        %v1979 = vld [vmem:[#allocation19 + $0x70] sm:$0xff]
        %v1980 = vld [vmem:[#allocation19 + $0x78] sm:$0xff]
        %v1981 = vld [vmem:[%s12] sm:$0x1]
        %v1983 = vperm.slane %v1981, 0
        %1985 = vmatpush.msra.mxu0 %v1980
        %1986 = vmatpush.msra.mxu0 %v1979
        %1987 = vmatpush.msra.mxu0 %v1978
        %1988 = vmatpush.msra.mxu0 %v1977
        %1989 = vmatpush.msra.mxu0 %v1976
        %1990 = vmatpush.msra.mxu0 %v1975
        %1991 = vmatpush.msra.mxu0 %v1974
        %1992 = vmatpush.msra.mxu0 %v1973
        %1993 = vmatpush.msra.mxu0 %v1972
        %1994 = vmatpush.msra.mxu0 %v1971
        %1995 = vmatpush.msra.mxu0 %v1970
        %1996 = vmatpush.msra.mxu0 %v1969
        %1997 = vmatpush.msra.mxu0 %v1968
        %1998 = vmatpush.msra.mxu0 %v1967
        %1999 = vmatpush.msra.mxu0 %v1966
        %2000 = vmatpush.msra.mxu0 %v1965
        %2001 = vmatmul.f32.gmra.mxu0 %v1963
        %v2002 = vpop.f32.mrf.mxu0
        %v2003 = vadd.f32 %v1983, %v2002
        %2004 = vmatmul.f32.gmra.mxu0 %v1964
        %v2005 = vpop.f32.mrf.mxu0
        %v2006 = vadd.f32 %v1983, %v2005
        %2007 = vdwg.mxu0
        %2008 = vst [vmem:[%s674] sm:$0xff] %v2003
        %2009 = vst [vmem:[%s674 + $0x8] sm:$0xff] %v2006
        %s2010 = sand.u32 %s333, 1
        %s2011 = scalar_lea.sflag [#allocation4], %s2010
        %s2012 = sand.u32 %s333, 1
        %s2013 = smul.addr %s2012, 16
        %s2014 = scalar_lea.vmem [#allocation20], %s2013
        // Predicated region
        $region117: #{tpu_custom_call.1} parent=71 // pred_check
          %p2015 = pneg %p343
        $region118: #{tpu_custom_call.1} parent=71 // pred_check_branch
          %2017 = sbr.rel (%p2015) target = $region120
        $region119: #{tpu_custom_call.1} parent=71 // pred_region
          %2019 = vsyncadd %s2011, 0
          %s2020 = smul.addr %s37, 2
          %s2021 = smul.addr %s2020, 8
          %s2022 = scalar_lea.hbm %s13, %s2021
          %s2023 = sshll.u32 %s2014, 4
          %s2024 = int_to_ptr.vmem [resolvable:$true] %s2023
          %s2025 = sshll.u32 %s2022, 4
          %s2026 = int_to_ptr.hbm [resolvable:$true] %s2025
          %2031 = dma.vmem_to_hbm [thread:$0]  %s2024, 256, %s2026, %s2011, 128, 128, 8
        $region120: #{tpu_custom_call.1} parent=71 // pred_fallthru
          _
      $region72: #{tpu_custom_call.1} parent=5 // pred_fallthru
        _
      %p2032 = scmp.le.s32.totalorder 2, %s32
      // Predicated region
      $region121: #{tpu_custom_call.1} parent=5 // pred_check
        %p2033 = pneg %p2032
      $region122: #{tpu_custom_call.1} parent=5 // pred_check_branch
        %2035 = sbr.rel (%p2033) target = $region124
      $region123: #{tpu_custom_call.1} parent=5 // pred_region
        %s2036 = ssub.s32 %s32, 2
        // Predicated region
        $region125: #{tpu_custom_call.1} parent=123 // pred_check
          %p2037 = pneg %p349
        $region126: #{tpu_custom_call.1} parent=123 // pred_check_branch
          %2039 = sbr.rel (%p2037) target = $region128
        $region127: #{tpu_custom_call.1} parent=123 // pred_region
          %s2040 = sand.u32 %s334, 1
          %s2041 = scalar_lea.sflag [#allocation4], %s2040
          %s2042 = sand.u32 %s334, 1
          %s2043 = smul.addr %s2042, 16
          %s2044 = scalar_lea.vmem [#allocation20], %s2043
          %2046 = dma.done %s2041, 256
        $region128: #{tpu_custom_call.1} parent=123 // pred_fallthru
          _
      $region124: #{tpu_custom_call.1} parent=5 // pred_fallthru
        _
    $region6: #{tpu_custom_call.1} parent=1 // loop_footer
      %s36 = sadd.s32 1, %s32
    $region7: #{tpu_custom_call.1} parent=1 // loop_footer_branch
      %31 = sbr.rel target = $region3
    $region8: #{tpu_custom_call.1} parent=1 // loop_exit
      _
    %2047 = vsyncpa [#allocation3], 1
    %s2048 = scalar_lea.sflag [#allocation3], 1
    %2049 = vsyncpa %s2048, 1
    %2050 = vsyncpa [#allocation6], 1
    %s2051 = scalar_lea.sflag [#allocation6], 1
    %2052 = vsyncpa %s2051, 1
    %2053 = vsyncpa [#allocation9], 1
    %2054 = vsyncpa [#allocation12], 1
    %2055 = vsyncpa [#allocation15], 1
    %2056 = vsyncpa [#allocation18], 1
    %2057 = vsyncpa [#allocation4], 1
    %s2058 = scalar_lea.sflag [#allocation4], 1
    %2059 = vsyncpa %s2058, 1

</llo_original>
